<compile_context>
chip_gen: v5e
topology: v5e:2x2
jax: 0.10.0
libtpu: 0.0.40
codegen_flags: <defaults>
</compile_context>

<pallas_src>
import functools

import jax
import jax.numpy as jnp
from jax import lax
from jax.experimental import pallas as pl
from jax.experimental.pallas import tpu as pltpu


# ----------------------------------------------------------------------------
# helpers
# ----------------------------------------------------------------------------

def _round_up(x, m):
    return (x + m - 1) // m * m


def _bf(x):
    return x.astype(jnp.bfloat16)


def _layer_norm(y, g, beta, eps=1e-5):
    mean = jnp.mean(y, axis=-1, keepdims=True)
    var = jnp.mean((y - mean) * (y - mean), axis=-1, keepdims=True)
    return (y - mean) * lax.rsqrt(var + eps) * g + beta


# ----------------------------------------------------------------------------
# fused kernel: encoder + all processor layers + decoder
# ----------------------------------------------------------------------------

def _fused_mgn_kernel(
    # graph data (constant over the layer grid axis)
    x_ref, ea_ref, src_ref, dstc_ref, dstr_ref, ew_ref,
    # node encoder
    ne_w1, ne_b1, ne_w2, ne_b2, ne_g, ne_beta,
    # edge encoder
    ee_w1, ee_b1, ee_w2, ee_b2, ee_g, ee_beta,
    # per-layer edge MLP (stacked over layers; kernel view has leading dim 1)
    le_w1, le_b1, le_w2, le_b2, le_g, le_beta,
    # per-layer node MLP
    ln_w1, ln_b1, ln_w2, ln_b2, ln_g, ln_beta,
    # per-layer attention: fused (H,3H) qkv projection + (H,H) output proj
    at_qkv, at_wo,
    # decoder (output lanes padded to a multiple of 128)
    de_w1, de_b1, de_w2, de_b2,
    # output
    out_ref,
    # VMEM-resident state
    h_node, h_edge, gcat, sdst,
    *, n_nodes, hidden):

    l = pl.program_id(0)
    n_layers = pl.num_programs(0)
    H = hidden
    Np = h_node.shape[0]
    Ep = h_edge.shape[0]

    # ------------- encoder + one-time one-hot table build (l == 0) ----------
    @pl.when(l == 0)
    def _():
        hn0 = jnp.dot(_bf(x_ref[...]), ne_w1[...],
                      preferred_element_type=jnp.float32) + ne_b1[...]
        hn0 = jnp.maximum(hn0, 0.0)
        hn0 = jnp.dot(_bf(hn0), ne_w2[...],
                      preferred_element_type=jnp.float32) + ne_b2[...]
        h_node[...] = _layer_norm(hn0, ne_g[...], ne_beta[...])

        he0 = jnp.dot(_bf(ea_ref[...]), ee_w1[...],
                      preferred_element_type=jnp.float32) + ee_b1[...]
        he0 = jnp.maximum(he0, 0.0)
        he0 = jnp.dot(_bf(he0), ee_w2[...],
                      preferred_element_type=jnp.float32) + ee_b2[...]
        h_edge[...] = _layer_norm(he0, ee_g[...], ee_beta[...])

        # bf16 one-hot gather matrix [G_src | G_dst]  (Ep, 2*Np), built once.
        iota2 = lax.broadcasted_iota(jnp.int32, (Ep, 2 * Np), 1)
        tgt = jnp.where(iota2 < Np, src_ref[...], dstc_ref[...] + Np)
        gcat[...] = jnp.where(iota2 == tgt, 1.0, 0.0).astype(jnp.bfloat16)
        # bf16 one-hot scatter matrix  (Np, Ep), built once (pad dst=-1 -> 0).
        iota_ne = lax.broadcasted_iota(jnp.int32, (Np, Ep), 0)
        sdst[...] = jnp.where(iota_ne == dstr_ref[...], 1.0, 0.0
                              ).astype(jnp.bfloat16)

    # ------------- processor layer l ----------------------------------------
    hn = h_node[...]                                       # (Np, H) f32
    he = h_edge[...]                                       # (Ep, H) f32
    hn_bf = _bf(hn)                                        # hoisted casts
    he_bf = _bf(he)
    g_bf = gcat[...]                                       # (Ep, 2Np) bf16
    s_bf = sdst[...]                                       # (Np, Ep) bf16

    # edge update: h_edge += LN(MLP([h_edge, h_src, h_dst])).
    # Project node features through the src/dst blocks of W1 first (N rows),
    # then gather per-edge with a single bf16 one-hot matmul at K=2N.
    w1e = le_w1[0]                                         # (3H, H) bf16
    nsrc = jnp.dot(hn_bf, w1e[H:2 * H], preferred_element_type=jnp.float32)
    ndst = jnp.dot(hn_bf, w1e[2 * H:3 * H], preferred_element_type=jnp.float32)
    nsd_bf = _bf(jnp.concatenate([nsrc, ndst], axis=0))    # (2Np, H) bf16
    t = (jnp.dot(he_bf, w1e[0:H], preferred_element_type=jnp.float32)
         + jnp.dot(g_bf, nsd_bf, preferred_element_type=jnp.float32)
         + le_b1[0])
    t = jnp.maximum(t, 0.0)
    t = jnp.dot(_bf(t), le_w2[0], preferred_element_type=jnp.float32) + le_b2[0]
    he = he + _layer_norm(t, le_g[0], le_beta[0])
    h_edge[...] = he

    # edge_len-weighted scatter-add of messages to destination nodes (bf16 MXU)
    # TODO(synk): exact use of `edge_len` in the reference processor is
    # unspecified; here it weights each edge message during aggregation.
    msg_bf = _bf(ew_ref[...] * he)
    agg = jnp.dot(s_bf, msg_bf, preferred_element_type=jnp.float32)

    # node update: h_node += LN(MLP([h_node, agg])) -- single K=2H matmul
    na_bf = jnp.concatenate([hn_bf, _bf(agg)], axis=1)     # (Np, 2H) bf16
    t = jnp.dot(na_bf, ln_w1[0], preferred_element_type=jnp.float32) + ln_b1[0]
    t = jnp.maximum(t, 0.0)
    t = jnp.dot(_bf(t), ln_w2[0], preferred_element_type=jnp.float32) + ln_b2[0]
    hn = hn + _layer_norm(t, ln_g[0], ln_beta[0])
    hn_bf = _bf(hn)

    # single-head self-attention over nodes, residual.  Fused qkv projection;
    # 1/sqrt(H) already folded into Wq in the wrapper.
    qkv = jnp.dot(hn_bf, at_qkv[0], preferred_element_type=jnp.float32)
    q = qkv[:, 0:H]
    k = qkv[:, H:2 * H]
    v = qkv[:, 2 * H:3 * H]
    s = lax.dot_general(_bf(q), _bf(k), (((1,), (1,)), ((), ())),
                        preferred_element_type=jnp.float32)
    if n_nodes < Np:   # cheap O(N) additive key-padding bias (static skip)
        kbias = jnp.where(
            lax.broadcasted_iota(jnp.int32, (1, Np), 1) < n_nodes, 0.0, -1e30)
        s = s + kbias
    s = s - jnp.max(s, axis=-1, keepdims=True)
    p = jnp.exp(s)
    p = p * pl.reciprocal(jnp.sum(p, axis=-1, keepdims=True), approx=True)
    ctx = jnp.dot(_bf(p), _bf(v), preferred_element_type=jnp.float32)
    hn = hn + jnp.dot(_bf(ctx), at_wo[0], preferred_element_type=jnp.float32)
    h_node[...] = hn

    # ------------- decoder (last grid step only, lane-dense store) ----------
    @pl.when(l == n_layers - 1)
    def _():
        t2 = jnp.dot(_bf(hn), de_w1[...],
                     preferred_element_type=jnp.float32) + de_b1[...]
        t2 = jnp.maximum(t2, 0.0)
        out_ref[...] = jnp.dot(_bf(t2), de_w2[...],
                               preferred_element_type=jnp.float32) + de_b2[...]


# ----------------------------------------------------------------------------
# wrapper
# ----------------------------------------------------------------------------

def mgn_transformer_forward(params, x, edge_index, edge_attr, edge_len):
    p = params
    n_nodes = x.shape[0]
    n_edges = edge_attr.shape[0]
    H = p["ne_w2"].shape[1]
    out_pad = p["de_w2"].shape[1]
    n_layers = p["le_w1"].shape[0]
    out_dim = p["out_dim"]

    # pad rows to multiples of 16 so bf16 MXU operands are clean packed tiles
    np_ = _round_up(n_nodes, 16)
    ep_ = _round_up(n_edges, 16)

    x_p = jnp.pad(x.astype(jnp.float32), ((0, np_ - n_nodes), (0, 0)))
    ea_p = jnp.pad(edge_attr.astype(jnp.float32), ((0, ep_ - n_edges), (0, 0)))
    src = jnp.pad(edge_index[0].astype(jnp.int32), (0, ep_ - n_edges),
                  constant_values=0)
    dst = jnp.pad(edge_index[1].astype(jnp.int32), (0, ep_ - n_edges),
                  constant_values=-1)      # pad edges gather/scatter nowhere
    ew = jnp.pad(edge_len.astype(jnp.float32), (0, ep_ - n_edges))

    # fold the 1/sqrt(H) softmax scale into Wq (removes an O(N^2) VPU pass/layer)
    qscale = jnp.concatenate(
        [jnp.full((H,), 1.0 / (H ** 0.5), jnp.bfloat16),
         jnp.ones((2 * H,), jnp.bfloat16)])
    at_qkv = p["at_qkv"] * qscale

    data_args = [x_p, ea_p,
                 src.reshape(ep_, 1), dst.reshape(ep_, 1),
                 dst.reshape(1, ep_), ew.reshape(ep_, 1)]

    weight_args = [
        p["ne_w1"], p["ne_b1"], p["ne_w2"], p["ne_b2"], p["ne_g"], p["ne_beta"],
        p["ee_w1"], p["ee_b1"], p["ee_w2"], p["ee_b2"], p["ee_g"], p["ee_beta"],
        p["le_w1"], p["le_b1"], p["le_w2"], p["le_b2"], p["le_g"], p["le_beta"],
        p["ln_w1"], p["ln_b1"], p["ln_w2"], p["ln_b2"], p["ln_g"], p["ln_beta"],
        at_qkv, p["at_wo"],
        p["de_w1"], p["de_b1"], p["de_w2"], p["de_b2"],
    ]
    args = data_args + weight_args

    def spec_for(a):
        if a.ndim == 3:   # stacked per-layer weights: pipeline over the L axis
            return pl.BlockSpec((1,) + a.shape[1:], lambda l: (l, 0, 0))
        return pl.BlockSpec(a.shape, lambda l: (0, 0))

    # explicit scoped-VMEM budget: double-buffered input/output blocks +
    # persistent scratch + headroom for compute temporaries.
    def buf_bytes(a):
        per_block = a.size * a.dtype.itemsize
        if a.ndim == 3:
            per_block //= a.shape[0]
        return 2 * per_block

    scratch_bytes = (np_ * H * 4 + ep_ * H * 4          # h_node, h_edge (f32)
                     + ep_ * (2 * np_) * 2 + np_ * ep_ * 2)  # bf16 one-hots
    vmem_limit = int(sum(buf_bytes(a) for a in args)
                     + 2 * np_ * out_pad * 4 + scratch_bytes + (16 << 20))
    vmem_limit = max(32 << 20, min(vmem_limit, 100 << 20))

    kernel = functools.partial(_fused_mgn_kernel, n_nodes=n_nodes, hidden=H)

    out = pl.pallas_call(
        kernel,
        out_shape=jax.ShapeDtypeStruct((np_, out_pad), jnp.float32),
        grid=(n_layers,),
        in_specs=[spec_for(a) for a in args],
        out_specs=pl.BlockSpec((np_, out_pad), lambda l: (0, 0)),
        scratch_shapes=[pltpu.VMEM((np_, H), jnp.float32),        # h_node
                        pltpu.VMEM((ep_, H), jnp.float32),        # h_edge
                        pltpu.VMEM((ep_, 2 * np_), jnp.bfloat16),  # [G_src|G_dst]
                        pltpu.VMEM((np_, ep_), jnp.bfloat16)],     # scatter
        compiler_params=pltpu.CompilerParams(
            dimension_semantics=("arbitrary",),
            vmem_limit_bytes=vmem_limit),
    )(*args)
    return out[:n_nodes, :out_dim]


# ----------------------------------------------------------------------------
# deterministic synthetic parameters
# ----------------------------------------------------------------------------

def make_params(key, node_in, edge_in, hidden, out_dim, num_layers):
    H = hidden
    out_pad = _round_up(out_dim, 128)
    ks = iter(jax.random.split(key, 16))

    def dense(fan_in, fan_out):
        k = next(ks)
        return (jax.random.normal(k, (fan_in, fan_out), jnp.float32)
                / (fan_in ** 0.5)).astype(jnp.bfloat16)

    def ldense(fan_in, fan_out):
        k = next(ks)
        return (jax.random.normal(k, (num_layers, fan_in, fan_out), jnp.float32)
                / (fan_in ** 0.5)).astype(jnp.bfloat16)

    z = lambda *s: jnp.zeros(s, jnp.float32)
    o = lambda *s: jnp.ones(s, jnp.float32)

    de_w2_core = jax.random.normal(next(ks), (H, out_dim), jnp.float32) / (H ** 0.5)
    de_w2 = jnp.pad(de_w2_core, ((0, 0), (0, out_pad - out_dim))).astype(jnp.bfloat16)

    return dict(
        out_dim=out_dim,
        # encoders
        ne_w1=dense(node_in, H), ne_b1=z(1, H), ne_w2=dense(H, H), ne_b2=z(1, H),
        ne_g=o(1, H), ne_beta=z(1, H),
        ee_w1=dense(edge_in, H), ee_b1=z(1, H), ee_w2=dense(H, H), ee_b2=z(1, H),
        ee_g=o(1, H), ee_beta=z(1, H),
        # processor, stacked over layers
        le_w1=ldense(3 * H, H), le_b1=z(num_layers, 1, H),
        le_w2=ldense(H, H), le_b2=z(num_layers, 1, H),
        le_g=o(num_layers, 1, H), le_beta=z(num_layers, 1, H),
        ln_w1=ldense(2 * H, H), ln_b1=z(num_layers, 1, H),
        ln_w2=ldense(H, H), ln_b2=z(num_layers, 1, H),
        ln_g=o(num_layers, 1, H), ln_beta=z(num_layers, 1, H),
        at_qkv=ldense(H, 3 * H),                  # q,k,v stacked along columns
        at_wo=ldense(H, H),
        # decoder (output lanes padded to 128 for a lane-dense store)
        de_w1=dense(H, H), de_b1=z(1, H), de_w2=de_w2, de_b2=z(1, out_pad),
    )


# ----------------------------------------------------------------------------
# demo
# ----------------------------------------------------------------------------

if __name__ == "__main__":
    N_NODES, N_EDGES = 16, 32
    NODE_IN, EDGE_IN, HIDDEN, OUT_DIM, N_LAYERS = 8, 8, 128, 8, 2

    key = jax.random.PRNGKey(0)
    k_x, k_ea, k_ei, k_el, k_p = jax.random.split(key, 5)

    x = jax.random.normal(k_x, (N_NODES, NODE_IN), jnp.float32)
    edge_attr = jax.random.normal(k_ea, (N_EDGES, EDGE_IN), jnp.float32)
    edge_index = jax.random.randint(k_ei, (2, N_EDGES), 0, N_NODES, jnp.int32)
    edge_len = jax.random.uniform(k_el, (N_EDGES,), jnp.float32, 0.5, 1.5)

    params = make_params(k_p, NODE_IN, EDGE_IN, HIDDEN, OUT_DIM, N_LAYERS)

    fwd = jax.jit(
        lambda xx, ei, ea, el: mgn_transformer_forward(params, xx, ei, ea, el))
    out = jax.block_until_ready(fwd(x, edge_index, edge_attr, edge_len))

    assert out.shape == (N_NODES, OUT_DIM), out.shape
    assert bool(jnp.all(jnp.isfinite(out)))
    print("KERNEL_OK")
</pallas_src>

<mosaic_0001>
module attributes {stable_mosaic.version = 11 : i64} {
  func.func @_fused_mgn_kernel(%arg0: i32, %arg1: memref<16x8xf32, #tpu.memory_space<vmem>>, %arg2: memref<32x8xf32, #tpu.memory_space<vmem>>, %arg3: memref<32x1xi32, #tpu.memory_space<vmem>>, %arg4: memref<32x1xi32, #tpu.memory_space<vmem>>, %arg5: memref<1x32xi32, #tpu.memory_space<vmem>>, %arg6: memref<32x1xf32, #tpu.memory_space<vmem>>, %arg7: memref<8x128xbf16, #tpu.memory_space<vmem>>, %arg8: memref<1x128xf32, #tpu.memory_space<vmem>>, %arg9: memref<128x128xbf16, #tpu.memory_space<vmem>>, %arg10: memref<1x128xf32, #tpu.memory_space<vmem>>, %arg11: memref<1x128xf32, #tpu.memory_space<vmem>>, %arg12: memref<1x128xf32, #tpu.memory_space<vmem>>, %arg13: memref<8x128xbf16, #tpu.memory_space<vmem>>, %arg14: memref<1x128xf32, #tpu.memory_space<vmem>>, %arg15: memref<128x128xbf16, #tpu.memory_space<vmem>>, %arg16: memref<1x128xf32, #tpu.memory_space<vmem>>, %arg17: memref<1x128xf32, #tpu.memory_space<vmem>>, %arg18: memref<1x128xf32, #tpu.memory_space<vmem>>, %arg19: memref<1x384x128xbf16, #tpu.memory_space<vmem>>, %arg20: memref<1x1x128xf32, #tpu.memory_space<vmem>>, %arg21: memref<1x128x128xbf16, #tpu.memory_space<vmem>>, %arg22: memref<1x1x128xf32, #tpu.memory_space<vmem>>, %arg23: memref<1x1x128xf32, #tpu.memory_space<vmem>>, %arg24: memref<1x1x128xf32, #tpu.memory_space<vmem>>, %arg25: memref<1x256x128xbf16, #tpu.memory_space<vmem>>, %arg26: memref<1x1x128xf32, #tpu.memory_space<vmem>>, %arg27: memref<1x128x128xbf16, #tpu.memory_space<vmem>>, %arg28: memref<1x1x128xf32, #tpu.memory_space<vmem>>, %arg29: memref<1x1x128xf32, #tpu.memory_space<vmem>>, %arg30: memref<1x1x128xf32, #tpu.memory_space<vmem>>, %arg31: memref<1x128x384xbf16, #tpu.memory_space<vmem>>, %arg32: memref<1x128x128xbf16, #tpu.memory_space<vmem>>, %arg33: memref<128x128xbf16, #tpu.memory_space<vmem>>, %arg34: memref<1x128xf32, #tpu.memory_space<vmem>>, %arg35: memref<128x128xbf16, #tpu.memory_space<vmem>>, %arg36: memref<1x128xf32, #tpu.memory_space<vmem>>, %arg37: memref<16x128xf32, #tpu.memory_space<vmem>>, %arg38: memref<16x128xf32, #tpu.memory_space<vmem>>, %arg39: memref<32x128xf32, #tpu.memory_space<vmem>>, %arg40: memref<32x32xbf16, #tpu.memory_space<vmem>>, %arg41: memref<16x32xbf16, #tpu.memory_space<vmem>>) attributes {dimension_semantics = [#tpu.dimension_semantics<arbitrary>], iteration_bounds = array<i64: 2>, scalar_prefetch = 0 : i64, scratch_operands = 4 : i64, tpu.core_type = #tpu.core_type<tc>, window_params = [{pipeline_mode = #tpu.pipeline_mode<synchronous>, transform_indices = @transform_0, window_bounds = array<i64: 16, 8>}, {pipeline_mode = #tpu.pipeline_mode<synchronous>, transform_indices = @transform_1, window_bounds = array<i64: 32, 8>}, {pipeline_mode = #tpu.pipeline_mode<synchronous>, transform_indices = @transform_2, window_bounds = array<i64: 32, 1>}, {pipeline_mode = #tpu.pipeline_mode<synchronous>, transform_indices = @transform_3, window_bounds = array<i64: 32, 1>}, {pipeline_mode = #tpu.pipeline_mode<synchronous>, transform_indices = @transform_4, window_bounds = array<i64: 1, 32>}, {pipeline_mode = #tpu.pipeline_mode<synchronous>, transform_indices = @transform_5, window_bounds = array<i64: 32, 1>}, {pipeline_mode = #tpu.pipeline_mode<synchronous>, transform_indices = @transform_6, window_bounds = array<i64: 8, 128>}, {pipeline_mode = #tpu.pipeline_mode<synchronous>, transform_indices = @transform_7, window_bounds = array<i64: 1, 128>}, {pipeline_mode = #tpu.pipeline_mode<synchronous>, transform_indices = @transform_8, window_bounds = array<i64: 128, 128>}, {pipeline_mode = #tpu.pipeline_mode<synchronous>, transform_indices = @transform_9, window_bounds = array<i64: 1, 128>}, {pipeline_mode = #tpu.pipeline_mode<synchronous>, transform_indices = @transform_10, window_bounds = array<i64: 1, 128>}, {pipeline_mode = #tpu.pipeline_mode<synchronous>, transform_indices = @transform_11, window_bounds = array<i64: 1, 128>}, {pipeline_mode = #tpu.pipeline_mode<synchronous>, transform_indices = @transform_12, window_bounds = array<i64: 8, 128>}, {pipeline_mode = #tpu.pipeline_mode<synchronous>, transform_indices = @transform_13, window_bounds = array<i64: 1, 128>}, {pipeline_mode = #tpu.pipeline_mode<synchronous>, transform_indices = @transform_14, window_bounds = array<i64: 128, 128>}, {pipeline_mode = #tpu.pipeline_mode<synchronous>, transform_indices = @transform_15, window_bounds = array<i64: 1, 128>}, {pipeline_mode = #tpu.pipeline_mode<synchronous>, transform_indices = @transform_16, window_bounds = array<i64: 1, 128>}, {pipeline_mode = #tpu.pipeline_mode<synchronous>, transform_indices = @transform_17, window_bounds = array<i64: 1, 128>}, {transform_indices = @transform_18, window_bounds = array<i64: 1, 384, 128>}, {transform_indices = @transform_19, window_bounds = array<i64: 1, 1, 128>}, {transform_indices = @transform_20, window_bounds = array<i64: 1, 128, 128>}, {transform_indices = @transform_21, window_bounds = array<i64: 1, 1, 128>}, {transform_indices = @transform_22, window_bounds = array<i64: 1, 1, 128>}, {transform_indices = @transform_23, window_bounds = array<i64: 1, 1, 128>}, {transform_indices = @transform_24, window_bounds = array<i64: 1, 256, 128>}, {transform_indices = @transform_25, window_bounds = array<i64: 1, 1, 128>}, {transform_indices = @transform_26, window_bounds = array<i64: 1, 128, 128>}, {transform_indices = @transform_27, window_bounds = array<i64: 1, 1, 128>}, {transform_indices = @transform_28, window_bounds = array<i64: 1, 1, 128>}, {transform_indices = @transform_29, window_bounds = array<i64: 1, 1, 128>}, {transform_indices = @transform_30, window_bounds = array<i64: 1, 128, 384>}, {transform_indices = @transform_31, window_bounds = array<i64: 1, 128, 128>}, {pipeline_mode = #tpu.pipeline_mode<synchronous>, transform_indices = @transform_32, window_bounds = array<i64: 128, 128>}, {pipeline_mode = #tpu.pipeline_mode<synchronous>, transform_indices = @transform_33, window_bounds = array<i64: 1, 128>}, {pipeline_mode = #tpu.pipeline_mode<synchronous>, transform_indices = @transform_34, window_bounds = array<i64: 128, 128>}, {pipeline_mode = #tpu.pipeline_mode<synchronous>, transform_indices = @transform_35, window_bounds = array<i64: 1, 128>}, {pipeline_mode = #tpu.pipeline_mode<synchronous>, transform_indices = @transform_36, window_bounds = array<i64: 16, 128>}]} {
    %c0_i32 = arith.constant 0 : i32
    %0 = arith.cmpi eq, %arg0, %c0_i32 : i32
    %1 = arith.extui %0 : i1 to i32
    %c0_i32_0 = arith.constant 0 : i32
    %2 = arith.cmpi ne, %1, %c0_i32_0 : i32
    scf.if %2 {
      %c0_82 = arith.constant 0 : index
      %c0_83 = arith.constant 0 : index
      %150 = vector.load %arg1[%c0_82, %c0_83] : memref<16x8xf32, #tpu.memory_space<vmem>>, vector<16x8xf32>
      %151 = arith.truncf %150 : vector<16x8xf32> to vector<16x8xbf16>
      %c0_84 = arith.constant 0 : index
      %c0_85 = arith.constant 0 : index
      %152 = vector.load %arg7[%c0_84, %c0_85] : memref<8x128xbf16, #tpu.memory_space<vmem>>, vector<8x128xbf16>
      %cst_86 = arith.constant dense<0.000000e+00> : vector<16x128xf32>
      %153 = tpu.matmul %151, %152, %cst_86 {dimension_numbers = #tpu.dot_dimension_numbers<[1], [0], [0], [1], [0, 0, 1, 1], [], []>} : vector<16x8xbf16>, vector<8x128xbf16>, vector<16x128xf32> -> vector<16x128xf32>
      %c0_87 = arith.constant 0 : index
      %c0_88 = arith.constant 0 : index
      %154 = vector.load %arg8[%c0_87, %c0_88] : memref<1x128xf32, #tpu.memory_space<vmem>>, vector<1x128xf32>
      %155 = vector.broadcast %154 : vector<1x128xf32> to vector<16x128xf32>
      %156 = arith.addf %153, %155 : vector<16x128xf32>
      %cst_89 = arith.constant 0.000000e+00 : f32
      %157 = vector.broadcast %cst_89 : f32 to vector<16x128xf32>
      %158 = arith.maximumf %156, %157 : vector<16x128xf32>
      %159 = arith.truncf %158 : vector<16x128xf32> to vector<16x128xbf16>
      %c0_90 = arith.constant 0 : index
      %c0_91 = arith.constant 0 : index
      %160 = vector.load %arg9[%c0_90, %c0_91] : memref<128x128xbf16, #tpu.memory_space<vmem>>, vector<128x128xbf16>
      %cst_92 = arith.constant dense<0.000000e+00> : vector<16x128xf32>
      %161 = tpu.matmul %159, %160, %cst_92 {dimension_numbers = #tpu.dot_dimension_numbers<[1], [0], [0], [1], [0, 0, 1, 1], [], []>} : vector<16x128xbf16>, vector<128x128xbf16>, vector<16x128xf32> -> vector<16x128xf32>
      %c0_93 = arith.constant 0 : index
      %c0_94 = arith.constant 0 : index
      %162 = vector.load %arg10[%c0_93, %c0_94] : memref<1x128xf32, #tpu.memory_space<vmem>>, vector<1x128xf32>
      %163 = vector.broadcast %162 : vector<1x128xf32> to vector<16x128xf32>
      %164 = arith.addf %161, %163 : vector<16x128xf32>
      %c0_95 = arith.constant 0 : index
      %c0_96 = arith.constant 0 : index
      %165 = vector.load %arg11[%c0_95, %c0_96] : memref<1x128xf32, #tpu.memory_space<vmem>>, vector<1x128xf32>
      %c0_97 = arith.constant 0 : index
      %c0_98 = arith.constant 0 : index
      %166 = vector.load %arg12[%c0_97, %c0_98] : memref<1x128xf32, #tpu.memory_space<vmem>>, vector<1x128xf32>
      %cst_99 = arith.constant dense<0.000000e+00> : vector<16xf32>
      %167 = vector.multi_reduction <add>, %164, %cst_99 [1] : vector<16x128xf32> to vector<16xf32>
      %168 = vector.shape_cast %167 : vector<16xf32> to vector<16x1xf32>
      %cst_100 = arith.constant 1.280000e+02 : f32
      %169 = vector.broadcast %cst_100 : f32 to vector<16x1xf32>
      %170 = arith.divf %168, %169 : vector<16x1xf32>
      %171 = vector.broadcast %170 : vector<16x1xf32> to vector<16x128xf32>
      %172 = arith.subf %164, %171 : vector<16x128xf32>
      %173 = vector.broadcast %170 : vector<16x1xf32> to vector<16x128xf32>
      %174 = arith.subf %164, %173 : vector<16x128xf32>
      %175 = arith.mulf %172, %174 : vector<16x128xf32>
      %cst_101 = arith.constant dense<0.000000e+00> : vector<16xf32>
      %176 = vector.multi_reduction <add>, %175, %cst_101 [1] : vector<16x128xf32> to vector<16xf32>
      %177 = vector.shape_cast %176 : vector<16xf32> to vector<16x1xf32>
      %cst_102 = arith.constant 1.280000e+02 : f32
      %178 = vector.broadcast %cst_102 : f32 to vector<16x1xf32>
      %179 = arith.divf %177, %178 : vector<16x1xf32>
      %180 = vector.broadcast %170 : vector<16x1xf32> to vector<16x128xf32>
      %181 = arith.subf %164, %180 : vector<16x128xf32>
      %cst_103 = arith.constant 9.99999974E-6 : f32
      %182 = vector.broadcast %cst_103 : f32 to vector<16x1xf32>
      %183 = arith.addf %179, %182 : vector<16x1xf32>
      %184 = math.rsqrt %183 : vector<16x1xf32>
      %185 = vector.broadcast %184 : vector<16x1xf32> to vector<16x128xf32>
      %186 = arith.mulf %181, %185 : vector<16x128xf32>
      %187 = vector.broadcast %165 : vector<1x128xf32> to vector<16x128xf32>
      %188 = arith.mulf %186, %187 : vector<16x128xf32>
      %189 = vector.broadcast %166 : vector<1x128xf32> to vector<16x128xf32>
      %190 = arith.addf %188, %189 : vector<16x128xf32>
      %c0_104 = arith.constant 0 : index
      %c0_105 = arith.constant 0 : index
      %191 = vector.load %arg38[%c0_104, %c0_105] : memref<16x128xf32, #tpu.memory_space<vmem>>, vector<16x128xf32>
      tpu.vector_store %arg38[%c0_104, %c0_105], %190 {strides = array<i32>} : memref<16x128xf32, #tpu.memory_space<vmem>>, vector<16x128xf32>,
      %c0_106 = arith.constant 0 : index
      %c0_107 = arith.constant 0 : index
      %192 = vector.load %arg2[%c0_106, %c0_107] : memref<32x8xf32, #tpu.memory_space<vmem>>, vector<32x8xf32>
      %193 = arith.truncf %192 : vector<32x8xf32> to vector<32x8xbf16>
      %c0_108 = arith.constant 0 : index
      %c0_109 = arith.constant 0 : index
      %194 = vector.load %arg13[%c0_108, %c0_109] : memref<8x128xbf16, #tpu.memory_space<vmem>>, vector<8x128xbf16>
      %cst_110 = arith.constant dense<0.000000e+00> : vector<32x128xf32>
      %195 = tpu.matmul %193, %194, %cst_110 {dimension_numbers = #tpu.dot_dimension_numbers<[1], [0], [0], [1], [0, 0, 1, 1], [], []>} : vector<32x8xbf16>, vector<8x128xbf16>, vector<32x128xf32> -> vector<32x128xf32>
      %c0_111 = arith.constant 0 : index
      %c0_112 = arith.constant 0 : index
      %196 = vector.load %arg14[%c0_111, %c0_112] : memref<1x128xf32, #tpu.memory_space<vmem>>, vector<1x128xf32>
      %197 = vector.broadcast %196 : vector<1x128xf32> to vector<32x128xf32>
      %198 = arith.addf %195, %197 : vector<32x128xf32>
      %cst_113 = arith.constant 0.000000e+00 : f32
      %199 = vector.broadcast %cst_113 : f32 to vector<32x128xf32>
      %200 = arith.maximumf %198, %199 : vector<32x128xf32>
      %201 = arith.truncf %200 : vector<32x128xf32> to vector<32x128xbf16>
      %c0_114 = arith.constant 0 : index
      %c0_115 = arith.constant 0 : index
      %202 = vector.load %arg15[%c0_114, %c0_115] : memref<128x128xbf16, #tpu.memory_space<vmem>>, vector<128x128xbf16>
      %cst_116 = arith.constant dense<0.000000e+00> : vector<32x128xf32>
      %203 = tpu.matmul %201, %202, %cst_116 {dimension_numbers = #tpu.dot_dimension_numbers<[1], [0], [0], [1], [0, 0, 1, 1], [], []>} : vector<32x128xbf16>, vector<128x128xbf16>, vector<32x128xf32> -> vector<32x128xf32>
      %c0_117 = arith.constant 0 : index
      %c0_118 = arith.constant 0 : index
      %204 = vector.load %arg16[%c0_117, %c0_118] : memref<1x128xf32, #tpu.memory_space<vmem>>, vector<1x128xf32>
      %205 = vector.broadcast %204 : vector<1x128xf32> to vector<32x128xf32>
      %206 = arith.addf %203, %205 : vector<32x128xf32>
      %c0_119 = arith.constant 0 : index
      %c0_120 = arith.constant 0 : index
      %207 = vector.load %arg17[%c0_119, %c0_120] : memref<1x128xf32, #tpu.memory_space<vmem>>, vector<1x128xf32>
      %c0_121 = arith.constant 0 : index
      %c0_122 = arith.constant 0 : index
      %208 = vector.load %arg18[%c0_121, %c0_122] : memref<1x128xf32, #tpu.memory_space<vmem>>, vector<1x128xf32>
      %cst_123 = arith.constant dense<0.000000e+00> : vector<32xf32>
      %209 = vector.multi_reduction <add>, %206, %cst_123 [1] : vector<32x128xf32> to vector<32xf32>
      %210 = vector.shape_cast %209 : vector<32xf32> to vector<32x1xf32>
      %cst_124 = arith.constant 1.280000e+02 : f32
      %211 = vector.broadcast %cst_124 : f32 to vector<32x1xf32>
      %212 = arith.divf %210, %211 : vector<32x1xf32>
      %213 = vector.broadcast %212 : vector<32x1xf32> to vector<32x128xf32>
      %214 = arith.subf %206, %213 : vector<32x128xf32>
      %215 = vector.broadcast %212 : vector<32x1xf32> to vector<32x128xf32>
      %216 = arith.subf %206, %215 : vector<32x128xf32>
      %217 = arith.mulf %214, %216 : vector<32x128xf32>
      %cst_125 = arith.constant dense<0.000000e+00> : vector<32xf32>
      %218 = vector.multi_reduction <add>, %217, %cst_125 [1] : vector<32x128xf32> to vector<32xf32>
      %219 = vector.shape_cast %218 : vector<32xf32> to vector<32x1xf32>
      %cst_126 = arith.constant 1.280000e+02 : f32
      %220 = vector.broadcast %cst_126 : f32 to vector<32x1xf32>
      %221 = arith.divf %219, %220 : vector<32x1xf32>
      %222 = vector.broadcast %212 : vector<32x1xf32> to vector<32x128xf32>
      %223 = arith.subf %206, %222 : vector<32x128xf32>
      %cst_127 = arith.constant 9.99999974E-6 : f32
      %224 = vector.broadcast %cst_127 : f32 to vector<32x1xf32>
      %225 = arith.addf %221, %224 : vector<32x1xf32>
      %226 = math.rsqrt %225 : vector<32x1xf32>
      %227 = vector.broadcast %226 : vector<32x1xf32> to vector<32x128xf32>
      %228 = arith.mulf %223, %227 : vector<32x128xf32>
      %229 = vector.broadcast %207 : vector<1x128xf32> to vector<32x128xf32>
      %230 = arith.mulf %228, %229 : vector<32x128xf32>
      %231 = vector.broadcast %208 : vector<1x128xf32> to vector<32x128xf32>
      %232 = arith.addf %230, %231 : vector<32x128xf32>
      %c0_128 = arith.constant 0 : index
      %c0_129 = arith.constant 0 : index
      %233 = vector.load %arg39[%c0_128, %c0_129] : memref<32x128xf32, #tpu.memory_space<vmem>>, vector<32x128xf32>
      tpu.vector_store %arg39[%c0_128, %c0_129], %232 {strides = array<i32>} : memref<32x128xf32, #tpu.memory_space<vmem>>, vector<32x128xf32>,
      %234 = tpu.iota {dimensions = array<i32: 1>} : vector<32x32xi32>
      %c16_i32 = arith.constant 16 : i32
      %235 = vector.broadcast %c16_i32 : i32 to vector<32x32xi32>
      %236 = arith.cmpi slt, %234, %235 : vector<32x32xi32>
      %c0_130 = arith.constant 0 : index
      %c0_131 = arith.constant 0 : index
      %237 = vector.load %arg3[%c0_130, %c0_131] : memref<32x1xi32, #tpu.memory_space<vmem>>, vector<32x1xi32>
      %c0_132 = arith.constant 0 : index
      %c0_133 = arith.constant 0 : index
      %238 = vector.load %arg4[%c0_132, %c0_133] : memref<32x1xi32, #tpu.memory_space<vmem>>, vector<32x1xi32>
      %c16_i32_134 = arith.constant 16 : i32
      %239 = vector.broadcast %c16_i32_134 : i32 to vector<32x1xi32>
      %240 = arith.addi %238, %239 : vector<32x1xi32>
      %241 = vector.shape_cast %237 : vector<32x1xi32> to vector<32x1xi32>
      %242 = vector.broadcast %241 : vector<32x1xi32> to vector<32x32xi32>
      %243 = vector.shape_cast %240 : vector<32x1xi32> to vector<32x1xi32>
      %244 = vector.broadcast %243 : vector<32x1xi32> to vector<32x32xi32>
      %245 = arith.select %236, %242, %244 : vector<32x32xi1>, vector<32x32xi32>
      %246 = arith.cmpi eq, %234, %245 : vector<32x32xi32>
      %cst_135 = arith.constant 1.000000e+00 : f32
      %cst_136 = arith.constant 0.000000e+00 : f32
      %247 = vector.broadcast %cst_135 : f32 to vector<32x32xf32>
      %248 = vector.broadcast %cst_136 : f32 to vector<32x32xf32>
      %249 = arith.select %246, %247, %248 : vector<32x32xi1>, vector<32x32xf32>
      %250 = arith.truncf %249 : vector<32x32xf32> to vector<32x32xbf16>
      %c0_137 = arith.constant 0 : index
      %c0_138 = arith.constant 0 : index
      %251 = vector.load %arg40[%c0_137, %c0_138] : memref<32x32xbf16, #tpu.memory_space<vmem>>, vector<32x32xbf16>
      tpu.vector_store %arg40[%c0_137, %c0_138], %250 {strides = array<i32>} : memref<32x32xbf16, #tpu.memory_space<vmem>>, vector<32x32xbf16>,
      %252 = tpu.iota {dimensions = array<i32: 0>} : vector<16x32xi32>
      %c0_139 = arith.constant 0 : index
      %c0_140 = arith.constant 0 : index
      %253 = vector.load %arg5[%c0_139, %c0_140] : memref<1x32xi32, #tpu.memory_space<vmem>>, vector<1x32xi32>
      %254 = vector.broadcast %253 : vector<1x32xi32> to vector<16x32xi32>
      %255 = arith.cmpi eq, %252, %254 : vector<16x32xi32>
      %cst_141 = arith.constant 1.000000e+00 : f32
      %cst_142 = arith.constant 0.000000e+00 : f32
      %256 = vector.broadcast %cst_141 : f32 to vector<16x32xf32>
      %257 = vector.broadcast %cst_142 : f32 to vector<16x32xf32>
      %258 = arith.select %255, %256, %257 : vector<16x32xi1>, vector<16x32xf32>
      %259 = arith.truncf %258 : vector<16x32xf32> to vector<16x32xbf16>
      %c0_143 = arith.constant 0 : index
      %c0_144 = arith.constant 0 : index
      %260 = vector.load %arg41[%c0_143, %c0_144] : memref<16x32xbf16, #tpu.memory_space<vmem>>, vector<16x32xbf16>
      tpu.vector_store %arg41[%c0_143, %c0_144], %259 {strides = array<i32>} : memref<16x32xbf16, #tpu.memory_space<vmem>>, vector<16x32xbf16>,
    } else {
    }
    %c0 = arith.constant 0 : index
    %c0_1 = arith.constant 0 : index
    %3 = vector.load %arg38[%c0, %c0_1] : memref<16x128xf32, #tpu.memory_space<vmem>>, vector<16x128xf32>
    %c0_2 = arith.constant 0 : index
    %c0_3 = arith.constant 0 : index
    %4 = vector.load %arg39[%c0_2, %c0_3] : memref<32x128xf32, #tpu.memory_space<vmem>>, vector<32x128xf32>
    %5 = arith.truncf %3 : vector<16x128xf32> to vector<16x128xbf16>
    %6 = arith.truncf %4 : vector<32x128xf32> to vector<32x128xbf16>
    %c0_4 = arith.constant 0 : index
    %c0_5 = arith.constant 0 : index
    %7 = vector.load %arg40[%c0_4, %c0_5] : memref<32x32xbf16, #tpu.memory_space<vmem>>, vector<32x32xbf16>
    %c0_6 = arith.constant 0 : index
    %c0_7 = arith.constant 0 : index
    %8 = vector.load %arg41[%c0_6, %c0_7] : memref<16x32xbf16, #tpu.memory_space<vmem>>, vector<16x32xbf16>
    %c0_8 = arith.constant 0 : index
    %c0_9 = arith.constant 0 : index
    %c0_10 = arith.constant 0 : index
    %9 = vector.load %arg19[%c0_8, %c0_9, %c0_10] : memref<1x384x128xbf16, #tpu.memory_space<vmem>>, vector<1x384x128xbf16>
    %10 = vector.shape_cast %9 : vector<1x384x128xbf16> to vector<384x128xbf16>
    %11 = vector.extract_strided_slice %10 {offsets = [128, 0], sizes = [128, 128], strides = [1, 1]} : vector<384x128xbf16> to vector<128x128xbf16>
    %cst = arith.constant dense<0.000000e+00> : vector<16x128xf32>
    %12 = tpu.matmul %5, %11, %cst {dimension_numbers = #tpu.dot_dimension_numbers<[1], [0], [0], [1], [0, 0, 1, 1], [], []>} : vector<16x128xbf16>, vector<128x128xbf16>, vector<16x128xf32> -> vector<16x128xf32>
    %13 = vector.extract_strided_slice %10 {offsets = [256, 0], sizes = [128, 128], strides = [1, 1]} : vector<384x128xbf16> to vector<128x128xbf16>
    %cst_11 = arith.constant dense<0.000000e+00> : vector<16x128xf32>
    %14 = tpu.matmul %5, %13, %cst_11 {dimension_numbers = #tpu.dot_dimension_numbers<[1], [0], [0], [1], [0, 0, 1, 1], [], []>} : vector<16x128xbf16>, vector<128x128xbf16>, vector<16x128xf32> -> vector<16x128xf32>
    %15 = tpu.concatenate %12, %14 in 0 : vector<16x128xf32>, vector<16x128xf32> -> vector<32x128xf32>
    %16 = arith.truncf %15 : vector<32x128xf32> to vector<32x128xbf16>
    %17 = vector.extract_strided_slice %10 {offsets = [0, 0], sizes = [128, 128], strides = [1, 1]} : vector<384x128xbf16> to vector<128x128xbf16>
    %cst_12 = arith.constant dense<0.000000e+00> : vector<32x128xf32>
    %18 = tpu.matmul %6, %17, %cst_12 {dimension_numbers = #tpu.dot_dimension_numbers<[1], [0], [0], [1], [0, 0, 1, 1], [], []>} : vector<32x128xbf16>, vector<128x128xbf16>, vector<32x128xf32> -> vector<32x128xf32>
    %cst_13 = arith.constant dense<0.000000e+00> : vector<32x128xf32>
    %19 = tpu.matmul %7, %16, %cst_13 {dimension_numbers = #tpu.dot_dimension_numbers<[1], [0], [0], [1], [0, 0, 1, 1], [], []>} : vector<32x32xbf16>, vector<32x128xbf16>, vector<32x128xf32> -> vector<32x128xf32>
    %20 = arith.addf %18, %19 : vector<32x128xf32>
    %c0_14 = arith.constant 0 : index
    %c0_15 = arith.constant 0 : index
    %c0_16 = arith.constant 0 : index
    %21 = vector.load %arg20[%c0_14, %c0_15, %c0_16] : memref<1x1x128xf32, #tpu.memory_space<vmem>>, vector<1x1x128xf32>
    %22 = vector.shape_cast %21 : vector<1x1x128xf32> to vector<1x128xf32>
    %23 = vector.broadcast %22 : vector<1x128xf32> to vector<32x128xf32>
    %24 = arith.addf %20, %23 : vector<32x128xf32>
    %cst_17 = arith.constant 0.000000e+00 : f32
    %25 = vector.broadcast %cst_17 : f32 to vector<32x128xf32>
    %26 = arith.maximumf %24, %25 : vector<32x128xf32>
    %27 = arith.truncf %26 : vector<32x128xf32> to vector<32x128xbf16>
    %c0_18 = arith.constant 0 : index
    %c0_19 = arith.constant 0 : index
    %c0_20 = arith.constant 0 : index
    %28 = vector.load %arg21[%c0_18, %c0_19, %c0_20] : memref<1x128x128xbf16, #tpu.memory_space<vmem>>, vector<1x128x128xbf16>
    %29 = vector.shape_cast %28 : vector<1x128x128xbf16> to vector<128x128xbf16>
    %cst_21 = arith.constant dense<0.000000e+00> : vector<32x128xf32>
    %30 = tpu.matmul %27, %29, %cst_21 {dimension_numbers = #tpu.dot_dimension_numbers<[1], [0], [0], [1], [0, 0, 1, 1], [], []>} : vector<32x128xbf16>, vector<128x128xbf16>, vector<32x128xf32> -> vector<32x128xf32>
    %c0_22 = arith.constant 0 : index
    %c0_23 = arith.constant 0 : index
    %c0_24 = arith.constant 0 : index
    %31 = vector.load %arg22[%c0_22, %c0_23, %c0_24] : memref<1x1x128xf32, #tpu.memory_space<vmem>>, vector<1x1x128xf32>
    %32 = vector.shape_cast %31 : vector<1x1x128xf32> to vector<1x128xf32>
    %33 = vector.broadcast %32 : vector<1x128xf32> to vector<32x128xf32>
    %34 = arith.addf %30, %33 : vector<32x128xf32>
    %c0_25 = arith.constant 0 : index
    %c0_26 = arith.constant 0 : index
    %c0_27 = arith.constant 0 : index
    %35 = vector.load %arg23[%c0_25, %c0_26, %c0_27] : memref<1x1x128xf32, #tpu.memory_space<vmem>>, vector<1x1x128xf32>
    %36 = vector.shape_cast %35 : vector<1x1x128xf32> to vector<1x128xf32>
    %c0_28 = arith.constant 0 : index
    %c0_29 = arith.constant 0 : index
    %c0_30 = arith.constant 0 : index
    %37 = vector.load %arg24[%c0_28, %c0_29, %c0_30] : memref<1x1x128xf32, #tpu.memory_space<vmem>>, vector<1x1x128xf32>
    %38 = vector.shape_cast %37 : vector<1x1x128xf32> to vector<1x128xf32>
    %cst_31 = arith.constant dense<0.000000e+00> : vector<32xf32>
    %39 = vector.multi_reduction <add>, %34, %cst_31 [1] : vector<32x128xf32> to vector<32xf32>
    %40 = vector.shape_cast %39 : vector<32xf32> to vector<32x1xf32>
    %cst_32 = arith.constant 1.280000e+02 : f32
    %41 = vector.broadcast %cst_32 : f32 to vector<32x1xf32>
    %42 = arith.divf %40, %41 : vector<32x1xf32>
    %43 = vector.broadcast %42 : vector<32x1xf32> to vector<32x128xf32>
    %44 = arith.subf %34, %43 : vector<32x128xf32>
    %45 = vector.broadcast %42 : vector<32x1xf32> to vector<32x128xf32>
    %46 = arith.subf %34, %45 : vector<32x128xf32>
    %47 = arith.mulf %44, %46 : vector<32x128xf32>
    %cst_33 = arith.constant dense<0.000000e+00> : vector<32xf32>
    %48 = vector.multi_reduction <add>, %47, %cst_33 [1] : vector<32x128xf32> to vector<32xf32>
    %49 = vector.shape_cast %48 : vector<32xf32> to vector<32x1xf32>
    %cst_34 = arith.constant 1.280000e+02 : f32
    %50 = vector.broadcast %cst_34 : f32 to vector<32x1xf32>
    %51 = arith.divf %49, %50 : vector<32x1xf32>
    %52 = vector.broadcast %42 : vector<32x1xf32> to vector<32x128xf32>
    %53 = arith.subf %34, %52 : vector<32x128xf32>
    %cst_35 = arith.constant 9.99999974E-6 : f32
    %54 = vector.broadcast %cst_35 : f32 to vector<32x1xf32>
    %55 = arith.addf %51, %54 : vector<32x1xf32>
    %56 = math.rsqrt %55 : vector<32x1xf32>
    %57 = vector.broadcast %56 : vector<32x1xf32> to vector<32x128xf32>
    %58 = arith.mulf %53, %57 : vector<32x128xf32>
    %59 = vector.broadcast %36 : vector<1x128xf32> to vector<32x128xf32>
    %60 = arith.mulf %58, %59 : vector<32x128xf32>
    %61 = vector.broadcast %38 : vector<1x128xf32> to vector<32x128xf32>
    %62 = arith.addf %60, %61 : vector<32x128xf32>
    %63 = arith.addf %4, %62 : vector<32x128xf32>
    %c0_36 = arith.constant 0 : index
    %c0_37 = arith.constant 0 : index
    %64 = vector.load %arg39[%c0_36, %c0_37] : memref<32x128xf32, #tpu.memory_space<vmem>>, vector<32x128xf32>
    tpu.vector_store %arg39[%c0_36, %c0_37], %63 {strides = array<i32>} : memref<32x128xf32, #tpu.memory_space<vmem>>, vector<32x128xf32>,
    %c0_38 = arith.constant 0 : index
    %c0_39 = arith.constant 0 : index
    %65 = vector.load %arg6[%c0_38, %c0_39] : memref<32x1xf32, #tpu.memory_space<vmem>>, vector<32x1xf32>
    %66 = vector.broadcast %65 : vector<32x1xf32> to vector<32x128xf32>
    %67 = arith.mulf %66, %63 : vector<32x128xf32>
    %68 = arith.truncf %67 : vector<32x128xf32> to vector<32x128xbf16>
    %cst_40 = arith.constant dense<0.000000e+00> : vector<16x128xf32>
    %69 = tpu.matmul %8, %68, %cst_40 {dimension_numbers = #tpu.dot_dimension_numbers<[1], [0], [0], [1], [0, 0, 1, 1], [], []>} : vector<16x32xbf16>, vector<32x128xbf16>, vector<16x128xf32> -> vector<16x128xf32>
    %70 = arith.truncf %69 : vector<16x128xf32> to vector<16x128xbf16>
    %71 = tpu.concatenate %5, %70 in 1 : vector<16x128xbf16>, vector<16x128xbf16> -> vector<16x256xbf16>
    %c0_41 = arith.constant 0 : index
    %c0_42 = arith.constant 0 : index
    %c0_43 = arith.constant 0 : index
    %72 = vector.load %arg25[%c0_41, %c0_42, %c0_43] : memref<1x256x128xbf16, #tpu.memory_space<vmem>>, vector<1x256x128xbf16>
    %73 = vector.shape_cast %72 : vector<1x256x128xbf16> to vector<256x128xbf16>
    %cst_44 = arith.constant dense<0.000000e+00> : vector<16x128xf32>
    %74 = tpu.matmul %71, %73, %cst_44 {dimension_numbers = #tpu.dot_dimension_numbers<[1], [0], [0], [1], [0, 0, 1, 1], [], []>} : vector<16x256xbf16>, vector<256x128xbf16>, vector<16x128xf32> -> vector<16x128xf32>
    %c0_45 = arith.constant 0 : index
    %c0_46 = arith.constant 0 : index
    %c0_47 = arith.constant 0 : index
    %75 = vector.load %arg26[%c0_45, %c0_46, %c0_47] : memref<1x1x128xf32, #tpu.memory_space<vmem>>, vector<1x1x128xf32>
    %76 = vector.shape_cast %75 : vector<1x1x128xf32> to vector<1x128xf32>
    %77 = vector.broadcast %76 : vector<1x128xf32> to vector<16x128xf32>
    %78 = arith.addf %74, %77 : vector<16x128xf32>
    %cst_48 = arith.constant 0.000000e+00 : f32
    %79 = vector.broadcast %cst_48 : f32 to vector<16x128xf32>
    %80 = arith.maximumf %78, %79 : vector<16x128xf32>
    %81 = arith.truncf %80 : vector<16x128xf32> to vector<16x128xbf16>
    %c0_49 = arith.constant 0 : index
    %c0_50 = arith.constant 0 : index
    %c0_51 = arith.constant 0 : index
    %82 = vector.load %arg27[%c0_49, %c0_50, %c0_51] : memref<1x128x128xbf16, #tpu.memory_space<vmem>>, vector<1x128x128xbf16>
    %83 = vector.shape_cast %82 : vector<1x128x128xbf16> to vector<128x128xbf16>
    %cst_52 = arith.constant dense<0.000000e+00> : vector<16x128xf32>
    %84 = tpu.matmul %81, %83, %cst_52 {dimension_numbers = #tpu.dot_dimension_numbers<[1], [0], [0], [1], [0, 0, 1, 1], [], []>} : vector<16x128xbf16>, vector<128x128xbf16>, vector<16x128xf32> -> vector<16x128xf32>
    %c0_53 = arith.constant 0 : index
    %c0_54 = arith.constant 0 : index
    %c0_55 = arith.constant 0 : index
    %85 = vector.load %arg28[%c0_53, %c0_54, %c0_55] : memref<1x1x128xf32, #tpu.memory_space<vmem>>, vector<1x1x128xf32>
    %86 = vector.shape_cast %85 : vector<1x1x128xf32> to vector<1x128xf32>
    %87 = vector.broadcast %86 : vector<1x128xf32> to vector<16x128xf32>
    %88 = arith.addf %84, %87 : vector<16x128xf32>
    %c0_56 = arith.constant 0 : index
    %c0_57 = arith.constant 0 : index
    %c0_58 = arith.constant 0 : index
    %89 = vector.load %arg29[%c0_56, %c0_57, %c0_58] : memref<1x1x128xf32, #tpu.memory_space<vmem>>, vector<1x1x128xf32>
    %90 = vector.shape_cast %89 : vector<1x1x128xf32> to vector<1x128xf32>
    %c0_59 = arith.constant 0 : index
    %c0_60 = arith.constant 0 : index
    %c0_61 = arith.constant 0 : index
    %91 = vector.load %arg30[%c0_59, %c0_60, %c0_61] : memref<1x1x128xf32, #tpu.memory_space<vmem>>, vector<1x1x128xf32>
    %92 = vector.shape_cast %91 : vector<1x1x128xf32> to vector<1x128xf32>
    %cst_62 = arith.constant dense<0.000000e+00> : vector<16xf32>
    %93 = vector.multi_reduction <add>, %88, %cst_62 [1] : vector<16x128xf32> to vector<16xf32>
    %94 = vector.shape_cast %93 : vector<16xf32> to vector<16x1xf32>
    %cst_63 = arith.constant 1.280000e+02 : f32
    %95 = vector.broadcast %cst_63 : f32 to vector<16x1xf32>
    %96 = arith.divf %94, %95 : vector<16x1xf32>
    %97 = vector.broadcast %96 : vector<16x1xf32> to vector<16x128xf32>
    %98 = arith.subf %88, %97 : vector<16x128xf32>
    %99 = vector.broadcast %96 : vector<16x1xf32> to vector<16x128xf32>
    %100 = arith.subf %88, %99 : vector<16x128xf32>
    %101 = arith.mulf %98, %100 : vector<16x128xf32>
    %cst_64 = arith.constant dense<0.000000e+00> : vector<16xf32>
    %102 = vector.multi_reduction <add>, %101, %cst_64 [1] : vector<16x128xf32> to vector<16xf32>
    %103 = vector.shape_cast %102 : vector<16xf32> to vector<16x1xf32>
    %cst_65 = arith.constant 1.280000e+02 : f32
    %104 = vector.broadcast %cst_65 : f32 to vector<16x1xf32>
    %105 = arith.divf %103, %104 : vector<16x1xf32>
    %106 = vector.broadcast %96 : vector<16x1xf32> to vector<16x128xf32>
    %107 = arith.subf %88, %106 : vector<16x128xf32>
    %cst_66 = arith.constant 9.99999974E-6 : f32
    %108 = vector.broadcast %cst_66 : f32 to vector<16x1xf32>
    %109 = arith.addf %105, %108 : vector<16x1xf32>
    %110 = math.rsqrt %109 : vector<16x1xf32>
    %111 = vector.broadcast %110 : vector<16x1xf32> to vector<16x128xf32>
    %112 = arith.mulf %107, %111 : vector<16x128xf32>
    %113 = vector.broadcast %90 : vector<1x128xf32> to vector<16x128xf32>
    %114 = arith.mulf %112, %113 : vector<16x128xf32>
    %115 = vector.broadcast %92 : vector<1x128xf32> to vector<16x128xf32>
    %116 = arith.addf %114, %115 : vector<16x128xf32>
    %117 = arith.addf %3, %116 : vector<16x128xf32>
    %118 = arith.truncf %117 : vector<16x128xf32> to vector<16x128xbf16>
    %c0_67 = arith.constant 0 : index
    %c0_68 = arith.constant 0 : index
    %c0_69 = arith.constant 0 : index
    %119 = vector.load %arg31[%c0_67, %c0_68, %c0_69] : memref<1x128x384xbf16, #tpu.memory_space<vmem>>, vector<1x128x384xbf16>
    %120 = vector.shape_cast %119 : vector<1x128x384xbf16> to vector<128x384xbf16>
    %cst_70 = arith.constant dense<0.000000e+00> : vector<16x384xf32>
    %121 = tpu.matmul %118, %120, %cst_70 {dimension_numbers = #tpu.dot_dimension_numbers<[1], [0], [0], [1], [0, 0, 1, 1], [], []>} : vector<16x128xbf16>, vector<128x384xbf16>, vector<16x384xf32> -> vector<16x384xf32>
    %122 = vector.extract_strided_slice %121 {offsets = [0, 0], sizes = [16, 128], strides = [1, 1]} : vector<16x384xf32> to vector<16x128xf32>
    %123 = vector.extract_strided_slice %121 {offsets = [0, 128], sizes = [16, 128], strides = [1, 1]} : vector<16x384xf32> to vector<16x128xf32>
    %124 = vector.extract_strided_slice %121 {offsets = [0, 256], sizes = [16, 128], strides = [1, 1]} : vector<16x384xf32> to vector<16x128xf32>
    %125 = arith.truncf %122 : vector<16x128xf32> to vector<16x128xbf16>
    %126 = arith.truncf %123 : vector<16x128xf32> to vector<16x128xbf16>
    %cst_71 = arith.constant dense<0.000000e+00> : vector<16x16xf32>
    %127 = tpu.matmul %125, %126, %cst_71 {dimension_numbers = #tpu.dot_dimension_numbers<[1], [1], [0], [0], [0, 0, 1, 0], [], []>} : vector<16x128xbf16>, vector<16x128xbf16>, vector<16x16xf32> -> vector<16x16xf32>
    %cst_72 = arith.constant dense<0xFF800000> : vector<16xf32>
    %128 = vector.multi_reduction <maximumf>, %127, %cst_72 [1] : vector<16x16xf32> to vector<16xf32>
    %129 = vector.shape_cast %128 : vector<16xf32> to vector<16x1xf32>
    %130 = vector.broadcast %129 : vector<16x1xf32> to vector<16x16xf32>
    %131 = arith.subf %127, %130 : vector<16x16xf32>
    %132 = math.exp %131 : vector<16x16xf32>
    %cst_73 = arith.constant dense<0.000000e+00> : vector<16xf32>
    %133 = vector.multi_reduction <add>, %132, %cst_73 [1] : vector<16x16xf32> to vector<16xf32>
    %134 = vector.shape_cast %133 : vector<16xf32> to vector<16x1xf32>
    %135 = tpu.reciprocal %134 {approx = true} : vector<16x1xf32> -> vector<16x1xf32>
    %136 = vector.broadcast %135 : vector<16x1xf32> to vector<16x16xf32>
    %137 = arith.mulf %132, %136 : vector<16x16xf32>
    %138 = arith.truncf %137 : vector<16x16xf32> to vector<16x16xbf16>
    %139 = arith.truncf %124 : vector<16x128xf32> to vector<16x128xbf16>
    %cst_74 = arith.constant dense<0.000000e+00> : vector<16x128xf32>
    %140 = tpu.matmul %138, %139, %cst_74 {dimension_numbers = #tpu.dot_dimension_numbers<[1], [0], [0], [1], [0, 0, 1, 1], [], []>} : vector<16x16xbf16>, vector<16x128xbf16>, vector<16x128xf32> -> vector<16x128xf32>
    %141 = arith.truncf %140 : vector<16x128xf32> to vector<16x128xbf16>
    %c0_75 = arith.constant 0 : index
    %c0_76 = arith.constant 0 : index
    %c0_77 = arith.constant 0 : index
    %142 = vector.load %arg32[%c0_75, %c0_76, %c0_77] : memref<1x128x128xbf16, #tpu.memory_space<vmem>>, vector<1x128x128xbf16>
    %143 = vector.shape_cast %142 : vector<1x128x128xbf16> to vector<128x128xbf16>
    %cst_78 = arith.constant dense<0.000000e+00> : vector<16x128xf32>
    %144 = tpu.matmul %141, %143, %cst_78 {dimension_numbers = #tpu.dot_dimension_numbers<[1], [0], [0], [1], [0, 0, 1, 1], [], []>} : vector<16x128xbf16>, vector<128x128xbf16>, vector<16x128xf32> -> vector<16x128xf32>
    %145 = arith.addf %117, %144 : vector<16x128xf32>
    %c0_79 = arith.constant 0 : index
    %c0_80 = arith.constant 0 : index
    %146 = vector.load %arg38[%c0_79, %c0_80] : memref<16x128xf32, #tpu.memory_space<vmem>>, vector<16x128xf32>
    tpu.vector_store %arg38[%c0_79, %c0_80], %145 {strides = array<i32>} : memref<16x128xf32, #tpu.memory_space<vmem>>, vector<16x128xf32>,
    %c1_i32 = arith.constant 1 : i32
    %147 = arith.cmpi eq, %arg0, %c1_i32 : i32
    %148 = arith.extui %147 : i1 to i32
    %c0_i32_81 = arith.constant 0 : i32
    %149 = arith.cmpi ne, %148, %c0_i32_81 : i32
    scf.if %149 {
      %150 = arith.truncf %145 : vector<16x128xf32> to vector<16x128xbf16>
      %c0_82 = arith.constant 0 : index
      %c0_83 = arith.constant 0 : index
      %151 = vector.load %arg33[%c0_82, %c0_83] : memref<128x128xbf16, #tpu.memory_space<vmem>>, vector<128x128xbf16>
      %cst_84 = arith.constant dense<0.000000e+00> : vector<16x128xf32>
      %152 = tpu.matmul %150, %151, %cst_84 {dimension_numbers = #tpu.dot_dimension_numbers<[1], [0], [0], [1], [0, 0, 1, 1], [], []>} : vector<16x128xbf16>, vector<128x128xbf16>, vector<16x128xf32> -> vector<16x128xf32>
      %c0_85 = arith.constant 0 : index
      %c0_86 = arith.constant 0 : index
      %153 = vector.load %arg34[%c0_85, %c0_86] : memref<1x128xf32, #tpu.memory_space<vmem>>, vector<1x128xf32>
      %154 = vector.broadcast %153 : vector<1x128xf32> to vector<16x128xf32>
      %155 = arith.addf %152, %154 : vector<16x128xf32>
      %cst_87 = arith.constant 0.000000e+00 : f32
      %156 = vector.broadcast %cst_87 : f32 to vector<16x128xf32>
      %157 = arith.maximumf %155, %156 : vector<16x128xf32>
      %158 = arith.truncf %157 : vector<16x128xf32> to vector<16x128xbf16>
      %c0_88 = arith.constant 0 : index
      %c0_89 = arith.constant 0 : index
      %159 = vector.load %arg35[%c0_88, %c0_89] : memref<128x128xbf16, #tpu.memory_space<vmem>>, vector<128x128xbf16>
      %cst_90 = arith.constant dense<0.000000e+00> : vector<16x128xf32>
      %160 = tpu.matmul %158, %159, %cst_90 {dimension_numbers = #tpu.dot_dimension_numbers<[1], [0], [0], [1], [0, 0, 1, 1], [], []>} : vector<16x128xbf16>, vector<128x128xbf16>, vector<16x128xf32> -> vector<16x128xf32>
      %c0_91 = arith.constant 0 : index
      %c0_92 = arith.constant 0 : index
      %161 = vector.load %arg36[%c0_91, %c0_92] : memref<1x128xf32, #tpu.memory_space<vmem>>, vector<1x128xf32>
      %162 = vector.broadcast %161 : vector<1x128xf32> to vector<16x128xf32>
      %163 = arith.addf %160, %162 : vector<16x128xf32>
      %c0_93 = arith.constant 0 : index
      %c0_94 = arith.constant 0 : index
      %164 = vector.load %arg37[%c0_93, %c0_94] : memref<16x128xf32, #tpu.memory_space<vmem>>, vector<16x128xf32>
      tpu.vector_store %arg37[%c0_93, %c0_94], %163 {strides = array<i32>} : memref<16x128xf32, #tpu.memory_space<vmem>>, vector<16x128xf32>,
    } else {
    }
    return
  }
  func.func @transform_0(%arg0: i32) -> (i32, i32) {
    %c0_i32 = arith.constant 0 : i32
    %c0_i32_0 = arith.constant 0 : i32
    %c0_i32_1 = arith.constant 0 : i32
    return %c0_i32, %c0_i32_0 : i32, i32
  }
  func.func @transform_1(%arg0: i32) -> (i32, i32) {
    %c0_i32 = arith.constant 0 : i32
    %c0_i32_0 = arith.constant 0 : i32
    %c0_i32_1 = arith.constant 0 : i32
    return %c0_i32, %c0_i32_0 : i32, i32
  }
  func.func @transform_2(%arg0: i32) -> (i32, i32) {
    %c0_i32 = arith.constant 0 : i32
    %c0_i32_0 = arith.constant 0 : i32
    %c0_i32_1 = arith.constant 0 : i32
    return %c0_i32, %c0_i32_0 : i32, i32
  }
  func.func @transform_3(%arg0: i32) -> (i32, i32) {
    %c0_i32 = arith.constant 0 : i32
    %c0_i32_0 = arith.constant 0 : i32
    %c0_i32_1 = arith.constant 0 : i32
    return %c0_i32, %c0_i32_0 : i32, i32
  }
  func.func @transform_4(%arg0: i32) -> (i32, i32) {
    %c0_i32 = arith.constant 0 : i32
    %c0_i32_0 = arith.constant 0 : i32
    %c0_i32_1 = arith.constant 0 : i32
    return %c0_i32, %c0_i32_0 : i32, i32
  }
  func.func @transform_5(%arg0: i32) -> (i32, i32) {
    %c0_i32 = arith.constant 0 : i32
    %c0_i32_0 = arith.constant 0 : i32
    %c0_i32_1 = arith.constant 0 : i32
    return %c0_i32, %c0_i32_0 : i32, i32
  }
  func.func @transform_6(%arg0: i32) -> (i32, i32) {
    %c0_i32 = arith.constant 0 : i32
    %c0_i32_0 = arith.constant 0 : i32
    %c0_i32_1 = arith.constant 0 : i32
    return %c0_i32, %c0_i32_0 : i32, i32
  }
  func.func @transform_7(%arg0: i32) -> (i32, i32) {
    %c0_i32 = arith.constant 0 : i32
    %c0_i32_0 = arith.constant 0 : i32
    %c0_i32_1 = arith.constant 0 : i32
    return %c0_i32, %c0_i32_0 : i32, i32
  }
  func.func @transform_8(%arg0: i32) -> (i32, i32) {
    %c0_i32 = arith.constant 0 : i32
    %c0_i32_0 = arith.constant 0 : i32
    %c0_i32_1 = arith.constant 0 : i32
    return %c0_i32, %c0_i32_0 : i32, i32
  }
  func.func @transform_9(%arg0: i32) -> (i32, i32) {
    %c0_i32 = arith.constant 0 : i32
    %c0_i32_0 = arith.constant 0 : i32
    %c0_i32_1 = arith.constant 0 : i32
    return %c0_i32, %c0_i32_0 : i32, i32
  }
  func.func @transform_10(%arg0: i32) -> (i32, i32) {
    %c0_i32 = arith.constant 0 : i32
    %c0_i32_0 = arith.constant 0 : i32
    %c0_i32_1 = arith.constant 0 : i32
    return %c0_i32, %c0_i32_0 : i32, i32
  }
  func.func @transform_11(%arg0: i32) -> (i32, i32) {
    %c0_i32 = arith.constant 0 : i32
    %c0_i32_0 = arith.constant 0 : i32
    %c0_i32_1 = arith.constant 0 : i32
    return %c0_i32, %c0_i32_0 : i32, i32
  }
  func.func @transform_12(%arg0: i32) -> (i32, i32) {
    %c0_i32 = arith.constant 0 : i32
    %c0_i32_0 = arith.constant 0 : i32
    %c0_i32_1 = arith.constant 0 : i32
    return %c0_i32, %c0_i32_0 : i32, i32
  }
  func.func @transform_13(%arg0: i32) -> (i32, i32) {
    %c0_i32 = arith.constant 0 : i32
    %c0_i32_0 = arith.constant 0 : i32
    %c0_i32_1 = arith.constant 0 : i32
    return %c0_i32, %c0_i32_0 : i32, i32
  }
  func.func @transform_14(%arg0: i32) -> (i32, i32) {
    %c0_i32 = arith.constant 0 : i32
    %c0_i32_0 = arith.constant 0 : i32
    %c0_i32_1 = arith.constant 0 : i32
    return %c0_i32, %c0_i32_0 : i32, i32
  }
  func.func @transform_15(%arg0: i32) -> (i32, i32) {
    %c0_i32 = arith.constant 0 : i32
    %c0_i32_0 = arith.constant 0 : i32
    %c0_i32_1 = arith.constant 0 : i32
    return %c0_i32, %c0_i32_0 : i32, i32
  }
  func.func @transform_16(%arg0: i32) -> (i32, i32) {
    %c0_i32 = arith.constant 0 : i32
    %c0_i32_0 = arith.constant 0 : i32
    %c0_i32_1 = arith.constant 0 : i32
    return %c0_i32, %c0_i32_0 : i32, i32
  }
  func.func @transform_17(%arg0: i32) -> (i32, i32) {
    %c0_i32 = arith.constant 0 : i32
    %c0_i32_0 = arith.constant 0 : i32
    %c0_i32_1 = arith.constant 0 : i32
    return %c0_i32, %c0_i32_0 : i32, i32
  }
  func.func @transform_18(%arg0: i32) -> (i32, i32, i32) {
    %c0_i32 = arith.constant 0 : i32
    %c0_i32_0 = arith.constant 0 : i32
    %c0_i32_1 = arith.constant 0 : i32
    return %arg0, %c0_i32, %c0_i32_0 : i32, i32, i32
  }
  func.func @transform_19(%arg0: i32) -> (i32, i32, i32) {
    %c0_i32 = arith.constant 0 : i32
    %c0_i32_0 = arith.constant 0 : i32
    %c0_i32_1 = arith.constant 0 : i32
    return %arg0, %c0_i32, %c0_i32_0 : i32, i32, i32
  }
  func.func @transform_20(%arg0: i32) -> (i32, i32, i32) {
    %c0_i32 = arith.constant 0 : i32
    %c0_i32_0 = arith.constant 0 : i32
    %c0_i32_1 = arith.constant 0 : i32
    return %arg0, %c0_i32, %c0_i32_0 : i32, i32, i32
  }
  func.func @transform_21(%arg0: i32) -> (i32, i32, i32) {
    %c0_i32 = arith.constant 0 : i32
    %c0_i32_0 = arith.constant 0 : i32
    %c0_i32_1 = arith.constant 0 : i32
    return %arg0, %c0_i32, %c0_i32_0 : i32, i32, i32
  }
  func.func @transform_22(%arg0: i32) -> (i32, i32, i32) {
    %c0_i32 = arith.constant 0 : i32
    %c0_i32_0 = arith.constant 0 : i32
    %c0_i32_1 = arith.constant 0 : i32
    return %arg0, %c0_i32, %c0_i32_0 : i32, i32, i32
  }
  func.func @transform_23(%arg0: i32) -> (i32, i32, i32) {
    %c0_i32 = arith.constant 0 : i32
    %c0_i32_0 = arith.constant 0 : i32
    %c0_i32_1 = arith.constant 0 : i32
    return %arg0, %c0_i32, %c0_i32_0 : i32, i32, i32
  }
  func.func @transform_24(%arg0: i32) -> (i32, i32, i32) {
    %c0_i32 = arith.constant 0 : i32
    %c0_i32_0 = arith.constant 0 : i32
    %c0_i32_1 = arith.constant 0 : i32
    return %arg0, %c0_i32, %c0_i32_0 : i32, i32, i32
  }
  func.func @transform_25(%arg0: i32) -> (i32, i32, i32) {
    %c0_i32 = arith.constant 0 : i32
    %c0_i32_0 = arith.constant 0 : i32
    %c0_i32_1 = arith.constant 0 : i32
    return %arg0, %c0_i32, %c0_i32_0 : i32, i32, i32
  }
  func.func @transform_26(%arg0: i32) -> (i32, i32, i32) {
    %c0_i32 = arith.constant 0 : i32
    %c0_i32_0 = arith.constant 0 : i32
    %c0_i32_1 = arith.constant 0 : i32
    return %arg0, %c0_i32, %c0_i32_0 : i32, i32, i32
  }
  func.func @transform_27(%arg0: i32) -> (i32, i32, i32) {
    %c0_i32 = arith.constant 0 : i32
    %c0_i32_0 = arith.constant 0 : i32
    %c0_i32_1 = arith.constant 0 : i32
    return %arg0, %c0_i32, %c0_i32_0 : i32, i32, i32
  }
  func.func @transform_28(%arg0: i32) -> (i32, i32, i32) {
    %c0_i32 = arith.constant 0 : i32
    %c0_i32_0 = arith.constant 0 : i32
    %c0_i32_1 = arith.constant 0 : i32
    return %arg0, %c0_i32, %c0_i32_0 : i32, i32, i32
  }
  func.func @transform_29(%arg0: i32) -> (i32, i32, i32) {
    %c0_i32 = arith.constant 0 : i32
    %c0_i32_0 = arith.constant 0 : i32
    %c0_i32_1 = arith.constant 0 : i32
    return %arg0, %c0_i32, %c0_i32_0 : i32, i32, i32
  }
  func.func @transform_30(%arg0: i32) -> (i32, i32, i32) {
    %c0_i32 = arith.constant 0 : i32
    %c0_i32_0 = arith.constant 0 : i32
    %c0_i32_1 = arith.constant 0 : i32
    return %arg0, %c0_i32, %c0_i32_0 : i32, i32, i32
  }
  func.func @transform_31(%arg0: i32) -> (i32, i32, i32) {
    %c0_i32 = arith.constant 0 : i32
    %c0_i32_0 = arith.constant 0 : i32
    %c0_i32_1 = arith.constant 0 : i32
    return %arg0, %c0_i32, %c0_i32_0 : i32, i32, i32
  }
  func.func @transform_32(%arg0: i32) -> (i32, i32) {
    %c0_i32 = arith.constant 0 : i32
    %c0_i32_0 = arith.constant 0 : i32
    %c0_i32_1 = arith.constant 0 : i32
    return %c0_i32, %c0_i32_0 : i32, i32
  }
  func.func @transform_33(%arg0: i32) -> (i32, i32) {
    %c0_i32 = arith.constant 0 : i32
    %c0_i32_0 = arith.constant 0 : i32
    %c0_i32_1 = arith.constant 0 : i32
    return %c0_i32, %c0_i32_0 : i32, i32
  }
  func.func @transform_34(%arg0: i32) -> (i32, i32) {
    %c0_i32 = arith.constant 0 : i32
    %c0_i32_0 = arith.constant 0 : i32
    %c0_i32_1 = arith.constant 0 : i32
    return %c0_i32, %c0_i32_0 : i32, i32
  }
  func.func @transform_35(%arg0: i32) -> (i32, i32) {
    %c0_i32 = arith.constant 0 : i32
    %c0_i32_0 = arith.constant 0 : i32
    %c0_i32_1 = arith.constant 0 : i32
    return %c0_i32, %c0_i32_0 : i32, i32
  }
  func.func @transform_36(%arg0: i32) -> (i32, i32) {
    %c0_i32 = arith.constant 0 : i32
    %c0_i32_0 = arith.constant 0 : i32
    %c0_i32_1 = arith.constant 0 : i32
    return %c0_i32, %c0_i32_0 : i32, i32
  }
}

</mosaic_0001>

<llo_original>
// kernel: _lambda_.1
$region0: #{_lambda_.1}
  #allocation0 [shape = 'u32[]', space=smem, size = 0x4, offset = 0x4, fixed_abs, tag = 'smem constant byte address 0x4 - core index']
  #allocation1 [shape = 'u32[72,128]{1,0:T(1,128)}', space=vmem, size = 0x9000, scoped, tag = 'internal scratch']
  #allocation2 [shape = 'f32[16,128]{1,0:T(8,128)}', space=vmem, size = 0x2000, scoped, tag = 'scratch operand']
  #allocation3 [shape = 'f32[32,128]{1,0:T(8,128)}', space=vmem, size = 0x4000, scoped, tag = 'scratch operand']
  #allocation4 [shape = 'bf16[32,32]{1,0:T(8,128)(2,1)}', space=vmem, size = 0x2000, scoped, tag = 'scratch operand']
  #allocation5 [shape = 'bf16[16,32]{1,0:T(8,128)(2,1)}', space=vmem, size = 0x1000, scoped, tag = 'scratch operand']
  %s0 = inlined_call_operand.smem [shape: u32[37], index: -1, kind: input, shape index: {}]
  %s1 = sld [smem:[%s0]]
  %s2 = scalar_lea.smem %s0, 1
  %s3 = sld [smem:[%s2]]
  %s4 = scalar_lea.smem %s0, 2
  %s5 = sld [smem:[%s4]]
  %s6 = scalar_lea.smem %s0, 3
  %s7 = sld [smem:[%s6]]
  %s8 = scalar_lea.smem %s0, 4
  %s9 = sld [smem:[%s8]]
  %s10 = scalar_lea.smem %s0, 5
  %s11 = sld [smem:[%s10]]
  %s12 = scalar_lea.smem %s0, 6
  %s13 = sld [smem:[%s12]]
  %s14 = scalar_lea.smem %s0, 7
  %s15 = sld [smem:[%s14]]
  %s16 = scalar_lea.smem %s0, 8
  %s17 = sld [smem:[%s16]]
  %s18 = scalar_lea.smem %s0, 9
  %s19 = sld [smem:[%s18]]
  %s20 = scalar_lea.smem %s0, 10
  %s21 = sld [smem:[%s20]]
  %s22 = scalar_lea.smem %s0, 11
  %s23 = sld [smem:[%s22]]
  %s24 = scalar_lea.smem %s0, 12
  %s25 = sld [smem:[%s24]]
  %s26 = scalar_lea.smem %s0, 13
  %s27 = sld [smem:[%s26]]
  %s28 = scalar_lea.smem %s0, 14
  %s29 = sld [smem:[%s28]]
  %s30 = scalar_lea.smem %s0, 15
  %s31 = sld [smem:[%s30]]
  %s32 = scalar_lea.smem %s0, 16
  %s33 = sld [smem:[%s32]]
  %s34 = scalar_lea.smem %s0, 17
  %s35 = sld [smem:[%s34]]
  %s36 = scalar_lea.smem %s0, 18
  %s37 = sld [smem:[%s36]]
  %s38 = scalar_lea.smem %s0, 19
  %s39 = sld [smem:[%s38]]
  %s40 = scalar_lea.smem %s0, 20
  %s41 = sld [smem:[%s40]]
  %s42 = scalar_lea.smem %s0, 21
  %s43 = sld [smem:[%s42]]
  %s44 = scalar_lea.smem %s0, 22
  %s45 = sld [smem:[%s44]]
  %s46 = scalar_lea.smem %s0, 23
  %s47 = sld [smem:[%s46]]
  %s48 = scalar_lea.smem %s0, 24
  %s49 = sld [smem:[%s48]]
  %s50 = scalar_lea.smem %s0, 25
  %s51 = sld [smem:[%s50]]
  %s52 = scalar_lea.smem %s0, 26
  %s53 = sld [smem:[%s52]]
  %s54 = scalar_lea.smem %s0, 27
  %s55 = sld [smem:[%s54]]
  %s56 = scalar_lea.smem %s0, 28
  %s57 = sld [smem:[%s56]]
  %s58 = scalar_lea.smem %s0, 29
  %s59 = sld [smem:[%s58]]
  %s60 = scalar_lea.smem %s0, 30
  %s61 = sld [smem:[%s60]]
  %s62 = scalar_lea.smem %s0, 31
  %s63 = sld [smem:[%s62]]
  %s64 = scalar_lea.smem %s0, 32
  %s65 = sld [smem:[%s64]]
  %s66 = scalar_lea.smem %s0, 33
  %s67 = sld [smem:[%s66]]
  %s68 = scalar_lea.smem %s0, 34
  %s69 = sld [smem:[%s68]]
  %s70 = scalar_lea.smem %s0, 35
  %s71 = sld [smem:[%s70]]
  %s72 = scalar_lea.smem %s0, 36
  %s73 = sld [smem:[%s72]]
  %s74 = sld [smem:[#allocation0]]
  $region221: #{_lambda_.1} parent=0
    _
  %s76 = ssub.s32 1, %s74
  %s77 = scalar_select 0, %s76, %s74
  $region1: #{_lambda_.1} parent=0
    #allocation6 [shape = 'u8[32768]{0}', space=vmem, size = 0x8000, scoped, tag = 'input window, operand 8, single buffered']
    #allocation7 [shape = 's32[2]{0}', space=sflag, size = 0x8, scoped, tag = 'scoped memory for _lambda_.1']
    #allocation8 [shape = 'u8[32768]{0}', space=vmem, size = 0x8000, scoped, tag = 'input window, operand 14, single buffered']
    #allocation9 [shape = 's32[1]{0}', space=sflag, size = 0x4, scoped, tag = 'scoped memory for _lambda_.1']
    #allocation10 [shape = 'u8[196608]{0}', space=vmem, size = 0x30000, scoped, tag = 'input window, operand 18']
    #allocation11 [shape = 'u8[65536]{0}', space=vmem, size = 0x10000, scoped, tag = 'input window, operand 20']
    #allocation12 [shape = 'u8[131072]{0}', space=vmem, size = 0x20000, scoped, tag = 'input window, operand 24']
    #allocation13 [shape = 'u8[65536]{0}', space=vmem, size = 0x10000, scoped, tag = 'input window, operand 26']
    #allocation14 [shape = 'u8[196608]{0}', space=vmem, size = 0x30000, scoped, tag = 'input window, operand 30']
    #allocation15 [shape = 'u8[65536]{0}', space=vmem, size = 0x10000, scoped, tag = 'input window, operand 31']
    #allocation16 [shape = 'u8[32768]{0}', space=vmem, size = 0x8000, scoped, tag = 'input window, operand 32, single buffered']
    %78 = vsyncpa [#allocation7], 0
    %79 = vsyncpa [#allocation9], 0
    loop: start=0, step=1, limit=4
    $region2: #{_lambda_.1} parent=1 // loop_pre_header
      _
    $region3: #{_lambda_.1} parent=1 // loop_header
      %s81 = sphi 0, %s85
      %p82 = scmp.ge.s32.totalorder %s81, 4
      %s89 = sphi 0, %s89
      %s91 = sphi 0, %s89
      %s92 = sphi 0, %s91
      %s106 = sphi 0, %s92
      %s110 = sphi 0, %s110
      %s112 = sphi 0, %s110
      %s113 = sphi 0, %s112
      %s127 = sphi 0, %s113
      %s131 = sphi 0, %s131
      %s133 = sphi 0, %s131
      %s134 = sphi 0, %s133
      %s148 = sphi 0, %s134
      %s152 = sphi 0, %s152
      %s154 = sphi 0, %s152
      %s155 = sphi 0, %s154
      %s169 = sphi 0, %s155
      %s173 = sphi 0, %s173
      %s175 = sphi 0, %s173
      %s176 = sphi 0, %s175
      %s190 = sphi 0, %s176
      %s194 = sphi 0, %s194
      %s196 = sphi 0, %s194
      %s197 = sphi 0, %s196
      %s211 = sphi 0, %s197
      %s215 = sphi 0, %s215
      %s217 = sphi 0, %s215
      %s218 = sphi 0, %s217
      %s232 = sphi 0, %s218
      %s236 = sphi 0, %s236
      %s238 = sphi 0, %s236
      %s239 = sphi 0, %s238
      %s253 = sphi 0, %s239
      %s257 = sphi 0, %s257
      %s259 = sphi 0, %s257
      %s260 = sphi 0, %s259
      %s274 = sphi 0, %s260
      %s278 = sphi 0, %s278
      %s280 = sphi 0, %s278
      %s281 = sphi 0, %s280
      %s295 = sphi 0, %s281
      %s299 = sphi 0, %s299
      %s301 = sphi 0, %s299
      %s302 = sphi 0, %s301
      %s316 = sphi 0, %s302
      %s320 = sphi 0, %s320
      %s322 = sphi 0, %s320
      %s323 = sphi 0, %s322
      %s337 = sphi 0, %s323
      %s341 = sphi 0, %s341
      %s343 = sphi 0, %s341
      %s344 = sphi 0, %s343
      %s358 = sphi 0, %s344
      %s362 = sphi 0, %s362
      %s364 = sphi 0, %s362
      %s365 = sphi 0, %s364
      %s379 = sphi 0, %s365
      %s383 = sphi 0, %s383
      %s385 = sphi 0, %s383
      %s386 = sphi 0, %s385
      %s400 = sphi 0, %s386
      %s404 = sphi 0, %s404
      %s406 = sphi 0, %s404
      %s407 = sphi 0, %s406
      %s421 = sphi 0, %s407
      %s425 = sphi 0, %s425
      %s427 = sphi 0, %s425
      %s428 = sphi 0, %s427
      %s442 = sphi 0, %s428
      %s446 = sphi 0, %s446
      %s448 = sphi 0, %s446
      %s449 = sphi 0, %s448
      %s463 = sphi 0, %s449
      %s469 = sphi 0, %s471
      %s472 = sphi 0, %s469
      %s473 = sphi 0, %s472
      %s489 = sphi 0, %s473
      %s495 = sphi 0, %s497
      %s498 = sphi 0, %s495
      %s499 = sphi 0, %s498
      %s515 = sphi 0, %s499
      %s521 = sphi 0, %s523
      %s524 = sphi 0, %s521
      %s525 = sphi 0, %s524
      %s541 = sphi 0, %s525
      %s547 = sphi 0, %s549
      %s550 = sphi 0, %s547
      %s551 = sphi 0, %s550
      %s567 = sphi 0, %s551
      %s573 = sphi 0, %s575
      %s576 = sphi 0, %s573
      %s577 = sphi 0, %s576
      %s593 = sphi 0, %s577
      %s599 = sphi 0, %s601
      %s602 = sphi 0, %s599
      %s603 = sphi 0, %s602
      %s619 = sphi 0, %s603
      %s625 = sphi 0, %s627
      %s628 = sphi 0, %s625
      %s629 = sphi 0, %s628
      %s645 = sphi 0, %s629
      %s651 = sphi 0, %s653
      %s654 = sphi 0, %s651
      %s655 = sphi 0, %s654
      %s671 = sphi 0, %s655
      %s677 = sphi 0, %s679
      %s680 = sphi 0, %s677
      %s681 = sphi 0, %s680
      %s697 = sphi 0, %s681
      %s703 = sphi 0, %s705
      %s706 = sphi 0, %s703
      %s707 = sphi 0, %s706
      %s723 = sphi 0, %s707
      %s729 = sphi 0, %s731
      %s732 = sphi 0, %s729
      %s733 = sphi 0, %s732
      %s749 = sphi 0, %s733
      %s755 = sphi 0, %s757
      %s758 = sphi 0, %s755
      %s759 = sphi 0, %s758
      %s775 = sphi 0, %s759
      %s781 = sphi 0, %s783
      %s784 = sphi 0, %s781
      %s785 = sphi 0, %s784
      %s801 = sphi 0, %s785
      %s807 = sphi 0, %s809
      %s810 = sphi 0, %s807
      %s811 = sphi 0, %s810
      %s827 = sphi 0, %s811
      %s831 = sphi 0, %s831
      %s833 = sphi 0, %s831
      %s834 = sphi 0, %s833
      %s848 = sphi 0, %s834
      %s852 = sphi 0, %s852
      %s854 = sphi 0, %s852
      %s855 = sphi 0, %s854
      %s869 = sphi 0, %s855
      %s873 = sphi 0, %s873
      %s875 = sphi 0, %s873
      %s876 = sphi 0, %s875
      %s890 = sphi 0, %s876
      %s894 = sphi 0, %s894
      %s896 = sphi 0, %s894
      %s897 = sphi 0, %s896
      %s911 = sphi 0, %s897
      %s915 = sphi 0, %s915
      %s917 = sphi 0, %s915
      %s918 = sphi 0, %s917
      %s932 = sphi 0, %s918
    $region4: #{_lambda_.1} parent=1 // loop_header_branch
      %84 = sbr.rel (%p82) target = $region8
    $region5: #{_lambda_.1} parent=1 // loop_body
      %s86 = ssub.s32 %s81, 1
      %s87 = ssub.s32 %s81, 2
      %s88 = sadd.s32 %s81, 1
      %s90 = sadd.s32 %s89, 1
      %p93 = scmp.eq.s32.totalorder %s81, 1
      %p94 = scmp.ne.s32.totalorder %s89, %s91
      %p95 = scmp.eq.s32.totalorder %s81, 0
      %p96 = por %p94, %p95
      %p97 = scmp.ne.s32.totalorder %s89, %s91
      %p98 = scmp.eq.s32.totalorder %s86, 1
      %p99 = por %p97, %p98
      %p100 = scmp.ne.s32.totalorder %s91, %s92
      %p101 = scmp.eq.s32.totalorder %s86, 0
      %p102 = por %p100, %p101
      %p103 = scmp.ne.s32.totalorder %s91, %s92
      %p104 = scmp.eq.s32.totalorder %s87, 1
      %p105 = por %p103, %p104
      %p107 = scmp.ne.s32.totalorder %s92, %s106
      %p108 = scmp.eq.s32.totalorder %s87, 0
      %p109 = por %p107, %p108
      %s111 = sadd.s32 %s110, 1
      %p114 = scmp.eq.s32.totalorder %s81, 1
      %p115 = scmp.ne.s32.totalorder %s110, %s112
      %p116 = scmp.eq.s32.totalorder %s81, 0
      %p117 = por %p115, %p116
      %p118 = scmp.ne.s32.totalorder %s110, %s112
      %p119 = scmp.eq.s32.totalorder %s86, 1
      %p120 = por %p118, %p119
      %p121 = scmp.ne.s32.totalorder %s112, %s113
      %p122 = scmp.eq.s32.totalorder %s86, 0
      %p123 = por %p121, %p122
      %p124 = scmp.ne.s32.totalorder %s112, %s113
      %p125 = scmp.eq.s32.totalorder %s87, 1
      %p126 = por %p124, %p125
      %p128 = scmp.ne.s32.totalorder %s113, %s127
      %p129 = scmp.eq.s32.totalorder %s87, 0
      %p130 = por %p128, %p129
      %s132 = sadd.s32 %s131, 1
      %p135 = scmp.eq.s32.totalorder %s81, 1
      %p136 = scmp.ne.s32.totalorder %s131, %s133
      %p137 = scmp.eq.s32.totalorder %s81, 0
      %p138 = por %p136, %p137
      %p139 = scmp.ne.s32.totalorder %s131, %s133
      %p140 = scmp.eq.s32.totalorder %s86, 1
      %p141 = por %p139, %p140
      %p142 = scmp.ne.s32.totalorder %s133, %s134
      %p143 = scmp.eq.s32.totalorder %s86, 0
      %p144 = por %p142, %p143
      %p145 = scmp.ne.s32.totalorder %s133, %s134
      %p146 = scmp.eq.s32.totalorder %s87, 1
      %p147 = por %p145, %p146
      %p149 = scmp.ne.s32.totalorder %s134, %s148
      %p150 = scmp.eq.s32.totalorder %s87, 0
      %p151 = por %p149, %p150
      %s153 = sadd.s32 %s152, 1
      %p156 = scmp.eq.s32.totalorder %s81, 1
      %p157 = scmp.ne.s32.totalorder %s152, %s154
      %p158 = scmp.eq.s32.totalorder %s81, 0
      %p159 = por %p157, %p158
      %p160 = scmp.ne.s32.totalorder %s152, %s154
      %p161 = scmp.eq.s32.totalorder %s86, 1
      %p162 = por %p160, %p161
      %p163 = scmp.ne.s32.totalorder %s154, %s155
      %p164 = scmp.eq.s32.totalorder %s86, 0
      %p165 = por %p163, %p164
      %p166 = scmp.ne.s32.totalorder %s154, %s155
      %p167 = scmp.eq.s32.totalorder %s87, 1
      %p168 = por %p166, %p167
      %p170 = scmp.ne.s32.totalorder %s155, %s169
      %p171 = scmp.eq.s32.totalorder %s87, 0
      %p172 = por %p170, %p171
      %s174 = sadd.s32 %s173, 1
      %p177 = scmp.eq.s32.totalorder %s81, 1
      %p178 = scmp.ne.s32.totalorder %s173, %s175
      %p179 = scmp.eq.s32.totalorder %s81, 0
      %p180 = por %p178, %p179
      %p181 = scmp.ne.s32.totalorder %s173, %s175
      %p182 = scmp.eq.s32.totalorder %s86, 1
      %p183 = por %p181, %p182
      %p184 = scmp.ne.s32.totalorder %s175, %s176
      %p185 = scmp.eq.s32.totalorder %s86, 0
      %p186 = por %p184, %p185
      %p187 = scmp.ne.s32.totalorder %s175, %s176
      %p188 = scmp.eq.s32.totalorder %s87, 1
      %p189 = por %p187, %p188
      %p191 = scmp.ne.s32.totalorder %s176, %s190
      %p192 = scmp.eq.s32.totalorder %s87, 0
      %p193 = por %p191, %p192
      %s195 = sadd.s32 %s194, 1
      %p198 = scmp.eq.s32.totalorder %s81, 1
      %p199 = scmp.ne.s32.totalorder %s194, %s196
      %p200 = scmp.eq.s32.totalorder %s81, 0
      %p201 = por %p199, %p200
      %p202 = scmp.ne.s32.totalorder %s194, %s196
      %p203 = scmp.eq.s32.totalorder %s86, 1
      %p204 = por %p202, %p203
      %p205 = scmp.ne.s32.totalorder %s196, %s197
      %p206 = scmp.eq.s32.totalorder %s86, 0
      %p207 = por %p205, %p206
      %p208 = scmp.ne.s32.totalorder %s196, %s197
      %p209 = scmp.eq.s32.totalorder %s87, 1
      %p210 = por %p208, %p209
      %p212 = scmp.ne.s32.totalorder %s197, %s211
      %p213 = scmp.eq.s32.totalorder %s87, 0
      %p214 = por %p212, %p213
      %s216 = sadd.s32 %s215, 1
      %p219 = scmp.eq.s32.totalorder %s81, 1
      %p220 = scmp.ne.s32.totalorder %s215, %s217
      %p221 = scmp.eq.s32.totalorder %s81, 0
      %p222 = por %p220, %p221
      %p223 = scmp.ne.s32.totalorder %s215, %s217
      %p224 = scmp.eq.s32.totalorder %s86, 1
      %p225 = por %p223, %p224
      %p226 = scmp.ne.s32.totalorder %s217, %s218
      %p227 = scmp.eq.s32.totalorder %s86, 0
      %p228 = por %p226, %p227
      %p229 = scmp.ne.s32.totalorder %s217, %s218
      %p230 = scmp.eq.s32.totalorder %s87, 1
      %p231 = por %p229, %p230
      %p233 = scmp.ne.s32.totalorder %s218, %s232
      %p234 = scmp.eq.s32.totalorder %s87, 0
      %p235 = por %p233, %p234
      %s237 = sadd.s32 %s236, 1
      %p240 = scmp.eq.s32.totalorder %s81, 1
      %p241 = scmp.ne.s32.totalorder %s236, %s238
      %p242 = scmp.eq.s32.totalorder %s81, 0
      %p243 = por %p241, %p242
      %p244 = scmp.ne.s32.totalorder %s236, %s238
      %p245 = scmp.eq.s32.totalorder %s86, 1
      %p246 = por %p244, %p245
      %p247 = scmp.ne.s32.totalorder %s238, %s239
      %p248 = scmp.eq.s32.totalorder %s86, 0
      %p249 = por %p247, %p248
      %p250 = scmp.ne.s32.totalorder %s238, %s239
      %p251 = scmp.eq.s32.totalorder %s87, 1
      %p252 = por %p250, %p251
      %p254 = scmp.ne.s32.totalorder %s239, %s253
      %p255 = scmp.eq.s32.totalorder %s87, 0
      %p256 = por %p254, %p255
      %s258 = sadd.s32 %s257, 1
      %p261 = scmp.eq.s32.totalorder %s81, 1
      %p262 = scmp.ne.s32.totalorder %s257, %s259
      %p263 = scmp.eq.s32.totalorder %s81, 0
      %p264 = por %p262, %p263
      %p265 = scmp.ne.s32.totalorder %s257, %s259
      %p266 = scmp.eq.s32.totalorder %s86, 1
      %p267 = por %p265, %p266
      %p268 = scmp.ne.s32.totalorder %s259, %s260
      %p269 = scmp.eq.s32.totalorder %s86, 0
      %p270 = por %p268, %p269
      %p271 = scmp.ne.s32.totalorder %s259, %s260
      %p272 = scmp.eq.s32.totalorder %s87, 1
      %p273 = por %p271, %p272
      %p275 = scmp.ne.s32.totalorder %s260, %s274
      %p276 = scmp.eq.s32.totalorder %s87, 0
      %p277 = por %p275, %p276
      %s279 = sadd.s32 %s278, 1
      %p282 = scmp.eq.s32.totalorder %s81, 1
      %p283 = scmp.ne.s32.totalorder %s278, %s280
      %p284 = scmp.eq.s32.totalorder %s81, 0
      %p285 = por %p283, %p284
      %p286 = scmp.ne.s32.totalorder %s278, %s280
      %p287 = scmp.eq.s32.totalorder %s86, 1
      %p288 = por %p286, %p287
      %p289 = scmp.ne.s32.totalorder %s280, %s281
      %p290 = scmp.eq.s32.totalorder %s86, 0
      %p291 = por %p289, %p290
      %p292 = scmp.ne.s32.totalorder %s280, %s281
      %p293 = scmp.eq.s32.totalorder %s87, 1
      %p294 = por %p292, %p293
      %p296 = scmp.ne.s32.totalorder %s281, %s295
      %p297 = scmp.eq.s32.totalorder %s87, 0
      %p298 = por %p296, %p297
      %s300 = sadd.s32 %s299, 1
      %p303 = scmp.eq.s32.totalorder %s81, 1
      %p304 = scmp.ne.s32.totalorder %s299, %s301
      %p305 = scmp.eq.s32.totalorder %s81, 0
      %p306 = por %p304, %p305
      %p307 = scmp.ne.s32.totalorder %s299, %s301
      %p308 = scmp.eq.s32.totalorder %s86, 1
      %p309 = por %p307, %p308
      %p310 = scmp.ne.s32.totalorder %s301, %s302
      %p311 = scmp.eq.s32.totalorder %s86, 0
      %p312 = por %p310, %p311
      %p313 = scmp.ne.s32.totalorder %s301, %s302
      %p314 = scmp.eq.s32.totalorder %s87, 1
      %p315 = por %p313, %p314
      %p317 = scmp.ne.s32.totalorder %s302, %s316
      %p318 = scmp.eq.s32.totalorder %s87, 0
      %p319 = por %p317, %p318
      %s321 = sadd.s32 %s320, 1
      %p324 = scmp.eq.s32.totalorder %s81, 1
      %p325 = scmp.ne.s32.totalorder %s320, %s322
      %p326 = scmp.eq.s32.totalorder %s81, 0
      %p327 = por %p325, %p326
      %p328 = scmp.ne.s32.totalorder %s320, %s322
      %p329 = scmp.eq.s32.totalorder %s86, 1
      %p330 = por %p328, %p329
      %p331 = scmp.ne.s32.totalorder %s322, %s323
      %p332 = scmp.eq.s32.totalorder %s86, 0
      %p333 = por %p331, %p332
      %p334 = scmp.ne.s32.totalorder %s322, %s323
      %p335 = scmp.eq.s32.totalorder %s87, 1
      %p336 = por %p334, %p335
      %p338 = scmp.ne.s32.totalorder %s323, %s337
      %p339 = scmp.eq.s32.totalorder %s87, 0
      %p340 = por %p338, %p339
      %s342 = sadd.s32 %s341, 1
      %p345 = scmp.eq.s32.totalorder %s81, 1
      %p346 = scmp.ne.s32.totalorder %s341, %s343
      %p347 = scmp.eq.s32.totalorder %s81, 0
      %p348 = por %p346, %p347
      %p349 = scmp.ne.s32.totalorder %s341, %s343
      %p350 = scmp.eq.s32.totalorder %s86, 1
      %p351 = por %p349, %p350
      %p352 = scmp.ne.s32.totalorder %s343, %s344
      %p353 = scmp.eq.s32.totalorder %s86, 0
      %p354 = por %p352, %p353
      %p355 = scmp.ne.s32.totalorder %s343, %s344
      %p356 = scmp.eq.s32.totalorder %s87, 1
      %p357 = por %p355, %p356
      %p359 = scmp.ne.s32.totalorder %s344, %s358
      %p360 = scmp.eq.s32.totalorder %s87, 0
      %p361 = por %p359, %p360
      %s363 = sadd.s32 %s362, 1
      %p366 = scmp.eq.s32.totalorder %s81, 1
      %p367 = scmp.ne.s32.totalorder %s362, %s364
      %p368 = scmp.eq.s32.totalorder %s81, 0
      %p369 = por %p367, %p368
      %p370 = scmp.ne.s32.totalorder %s362, %s364
      %p371 = scmp.eq.s32.totalorder %s86, 1
      %p372 = por %p370, %p371
      %p373 = scmp.ne.s32.totalorder %s364, %s365
      %p374 = scmp.eq.s32.totalorder %s86, 0
      %p375 = por %p373, %p374
      %p376 = scmp.ne.s32.totalorder %s364, %s365
      %p377 = scmp.eq.s32.totalorder %s87, 1
      %p378 = por %p376, %p377
      %p380 = scmp.ne.s32.totalorder %s365, %s379
      %p381 = scmp.eq.s32.totalorder %s87, 0
      %p382 = por %p380, %p381
      %s384 = sadd.s32 %s383, 1
      %p387 = scmp.eq.s32.totalorder %s81, 1
      %p388 = scmp.ne.s32.totalorder %s383, %s385
      %p389 = scmp.eq.s32.totalorder %s81, 0
      %p390 = por %p388, %p389
      %p391 = scmp.ne.s32.totalorder %s383, %s385
      %p392 = scmp.eq.s32.totalorder %s86, 1
      %p393 = por %p391, %p392
      %p394 = scmp.ne.s32.totalorder %s385, %s386
      %p395 = scmp.eq.s32.totalorder %s86, 0
      %p396 = por %p394, %p395
      %p397 = scmp.ne.s32.totalorder %s385, %s386
      %p398 = scmp.eq.s32.totalorder %s87, 1
      %p399 = por %p397, %p398
      %p401 = scmp.ne.s32.totalorder %s386, %s400
      %p402 = scmp.eq.s32.totalorder %s87, 0
      %p403 = por %p401, %p402
      %s405 = sadd.s32 %s404, 1
      %p408 = scmp.eq.s32.totalorder %s81, 1
      %p409 = scmp.ne.s32.totalorder %s404, %s406
      %p410 = scmp.eq.s32.totalorder %s81, 0
      %p411 = por %p409, %p410
      %p412 = scmp.ne.s32.totalorder %s404, %s406
      %p413 = scmp.eq.s32.totalorder %s86, 1
      %p414 = por %p412, %p413
      %p415 = scmp.ne.s32.totalorder %s406, %s407
      %p416 = scmp.eq.s32.totalorder %s86, 0
      %p417 = por %p415, %p416
      %p418 = scmp.ne.s32.totalorder %s406, %s407
      %p419 = scmp.eq.s32.totalorder %s87, 1
      %p420 = por %p418, %p419
      %p422 = scmp.ne.s32.totalorder %s407, %s421
      %p423 = scmp.eq.s32.totalorder %s87, 0
      %p424 = por %p422, %p423
      %s426 = sadd.s32 %s425, 1
      %p429 = scmp.eq.s32.totalorder %s81, 1
      %p430 = scmp.ne.s32.totalorder %s425, %s427
      %p431 = scmp.eq.s32.totalorder %s81, 0
      %p432 = por %p430, %p431
      %p433 = scmp.ne.s32.totalorder %s425, %s427
      %p434 = scmp.eq.s32.totalorder %s86, 1
      %p435 = por %p433, %p434
      %p436 = scmp.ne.s32.totalorder %s427, %s428
      %p437 = scmp.eq.s32.totalorder %s86, 0
      %p438 = por %p436, %p437
      %p439 = scmp.ne.s32.totalorder %s427, %s428
      %p440 = scmp.eq.s32.totalorder %s87, 1
      %p441 = por %p439, %p440
      %p443 = scmp.ne.s32.totalorder %s428, %s442
      %p444 = scmp.eq.s32.totalorder %s87, 0
      %p445 = por %p443, %p444
      %s447 = sadd.s32 %s446, 1
      %p450 = scmp.eq.s32.totalorder %s81, 1
      %p451 = scmp.ne.s32.totalorder %s446, %s448
      %p452 = scmp.eq.s32.totalorder %s81, 0
      %p453 = por %p451, %p452
      %p454 = scmp.ne.s32.totalorder %s446, %s448
      %p455 = scmp.eq.s32.totalorder %s86, 1
      %p456 = por %p454, %p455
      %p457 = scmp.ne.s32.totalorder %s448, %s449
      %p458 = scmp.eq.s32.totalorder %s86, 0
      %p459 = por %p457, %p458
      %p460 = scmp.ne.s32.totalorder %s448, %s449
      %p461 = scmp.eq.s32.totalorder %s87, 1
      %p462 = por %p460, %p461
      %p464 = scmp.ne.s32.totalorder %s449, %s463
      %p465 = scmp.eq.s32.totalorder %s87, 0
      %p466 = por %p464, %p465
      %s467 = ssub.s32 %s81, %s88
      %p468 = scmp.eq.s32.totalorder %s467, 0
      %s470 = sadd.s32 %s469, 1
      %s471 = scalar_select %p468, %s469, %s470
      %p474 = pneg %p468
      %p475 = scmp.eq.s32.totalorder %s81, 1
      %p476 = por %p474, %p475
      %p477 = scmp.ne.s32.totalorder %s469, %s472
      %p478 = scmp.eq.s32.totalorder %s81, 0
      %p479 = por %p477, %p478
      %p480 = scmp.ne.s32.totalorder %s469, %s472
      %p481 = scmp.eq.s32.totalorder %s86, 1
      %p482 = por %p480, %p481
      %p483 = scmp.ne.s32.totalorder %s472, %s473
      %p484 = scmp.eq.s32.totalorder %s86, 0
      %p485 = por %p483, %p484
      %p486 = scmp.ne.s32.totalorder %s472, %s473
      %p487 = scmp.eq.s32.totalorder %s87, 1
      %p488 = por %p486, %p487
      %p490 = scmp.ne.s32.totalorder %s473, %s489
      %p491 = scmp.eq.s32.totalorder %s87, 0
      %p492 = por %p490, %p491
      %s493 = ssub.s32 %s81, %s88
      %p494 = scmp.eq.s32.totalorder %s493, 0
      %s496 = sadd.s32 %s495, 1
      %s497 = scalar_select %p494, %s495, %s496
      %p500 = pneg %p494
      %p501 = scmp.eq.s32.totalorder %s81, 1
      %p502 = por %p500, %p501
      %p503 = scmp.ne.s32.totalorder %s495, %s498
      %p504 = scmp.eq.s32.totalorder %s81, 0
      %p505 = por %p503, %p504
      %p506 = scmp.ne.s32.totalorder %s495, %s498
      %p507 = scmp.eq.s32.totalorder %s86, 1
      %p508 = por %p506, %p507
      %p509 = scmp.ne.s32.totalorder %s498, %s499
      %p510 = scmp.eq.s32.totalorder %s86, 0
      %p511 = por %p509, %p510
      %p512 = scmp.ne.s32.totalorder %s498, %s499
      %p513 = scmp.eq.s32.totalorder %s87, 1
      %p514 = por %p512, %p513
      %p516 = scmp.ne.s32.totalorder %s499, %s515
      %p517 = scmp.eq.s32.totalorder %s87, 0
      %p518 = por %p516, %p517
      %s519 = ssub.s32 %s81, %s88
      %p520 = scmp.eq.s32.totalorder %s519, 0
      %s522 = sadd.s32 %s521, 1
      %s523 = scalar_select %p520, %s521, %s522
      %p526 = pneg %p520
      %p527 = scmp.eq.s32.totalorder %s81, 1
      %p528 = por %p526, %p527
      %p529 = scmp.ne.s32.totalorder %s521, %s524
      %p530 = scmp.eq.s32.totalorder %s81, 0
      %p531 = por %p529, %p530
      %p532 = scmp.ne.s32.totalorder %s521, %s524
      %p533 = scmp.eq.s32.totalorder %s86, 1
      %p534 = por %p532, %p533
      %p535 = scmp.ne.s32.totalorder %s524, %s525
      %p536 = scmp.eq.s32.totalorder %s86, 0
      %p537 = por %p535, %p536
      %p538 = scmp.ne.s32.totalorder %s524, %s525
      %p539 = scmp.eq.s32.totalorder %s87, 1
      %p540 = por %p538, %p539
      %p542 = scmp.ne.s32.totalorder %s525, %s541
      %p543 = scmp.eq.s32.totalorder %s87, 0
      %p544 = por %p542, %p543
      %s545 = ssub.s32 %s81, %s88
      %p546 = scmp.eq.s32.totalorder %s545, 0
      %s548 = sadd.s32 %s547, 1
      %s549 = scalar_select %p546, %s547, %s548
      %p552 = pneg %p546
      %p553 = scmp.eq.s32.totalorder %s81, 1
      %p554 = por %p552, %p553
      %p555 = scmp.ne.s32.totalorder %s547, %s550
      %p556 = scmp.eq.s32.totalorder %s81, 0
      %p557 = por %p555, %p556
      %p558 = scmp.ne.s32.totalorder %s547, %s550
      %p559 = scmp.eq.s32.totalorder %s86, 1
      %p560 = por %p558, %p559
      %p561 = scmp.ne.s32.totalorder %s550, %s551
      %p562 = scmp.eq.s32.totalorder %s86, 0
      %p563 = por %p561, %p562
      %p564 = scmp.ne.s32.totalorder %s550, %s551
      %p565 = scmp.eq.s32.totalorder %s87, 1
      %p566 = por %p564, %p565
      %p568 = scmp.ne.s32.totalorder %s551, %s567
      %p569 = scmp.eq.s32.totalorder %s87, 0
      %p570 = por %p568, %p569
      %s571 = ssub.s32 %s81, %s88
      %p572 = scmp.eq.s32.totalorder %s571, 0
      %s574 = sadd.s32 %s573, 1
      %s575 = scalar_select %p572, %s573, %s574
      %p578 = pneg %p572
      %p579 = scmp.eq.s32.totalorder %s81, 1
      %p580 = por %p578, %p579
      %p581 = scmp.ne.s32.totalorder %s573, %s576
      %p582 = scmp.eq.s32.totalorder %s81, 0
      %p583 = por %p581, %p582
      %p584 = scmp.ne.s32.totalorder %s573, %s576
      %p585 = scmp.eq.s32.totalorder %s86, 1
      %p586 = por %p584, %p585
      %p587 = scmp.ne.s32.totalorder %s576, %s577
      %p588 = scmp.eq.s32.totalorder %s86, 0
      %p589 = por %p587, %p588
      %p590 = scmp.ne.s32.totalorder %s576, %s577
      %p591 = scmp.eq.s32.totalorder %s87, 1
      %p592 = por %p590, %p591
      %p594 = scmp.ne.s32.totalorder %s577, %s593
      %p595 = scmp.eq.s32.totalorder %s87, 0
      %p596 = por %p594, %p595
      %s597 = ssub.s32 %s81, %s88
      %p598 = scmp.eq.s32.totalorder %s597, 0
      %s600 = sadd.s32 %s599, 1
      %s601 = scalar_select %p598, %s599, %s600
      %p604 = pneg %p598
      %p605 = scmp.eq.s32.totalorder %s81, 1
      %p606 = por %p604, %p605
      %p607 = scmp.ne.s32.totalorder %s599, %s602
      %p608 = scmp.eq.s32.totalorder %s81, 0
      %p609 = por %p607, %p608
      %p610 = scmp.ne.s32.totalorder %s599, %s602
      %p611 = scmp.eq.s32.totalorder %s86, 1
      %p612 = por %p610, %p611
      %p613 = scmp.ne.s32.totalorder %s602, %s603
      %p614 = scmp.eq.s32.totalorder %s86, 0
      %p615 = por %p613, %p614
      %p616 = scmp.ne.s32.totalorder %s602, %s603
      %p617 = scmp.eq.s32.totalorder %s87, 1
      %p618 = por %p616, %p617
      %p620 = scmp.ne.s32.totalorder %s603, %s619
      %p621 = scmp.eq.s32.totalorder %s87, 0
      %p622 = por %p620, %p621
      %s623 = ssub.s32 %s81, %s88
      %p624 = scmp.eq.s32.totalorder %s623, 0
      %s626 = sadd.s32 %s625, 1
      %s627 = scalar_select %p624, %s625, %s626
      %p630 = pneg %p624
      %p631 = scmp.eq.s32.totalorder %s81, 1
      %p632 = por %p630, %p631
      %p633 = scmp.ne.s32.totalorder %s625, %s628
      %p634 = scmp.eq.s32.totalorder %s81, 0
      %p635 = por %p633, %p634
      %p636 = scmp.ne.s32.totalorder %s625, %s628
      %p637 = scmp.eq.s32.totalorder %s86, 1
      %p638 = por %p636, %p637
      %p639 = scmp.ne.s32.totalorder %s628, %s629
      %p640 = scmp.eq.s32.totalorder %s86, 0
      %p641 = por %p639, %p640
      %p642 = scmp.ne.s32.totalorder %s628, %s629
      %p643 = scmp.eq.s32.totalorder %s87, 1
      %p644 = por %p642, %p643
      %p646 = scmp.ne.s32.totalorder %s629, %s645
      %p647 = scmp.eq.s32.totalorder %s87, 0
      %p648 = por %p646, %p647
      %s649 = ssub.s32 %s81, %s88
      %p650 = scmp.eq.s32.totalorder %s649, 0
      %s652 = sadd.s32 %s651, 1
      %s653 = scalar_select %p650, %s651, %s652
      %p656 = pneg %p650
      %p657 = scmp.eq.s32.totalorder %s81, 1
      %p658 = por %p656, %p657
      %p659 = scmp.ne.s32.totalorder %s651, %s654
      %p660 = scmp.eq.s32.totalorder %s81, 0
      %p661 = por %p659, %p660
      %p662 = scmp.ne.s32.totalorder %s651, %s654
      %p663 = scmp.eq.s32.totalorder %s86, 1
      %p664 = por %p662, %p663
      %p665 = scmp.ne.s32.totalorder %s654, %s655
      %p666 = scmp.eq.s32.totalorder %s86, 0
      %p667 = por %p665, %p666
      %p668 = scmp.ne.s32.totalorder %s654, %s655
      %p669 = scmp.eq.s32.totalorder %s87, 1
      %p670 = por %p668, %p669
      %p672 = scmp.ne.s32.totalorder %s655, %s671
      %p673 = scmp.eq.s32.totalorder %s87, 0
      %p674 = por %p672, %p673
      %s675 = ssub.s32 %s81, %s88
      %p676 = scmp.eq.s32.totalorder %s675, 0
      %s678 = sadd.s32 %s677, 1
      %s679 = scalar_select %p676, %s677, %s678
      %p682 = pneg %p676
      %p683 = scmp.eq.s32.totalorder %s81, 1
      %p684 = por %p682, %p683
      %p685 = scmp.ne.s32.totalorder %s677, %s680
      %p686 = scmp.eq.s32.totalorder %s81, 0
      %p687 = por %p685, %p686
      %p688 = scmp.ne.s32.totalorder %s677, %s680
      %p689 = scmp.eq.s32.totalorder %s86, 1
      %p690 = por %p688, %p689
      %p691 = scmp.ne.s32.totalorder %s680, %s681
      %p692 = scmp.eq.s32.totalorder %s86, 0
      %p693 = por %p691, %p692
      %p694 = scmp.ne.s32.totalorder %s680, %s681
      %p695 = scmp.eq.s32.totalorder %s87, 1
      %p696 = por %p694, %p695
      %p698 = scmp.ne.s32.totalorder %s681, %s697
      %p699 = scmp.eq.s32.totalorder %s87, 0
      %p700 = por %p698, %p699
      %s701 = ssub.s32 %s81, %s88
      %p702 = scmp.eq.s32.totalorder %s701, 0
      %s704 = sadd.s32 %s703, 1
      %s705 = scalar_select %p702, %s703, %s704
      %p708 = pneg %p702
      %p709 = scmp.eq.s32.totalorder %s81, 1
      %p710 = por %p708, %p709
      %p711 = scmp.ne.s32.totalorder %s703, %s706
      %p712 = scmp.eq.s32.totalorder %s81, 0
      %p713 = por %p711, %p712
      %p714 = scmp.ne.s32.totalorder %s703, %s706
      %p715 = scmp.eq.s32.totalorder %s86, 1
      %p716 = por %p714, %p715
      %p717 = scmp.ne.s32.totalorder %s706, %s707
      %p718 = scmp.eq.s32.totalorder %s86, 0
      %p719 = por %p717, %p718
      %p720 = scmp.ne.s32.totalorder %s706, %s707
      %p721 = scmp.eq.s32.totalorder %s87, 1
      %p722 = por %p720, %p721
      %p724 = scmp.ne.s32.totalorder %s707, %s723
      %p725 = scmp.eq.s32.totalorder %s87, 0
      %p726 = por %p724, %p725
      %s727 = ssub.s32 %s81, %s88
      %p728 = scmp.eq.s32.totalorder %s727, 0
      %s730 = sadd.s32 %s729, 1
      %s731 = scalar_select %p728, %s729, %s730
      %p734 = pneg %p728
      %p735 = scmp.eq.s32.totalorder %s81, 1
      %p736 = por %p734, %p735
      %p737 = scmp.ne.s32.totalorder %s729, %s732
      %p738 = scmp.eq.s32.totalorder %s81, 0
      %p739 = por %p737, %p738
      %p740 = scmp.ne.s32.totalorder %s729, %s732
      %p741 = scmp.eq.s32.totalorder %s86, 1
      %p742 = por %p740, %p741
      %p743 = scmp.ne.s32.totalorder %s732, %s733
      %p744 = scmp.eq.s32.totalorder %s86, 0
      %p745 = por %p743, %p744
      %p746 = scmp.ne.s32.totalorder %s732, %s733
      %p747 = scmp.eq.s32.totalorder %s87, 1
      %p748 = por %p746, %p747
      %p750 = scmp.ne.s32.totalorder %s733, %s749
      %p751 = scmp.eq.s32.totalorder %s87, 0
      %p752 = por %p750, %p751
      %s753 = ssub.s32 %s81, %s88
      %p754 = scmp.eq.s32.totalorder %s753, 0
      %s756 = sadd.s32 %s755, 1
      %s757 = scalar_select %p754, %s755, %s756
      %p760 = pneg %p754
      %p761 = scmp.eq.s32.totalorder %s81, 1
      %p762 = por %p760, %p761
      %p763 = scmp.ne.s32.totalorder %s755, %s758
      %p764 = scmp.eq.s32.totalorder %s81, 0
      %p765 = por %p763, %p764
      %p766 = scmp.ne.s32.totalorder %s755, %s758
      %p767 = scmp.eq.s32.totalorder %s86, 1
      %p768 = por %p766, %p767
      %p769 = scmp.ne.s32.totalorder %s758, %s759
      %p770 = scmp.eq.s32.totalorder %s86, 0
      %p771 = por %p769, %p770
      %p772 = scmp.ne.s32.totalorder %s758, %s759
      %p773 = scmp.eq.s32.totalorder %s87, 1
      %p774 = por %p772, %p773
      %p776 = scmp.ne.s32.totalorder %s759, %s775
      %p777 = scmp.eq.s32.totalorder %s87, 0
      %p778 = por %p776, %p777
      %s779 = ssub.s32 %s81, %s88
      %p780 = scmp.eq.s32.totalorder %s779, 0
      %s782 = sadd.s32 %s781, 1
      %s783 = scalar_select %p780, %s781, %s782
      %p786 = pneg %p780
      %p787 = scmp.eq.s32.totalorder %s81, 1
      %p788 = por %p786, %p787
      %p789 = scmp.ne.s32.totalorder %s781, %s784
      %p790 = scmp.eq.s32.totalorder %s81, 0
      %p791 = por %p789, %p790
      %p792 = scmp.ne.s32.totalorder %s781, %s784
      %p793 = scmp.eq.s32.totalorder %s86, 1
      %p794 = por %p792, %p793
      %p795 = scmp.ne.s32.totalorder %s784, %s785
      %p796 = scmp.eq.s32.totalorder %s86, 0
      %p797 = por %p795, %p796
      %p798 = scmp.ne.s32.totalorder %s784, %s785
      %p799 = scmp.eq.s32.totalorder %s87, 1
      %p800 = por %p798, %p799
      %p802 = scmp.ne.s32.totalorder %s785, %s801
      %p803 = scmp.eq.s32.totalorder %s87, 0
      %p804 = por %p802, %p803
      %s805 = ssub.s32 %s81, %s88
      %p806 = scmp.eq.s32.totalorder %s805, 0
      %s808 = sadd.s32 %s807, 1
      %s809 = scalar_select %p806, %s807, %s808
      %p812 = pneg %p806
      %p813 = scmp.eq.s32.totalorder %s81, 1
      %p814 = por %p812, %p813
      %p815 = scmp.ne.s32.totalorder %s807, %s810
      %p816 = scmp.eq.s32.totalorder %s81, 0
      %p817 = por %p815, %p816
      %p818 = scmp.ne.s32.totalorder %s807, %s810
      %p819 = scmp.eq.s32.totalorder %s86, 1
      %p820 = por %p818, %p819
      %p821 = scmp.ne.s32.totalorder %s810, %s811
      %p822 = scmp.eq.s32.totalorder %s86, 0
      %p823 = por %p821, %p822
      %p824 = scmp.ne.s32.totalorder %s810, %s811
      %p825 = scmp.eq.s32.totalorder %s87, 1
      %p826 = por %p824, %p825
      %p828 = scmp.ne.s32.totalorder %s811, %s827
      %p829 = scmp.eq.s32.totalorder %s87, 0
      %p830 = por %p828, %p829
      %s832 = sadd.s32 %s831, 1
      %p835 = scmp.eq.s32.totalorder %s81, 1
      %p836 = scmp.ne.s32.totalorder %s831, %s833
      %p837 = scmp.eq.s32.totalorder %s81, 0
      %p838 = por %p836, %p837
      %p839 = scmp.ne.s32.totalorder %s831, %s833
      %p840 = scmp.eq.s32.totalorder %s86, 1
      %p841 = por %p839, %p840
      %p842 = scmp.ne.s32.totalorder %s833, %s834
      %p843 = scmp.eq.s32.totalorder %s86, 0
      %p844 = por %p842, %p843
      %p845 = scmp.ne.s32.totalorder %s833, %s834
      %p846 = scmp.eq.s32.totalorder %s87, 1
      %p847 = por %p845, %p846
      %p849 = scmp.ne.s32.totalorder %s834, %s848
      %p850 = scmp.eq.s32.totalorder %s87, 0
      %p851 = por %p849, %p850
      %s853 = sadd.s32 %s852, 1
      %p856 = scmp.eq.s32.totalorder %s81, 1
      %p857 = scmp.ne.s32.totalorder %s852, %s854
      %p858 = scmp.eq.s32.totalorder %s81, 0
      %p859 = por %p857, %p858
      %p860 = scmp.ne.s32.totalorder %s852, %s854
      %p861 = scmp.eq.s32.totalorder %s86, 1
      %p862 = por %p860, %p861
      %p863 = scmp.ne.s32.totalorder %s854, %s855
      %p864 = scmp.eq.s32.totalorder %s86, 0
      %p865 = por %p863, %p864
      %p866 = scmp.ne.s32.totalorder %s854, %s855
      %p867 = scmp.eq.s32.totalorder %s87, 1
      %p868 = por %p866, %p867
      %p870 = scmp.ne.s32.totalorder %s855, %s869
      %p871 = scmp.eq.s32.totalorder %s87, 0
      %p872 = por %p870, %p871
      %s874 = sadd.s32 %s873, 1
      %p877 = scmp.eq.s32.totalorder %s81, 1
      %p878 = scmp.ne.s32.totalorder %s873, %s875
      %p879 = scmp.eq.s32.totalorder %s81, 0
      %p880 = por %p878, %p879
      %p881 = scmp.ne.s32.totalorder %s873, %s875
      %p882 = scmp.eq.s32.totalorder %s86, 1
      %p883 = por %p881, %p882
      %p884 = scmp.ne.s32.totalorder %s875, %s876
      %p885 = scmp.eq.s32.totalorder %s86, 0
      %p886 = por %p884, %p885
      %p887 = scmp.ne.s32.totalorder %s875, %s876
      %p888 = scmp.eq.s32.totalorder %s87, 1
      %p889 = por %p887, %p888
      %p891 = scmp.ne.s32.totalorder %s876, %s890
      %p892 = scmp.eq.s32.totalorder %s87, 0
      %p893 = por %p891, %p892
      %s895 = sadd.s32 %s894, 1
      %p898 = scmp.eq.s32.totalorder %s81, 1
      %p899 = scmp.ne.s32.totalorder %s894, %s896
      %p900 = scmp.eq.s32.totalorder %s81, 0
      %p901 = por %p899, %p900
      %p902 = scmp.ne.s32.totalorder %s894, %s896
      %p903 = scmp.eq.s32.totalorder %s86, 1
      %p904 = por %p902, %p903
      %p905 = scmp.ne.s32.totalorder %s896, %s897
      %p906 = scmp.eq.s32.totalorder %s86, 0
      %p907 = por %p905, %p906
      %p908 = scmp.ne.s32.totalorder %s896, %s897
      %p909 = scmp.eq.s32.totalorder %s87, 1
      %p910 = por %p908, %p909
      %p912 = scmp.ne.s32.totalorder %s897, %s911
      %p913 = scmp.eq.s32.totalorder %s87, 0
      %p914 = por %p912, %p913
      %s916 = sadd.s32 %s915, 1
      %p919 = scmp.eq.s32.totalorder %s81, 1
      %p920 = scmp.ne.s32.totalorder %s915, %s917
      %p921 = scmp.eq.s32.totalorder %s81, 0
      %p922 = por %p920, %p921
      %p923 = scmp.ne.s32.totalorder %s915, %s917
      %p924 = scmp.eq.s32.totalorder %s86, 1
      %p925 = por %p923, %p924
      %p926 = scmp.ne.s32.totalorder %s917, %s918
      %p927 = scmp.eq.s32.totalorder %s86, 0
      %p928 = por %p926, %p927
      %p929 = scmp.ne.s32.totalorder %s917, %s918
      %p930 = scmp.eq.s32.totalorder %s87, 1
      %p931 = por %p929, %p930
      %p933 = scmp.ne.s32.totalorder %s918, %s932
      %p934 = scmp.eq.s32.totalorder %s87, 0
      %p935 = por %p933, %p934
      %p936 = scmp.le.s32.totalorder 1, %s81
      %p937 = scmp.lt.s32.totalorder %s81, 3
      %p938 = pnand %p936, %p937
      %p939 = pneg %p938
      // Predicated region
      $region9: #{_lambda_.1} parent=5 // pred_check
        _
      $region10: #{_lambda_.1} parent=5 // pred_check_branch
        %941 = sbr.rel (%p938) target = $region12
      $region11: #{_lambda_.1} parent=5 // pred_region
        %s942 = ssub.s32 %s81, 1
        // Predicated region
        $region13: #{_lambda_.1} parent=11 // pred_check
          %p943 = pneg %p102
        $region14: #{_lambda_.1} parent=11 // pred_check_branch
          %945 = sbr.rel (%p943) target = $region16
        $region15: #{_lambda_.1} parent=11 // pred_region
          _
        $region16: #{_lambda_.1} parent=11 // pred_fallthru
          _
        // Predicated region
        $region17: #{_lambda_.1} parent=11 // pred_check
          %p946 = pneg %p123
        $region18: #{_lambda_.1} parent=11 // pred_check_branch
          %948 = sbr.rel (%p946) target = $region20
        $region19: #{_lambda_.1} parent=11 // pred_region
          _
        $region20: #{_lambda_.1} parent=11 // pred_fallthru
          _
        // Predicated region
        $region21: #{_lambda_.1} parent=11 // pred_check
          %p949 = pneg %p144
        $region22: #{_lambda_.1} parent=11 // pred_check_branch
          %951 = sbr.rel (%p949) target = $region24
        $region23: #{_lambda_.1} parent=11 // pred_region
          _
        $region24: #{_lambda_.1} parent=11 // pred_fallthru
          _
        // Predicated region
        $region25: #{_lambda_.1} parent=11 // pred_check
          %p952 = pneg %p165
        $region26: #{_lambda_.1} parent=11 // pred_check_branch
          %954 = sbr.rel (%p952) target = $region28
        $region27: #{_lambda_.1} parent=11 // pred_region
          _
        $region28: #{_lambda_.1} parent=11 // pred_fallthru
          _
        // Predicated region
        $region29: #{_lambda_.1} parent=11 // pred_check
          %p955 = pneg %p186
        $region30: #{_lambda_.1} parent=11 // pred_check_branch
          %957 = sbr.rel (%p955) target = $region32
        $region31: #{_lambda_.1} parent=11 // pred_region
          _
        $region32: #{_lambda_.1} parent=11 // pred_fallthru
          _
        // Predicated region
        $region33: #{_lambda_.1} parent=11 // pred_check
          %p958 = pneg %p207
        $region34: #{_lambda_.1} parent=11 // pred_check_branch
          %960 = sbr.rel (%p958) target = $region36
        $region35: #{_lambda_.1} parent=11 // pred_region
          _
        $region36: #{_lambda_.1} parent=11 // pred_fallthru
          _
        // Predicated region
        $region37: #{_lambda_.1} parent=11 // pred_check
          %p961 = pneg %p228
        $region38: #{_lambda_.1} parent=11 // pred_check_branch
          %963 = sbr.rel (%p961) target = $region40
        $region39: #{_lambda_.1} parent=11 // pred_region
          _
        $region40: #{_lambda_.1} parent=11 // pred_fallthru
          _
        // Predicated region
        $region41: #{_lambda_.1} parent=11 // pred_check
          %p964 = pneg %p249
        $region42: #{_lambda_.1} parent=11 // pred_check_branch
          %966 = sbr.rel (%p964) target = $region44
        $region43: #{_lambda_.1} parent=11 // pred_region
          _
        $region44: #{_lambda_.1} parent=11 // pred_fallthru
          _
        // Predicated region
        $region45: #{_lambda_.1} parent=11 // pred_check
          %p967 = pneg %p270
        $region46: #{_lambda_.1} parent=11 // pred_check_branch
          %969 = sbr.rel (%p967) target = $region48
        $region47: #{_lambda_.1} parent=11 // pred_region
          %971 = vsyncadd [#allocation7], 0
          %s972 = sshll.u32 %s17, 4
          %s973 = int_to_ptr.hbm [resolvable:$true] %s972
          %s974 = sshll.u32 [#allocation6], 4
          %s975 = int_to_ptr.vmem [resolvable:$true] %s974
          %980 = dma.hbm_to_vmem [thread:$0]  %s973, 1024, %s975, [#allocation7], 64, 64, 4
        $region48: #{_lambda_.1} parent=11 // pred_fallthru
          _
        // Predicated region
        $region49: #{_lambda_.1} parent=11 // pred_check
          %p981 = pneg %p291
        $region50: #{_lambda_.1} parent=11 // pred_check_branch
          %983 = sbr.rel (%p981) target = $region52
        $region51: #{_lambda_.1} parent=11 // pred_region
          _
        $region52: #{_lambda_.1} parent=11 // pred_fallthru
          _
        // Predicated region
        $region53: #{_lambda_.1} parent=11 // pred_check
          %p984 = pneg %p312
        $region54: #{_lambda_.1} parent=11 // pred_check_branch
          %986 = sbr.rel (%p984) target = $region56
        $region55: #{_lambda_.1} parent=11 // pred_region
          _
        $region56: #{_lambda_.1} parent=11 // pred_fallthru
          _
        // Predicated region
        $region57: #{_lambda_.1} parent=11 // pred_check
          %p987 = pneg %p333
        $region58: #{_lambda_.1} parent=11 // pred_check_branch
          %989 = sbr.rel (%p987) target = $region60
        $region59: #{_lambda_.1} parent=11 // pred_region
          _
        $region60: #{_lambda_.1} parent=11 // pred_fallthru
          _
        // Predicated region
        $region61: #{_lambda_.1} parent=11 // pred_check
          %p990 = pneg %p354
        $region62: #{_lambda_.1} parent=11 // pred_check_branch
          %992 = sbr.rel (%p990) target = $region64
        $region63: #{_lambda_.1} parent=11 // pred_region
          _
        $region64: #{_lambda_.1} parent=11 // pred_fallthru
          _
        // Predicated region
        $region65: #{_lambda_.1} parent=11 // pred_check
          %p993 = pneg %p375
        $region66: #{_lambda_.1} parent=11 // pred_check_branch
          %995 = sbr.rel (%p993) target = $region68
        $region67: #{_lambda_.1} parent=11 // pred_region
          _
        $region68: #{_lambda_.1} parent=11 // pred_fallthru
          _
        // Predicated region
        $region69: #{_lambda_.1} parent=11 // pred_check
          %p996 = pneg %p396
        $region70: #{_lambda_.1} parent=11 // pred_check_branch
          %998 = sbr.rel (%p996) target = $region72
        $region71: #{_lambda_.1} parent=11 // pred_region
          %1000 = vsyncadd [#allocation9], 0
          %s1001 = sshll.u32 %s29, 4
          %s1002 = int_to_ptr.hbm [resolvable:$true] %s1001
          %s1003 = sshll.u32 [#allocation8], 4
          %s1004 = int_to_ptr.vmem [resolvable:$true] %s1003
          %1009 = dma.hbm_to_vmem [thread:$0]  %s1002, 1024, %s1004, [#allocation9], 64, 64, 4
        $region72: #{_lambda_.1} parent=11 // pred_fallthru
          _
        // Predicated region
        $region73: #{_lambda_.1} parent=11 // pred_check
          %p1010 = pneg %p417
        $region74: #{_lambda_.1} parent=11 // pred_check_branch
          %1012 = sbr.rel (%p1010) target = $region76
        $region75: #{_lambda_.1} parent=11 // pred_region
          _
        $region76: #{_lambda_.1} parent=11 // pred_fallthru
          _
        // Predicated region
        $region77: #{_lambda_.1} parent=11 // pred_check
          %p1013 = pneg %p438
        $region78: #{_lambda_.1} parent=11 // pred_check_branch
          %1015 = sbr.rel (%p1013) target = $region80
        $region79: #{_lambda_.1} parent=11 // pred_region
          _
        $region80: #{_lambda_.1} parent=11 // pred_fallthru
          _
        // Predicated region
        $region81: #{_lambda_.1} parent=11 // pred_check
          %p1016 = pneg %p459
        $region82: #{_lambda_.1} parent=11 // pred_check_branch
          %1018 = sbr.rel (%p1016) target = $region84
        $region83: #{_lambda_.1} parent=11 // pred_region
          _
        $region84: #{_lambda_.1} parent=11 // pred_fallthru
          _
        // Predicated region
        $region85: #{_lambda_.1} parent=11 // pred_check
          %p1019 = pneg %p844
        $region86: #{_lambda_.1} parent=11 // pred_check_branch
          %1021 = sbr.rel (%p1019) target = $region88
        $region87: #{_lambda_.1} parent=11 // pred_region
          %1023 = vsyncadd [#allocation9], 0
          %s1024 = sshll.u32 %s65, 4
          %s1025 = int_to_ptr.hbm [resolvable:$true] %s1024
          %s1026 = sshll.u32 [#allocation16], 4
          %s1027 = int_to_ptr.vmem [resolvable:$true] %s1026
          %1032 = dma.hbm_to_vmem [thread:$0]  %s1025, 1024, %s1027, [#allocation9], 64, 64, 4
        $region88: #{_lambda_.1} parent=11 // pred_fallthru
          _
        // Predicated region
        $region89: #{_lambda_.1} parent=11 // pred_check
          %p1033 = pneg %p865
        $region90: #{_lambda_.1} parent=11 // pred_check_branch
          %1035 = sbr.rel (%p1033) target = $region92
        $region91: #{_lambda_.1} parent=11 // pred_region
          _
        $region92: #{_lambda_.1} parent=11 // pred_fallthru
          _
        // Predicated region
        $region93: #{_lambda_.1} parent=11 // pred_check
          %p1036 = pneg %p886
        $region94: #{_lambda_.1} parent=11 // pred_check_branch
          %1038 = sbr.rel (%p1036) target = $region96
        $region95: #{_lambda_.1} parent=11 // pred_region
          _
        $region96: #{_lambda_.1} parent=11 // pred_fallthru
          _
        // Predicated region
        $region97: #{_lambda_.1} parent=11 // pred_check
          %p1039 = pneg %p907
        $region98: #{_lambda_.1} parent=11 // pred_check_branch
          %1041 = sbr.rel (%p1039) target = $region100
        $region99: #{_lambda_.1} parent=11 // pred_region
          _
        $region100: #{_lambda_.1} parent=11 // pred_fallthru
          _
      $region12: #{_lambda_.1} parent=5 // pred_fallthru
        _
      %p1042 = scmp.lt.s32.totalorder %s81, 2
      // Predicated region
      $region101: #{_lambda_.1} parent=5 // pred_check
        %p1043 = pneg %p1042
      $region102: #{_lambda_.1} parent=5 // pred_check_branch
        %1045 = sbr.rel (%p1043) target = $region104
      $region103: #{_lambda_.1} parent=5 // pred_region
        // Predicated region
        $region105: #{_lambda_.1} parent=103 // pred_check
          %p1046 = pneg %p479
        $region106: #{_lambda_.1} parent=103 // pred_check_branch
          %1048 = sbr.rel (%p1046) target = $region108
        $region107: #{_lambda_.1} parent=103 // pred_region
          %s1049 = sand.u32 %s81, 1
          %s1050 = scalar_lea.sflag [#allocation7], %s1049
          %s1051 = sand.u32 %s469, 1
          %s1052 = smul.addr %s1051, 192
          %s1053 = scalar_lea.vmem [#allocation10], %s1052
          %1055 = vsyncadd %s1050, 0
          %s1056 = smul.addr %s81, 48
          %s1057 = smul.addr %s1056, 4
          %s1058 = scalar_lea.hbm %s37, %s1057
          %s1059 = sshll.u32 %s1058, 4
          %s1060 = int_to_ptr.hbm [resolvable:$true] %s1059
          %s1061 = sshll.u32 %s1053, 4
          %s1062 = int_to_ptr.vmem [resolvable:$true] %s1061
          %1067 = dma.hbm_to_vmem [thread:$0]  %s1060, 3072, %s1062, %s1050, 64, 64, 4
        $region108: #{_lambda_.1} parent=103 // pred_fallthru
          _
        // Predicated region
        $region109: #{_lambda_.1} parent=103 // pred_check
          %p1068 = pneg %p505
        $region110: #{_lambda_.1} parent=103 // pred_check_branch
          %1070 = sbr.rel (%p1068) target = $region112
        $region111: #{_lambda_.1} parent=103 // pred_region
          %p1071 = scmp.lt.s32.totalorder %s81, 1
          %s1072 = scalar_select %p1071, %s81, 1
          %s1073 = scalar_lea.vmem %s39, %s1072
        $region112: #{_lambda_.1} parent=103 // pred_fallthru
          _
        // Predicated region
        $region113: #{_lambda_.1} parent=103 // pred_check
          %p1074 = pneg %p531
        $region114: #{_lambda_.1} parent=103 // pred_check_branch
          %1076 = sbr.rel (%p1074) target = $region116
        $region115: #{_lambda_.1} parent=103 // pred_region
          %s1077 = sand.u32 %s81, 1
          %s1078 = scalar_lea.sflag [#allocation7], %s1077
          %s1079 = sand.u32 %s521, 1
          %s1080 = smul.addr %s1079, 64
          %s1081 = scalar_lea.vmem [#allocation11], %s1080
          %1083 = vsyncadd %s1078, 0
          %s1084 = smul.addr %s81, 16
          %s1085 = smul.addr %s1084, 4
          %s1086 = scalar_lea.hbm %s41, %s1085
          %s1087 = sshll.u32 %s1086, 4
          %s1088 = int_to_ptr.hbm [resolvable:$true] %s1087
          %s1089 = sshll.u32 %s1081, 4
          %s1090 = int_to_ptr.vmem [resolvable:$true] %s1089
          %1095 = dma.hbm_to_vmem [thread:$0]  %s1088, 1024, %s1090, %s1078, 64, 64, 4
        $region116: #{_lambda_.1} parent=103 // pred_fallthru
          _
        // Predicated region
        $region117: #{_lambda_.1} parent=103 // pred_check
          %p1096 = pneg %p557
        $region118: #{_lambda_.1} parent=103 // pred_check_branch
          %1098 = sbr.rel (%p1096) target = $region120
        $region119: #{_lambda_.1} parent=103 // pred_region
          %p1099 = scmp.lt.s32.totalorder %s81, 1
          %s1100 = scalar_select %p1099, %s81, 1
          %s1101 = scalar_lea.vmem %s43, %s1100
        $region120: #{_lambda_.1} parent=103 // pred_fallthru
          _
        // Predicated region
        $region121: #{_lambda_.1} parent=103 // pred_check
          %p1102 = pneg %p583
        $region122: #{_lambda_.1} parent=103 // pred_check_branch
          %1104 = sbr.rel (%p1102) target = $region124
        $region123: #{_lambda_.1} parent=103 // pred_region
          %p1105 = scmp.lt.s32.totalorder %s81, 1
          %s1106 = scalar_select %p1105, %s81, 1
          %s1107 = scalar_lea.vmem %s45, %s1106
        $region124: #{_lambda_.1} parent=103 // pred_fallthru
          _
        // Predicated region
        $region125: #{_lambda_.1} parent=103 // pred_check
          %p1108 = pneg %p609
        $region126: #{_lambda_.1} parent=103 // pred_check_branch
          %1110 = sbr.rel (%p1108) target = $region128
        $region127: #{_lambda_.1} parent=103 // pred_region
          %p1111 = scmp.lt.s32.totalorder %s81, 1
          %s1112 = scalar_select %p1111, %s81, 1
          %s1113 = scalar_lea.vmem %s47, %s1112
        $region128: #{_lambda_.1} parent=103 // pred_fallthru
          _
        // Predicated region
        $region129: #{_lambda_.1} parent=103 // pred_check
          %p1114 = pneg %p635
        $region130: #{_lambda_.1} parent=103 // pred_check_branch
          %1116 = sbr.rel (%p1114) target = $region132
        $region131: #{_lambda_.1} parent=103 // pred_region
          %s1117 = sand.u32 %s81, 1
          %s1118 = scalar_lea.sflag [#allocation7], %s1117
          %s1119 = sand.u32 %s625, 1
          %s1120 = smul.addr %s1119, 128
          %s1121 = scalar_lea.vmem [#allocation12], %s1120
          %1123 = vsyncadd %s1118, 0
          %s1124 = smul.addr %s81, 32
          %s1125 = smul.addr %s1124, 4
          %s1126 = scalar_lea.hbm %s49, %s1125
          %s1127 = sshll.u32 %s1126, 4
          %s1128 = int_to_ptr.hbm [resolvable:$true] %s1127
          %s1129 = sshll.u32 %s1121, 4
          %s1130 = int_to_ptr.vmem [resolvable:$true] %s1129
          %1135 = dma.hbm_to_vmem [thread:$0]  %s1128, 2048, %s1130, %s1118, 64, 64, 4
        $region132: #{_lambda_.1} parent=103 // pred_fallthru
          _
        // Predicated region
        $region133: #{_lambda_.1} parent=103 // pred_check
          %p1136 = pneg %p661
        $region134: #{_lambda_.1} parent=103 // pred_check_branch
          %1138 = sbr.rel (%p1136) target = $region136
        $region135: #{_lambda_.1} parent=103 // pred_region
          %p1139 = scmp.lt.s32.totalorder %s81, 1
          %s1140 = scalar_select %p1139, %s81, 1
          %s1141 = scalar_lea.vmem %s51, %s1140
        $region136: #{_lambda_.1} parent=103 // pred_fallthru
          _
        // Predicated region
        $region137: #{_lambda_.1} parent=103 // pred_check
          %p1142 = pneg %p687
        $region138: #{_lambda_.1} parent=103 // pred_check_branch
          %1144 = sbr.rel (%p1142) target = $region140
        $region139: #{_lambda_.1} parent=103 // pred_region
          %s1145 = sand.u32 %s81, 1
          %s1146 = scalar_lea.sflag [#allocation7], %s1145
          %s1147 = sand.u32 %s677, 1
          %s1148 = smul.addr %s1147, 64
          %s1149 = scalar_lea.vmem [#allocation13], %s1148
          %1151 = vsyncadd %s1146, 0
          %s1152 = smul.addr %s81, 16
          %s1153 = smul.addr %s1152, 4
          %s1154 = scalar_lea.hbm %s53, %s1153
          %s1155 = sshll.u32 %s1154, 4
          %s1156 = int_to_ptr.hbm [resolvable:$true] %s1155
          %s1157 = sshll.u32 %s1149, 4
          %s1158 = int_to_ptr.vmem [resolvable:$true] %s1157
          %1163 = dma.hbm_to_vmem [thread:$0]  %s1156, 1024, %s1158, %s1146, 64, 64, 4
        $region140: #{_lambda_.1} parent=103 // pred_fallthru
          _
        // Predicated region
        $region141: #{_lambda_.1} parent=103 // pred_check
          %p1164 = pneg %p713
        $region142: #{_lambda_.1} parent=103 // pred_check_branch
          %1166 = sbr.rel (%p1164) target = $region144
        $region143: #{_lambda_.1} parent=103 // pred_region
          %p1167 = scmp.lt.s32.totalorder %s81, 1
          %s1168 = scalar_select %p1167, %s81, 1
          %s1169 = scalar_lea.vmem %s55, %s1168
        $region144: #{_lambda_.1} parent=103 // pred_fallthru
          _
        // Predicated region
        $region145: #{_lambda_.1} parent=103 // pred_check
          %p1170 = pneg %p739
        $region146: #{_lambda_.1} parent=103 // pred_check_branch
          %1172 = sbr.rel (%p1170) target = $region148
        $region147: #{_lambda_.1} parent=103 // pred_region
          %p1173 = scmp.lt.s32.totalorder %s81, 1
          %s1174 = scalar_select %p1173, %s81, 1
          %s1175 = scalar_lea.vmem %s57, %s1174
        $region148: #{_lambda_.1} parent=103 // pred_fallthru
          _
        // Predicated region
        $region149: #{_lambda_.1} parent=103 // pred_check
          %p1176 = pneg %p765
        $region150: #{_lambda_.1} parent=103 // pred_check_branch
          %1178 = sbr.rel (%p1176) target = $region152
        $region151: #{_lambda_.1} parent=103 // pred_region
          %p1179 = scmp.lt.s32.totalorder %s81, 1
          %s1180 = scalar_select %p1179, %s81, 1
          %s1181 = scalar_lea.vmem %s59, %s1180
        $region152: #{_lambda_.1} parent=103 // pred_fallthru
          _
        // Predicated region
        $region153: #{_lambda_.1} parent=103 // pred_check
          %p1182 = pneg %p791
        $region154: #{_lambda_.1} parent=103 // pred_check_branch
          %1184 = sbr.rel (%p1182) target = $region156
        $region155: #{_lambda_.1} parent=103 // pred_region
          %s1185 = sand.u32 %s81, 1
          %s1186 = scalar_lea.sflag [#allocation7], %s1185
          %s1187 = sand.u32 %s781, 1
          %s1188 = smul.addr %s1187, 192
          %s1189 = scalar_lea.vmem [#allocation14], %s1188
          %1191 = vsyncadd %s1186, 0
          %s1192 = smul.addr %s81, 48
          %s1193 = smul.addr %s1192, 4
          %s1194 = scalar_lea.hbm %s61, %s1193
          %s1195 = sshll.u32 %s1194, 4
          %s1196 = int_to_ptr.hbm [resolvable:$true] %s1195
          %s1197 = sshll.u32 %s1189, 4
          %s1198 = int_to_ptr.vmem [resolvable:$true] %s1197
          %1203 = dma.hbm_to_vmem [thread:$0]  %s1196, 3072, %s1198, %s1186, 192, 192, 12
        $region156: #{_lambda_.1} parent=103 // pred_fallthru
          _
        // Predicated region
        $region157: #{_lambda_.1} parent=103 // pred_check
          %p1204 = pneg %p817
        $region158: #{_lambda_.1} parent=103 // pred_check_branch
          %1206 = sbr.rel (%p1204) target = $region160
        $region159: #{_lambda_.1} parent=103 // pred_region
          %s1207 = sand.u32 %s81, 1
          %s1208 = scalar_lea.sflag [#allocation7], %s1207
          %s1209 = sand.u32 %s807, 1
          %s1210 = smul.addr %s1209, 64
          %s1211 = scalar_lea.vmem [#allocation15], %s1210
          %1213 = vsyncadd %s1208, 0
          %s1214 = smul.addr %s81, 16
          %s1215 = smul.addr %s1214, 4
          %s1216 = scalar_lea.hbm %s63, %s1215
          %s1217 = sshll.u32 %s1216, 4
          %s1218 = int_to_ptr.hbm [resolvable:$true] %s1217
          %s1219 = sshll.u32 %s1211, 4
          %s1220 = int_to_ptr.vmem [resolvable:$true] %s1219
          %1225 = dma.hbm_to_vmem [thread:$0]  %s1218, 1024, %s1220, %s1208, 64, 64, 4
        $region160: #{_lambda_.1} parent=103 // pred_fallthru
          _
      $region104: #{_lambda_.1} parent=5 // pred_fallthru
        _
      %p1226 = scmp.le.s32.totalorder 1, %s81
      %p1227 = scmp.lt.s32.totalorder %s81, 3
      %p1228 = pnand %p1226, %p1227
      %p1229 = pneg %p1228
      // Predicated region
      $region161: #{_lambda_.1} parent=5 // pred_check
        _
      $region162: #{_lambda_.1} parent=5 // pred_check_branch
        %1231 = sbr.rel (%p1228) target = $region164
      $region163: #{_lambda_.1} parent=5 // pred_region
        %s1232 = ssub.s32 %s81, 1
        // Predicated region
        $region165: #{_lambda_.1} parent=163 // pred_check
          %p1233 = pneg %p270
        $region166: #{_lambda_.1} parent=163 // pred_check_branch
          %1235 = sbr.rel (%p1233) target = $region168
        $region167: #{_lambda_.1} parent=163 // pred_region
          %1237 = dma.done [#allocation7], 1024
        $region168: #{_lambda_.1} parent=163 // pred_fallthru
          _
        // Predicated region
        $region169: #{_lambda_.1} parent=163 // pred_check
          %p1238 = pneg %p396
        $region170: #{_lambda_.1} parent=163 // pred_check_branch
          %1240 = sbr.rel (%p1238) target = $region172
        $region171: #{_lambda_.1} parent=163 // pred_region
          %1242 = dma.done [#allocation9], 1024
        $region172: #{_lambda_.1} parent=163 // pred_fallthru
          _
        %s1243 = sand.u32 %s86, 1
        %s1244 = scalar_lea.sflag [#allocation7], %s1243
        %s1245 = sand.u32 %s472, 1
        %s1246 = smul.addr %s1245, 192
        %s1247 = scalar_lea.vmem [#allocation10], %s1246
        // Predicated region
        $region173: #{_lambda_.1} parent=163 // pred_check
          %p1248 = pneg %p485
        $region174: #{_lambda_.1} parent=163 // pred_check_branch
          %1250 = sbr.rel (%p1248) target = $region176
        $region175: #{_lambda_.1} parent=163 // pred_region
          %1252 = dma.done %s1244, 3072
        $region176: #{_lambda_.1} parent=163 // pred_fallthru
          _
        %s1253 = sand.u32 %s86, 1
        %s1254 = scalar_lea.sflag [#allocation7], %s1253
        %s1255 = sand.u32 %s524, 1
        %s1256 = smul.addr %s1255, 64
        %s1257 = scalar_lea.vmem [#allocation11], %s1256
        // Predicated region
        $region177: #{_lambda_.1} parent=163 // pred_check
          %p1258 = pneg %p537
        $region178: #{_lambda_.1} parent=163 // pred_check_branch
          %1260 = sbr.rel (%p1258) target = $region180
        $region179: #{_lambda_.1} parent=163 // pred_region
          %1262 = dma.done %s1254, 1024
        $region180: #{_lambda_.1} parent=163 // pred_fallthru
          _
        %s1263 = sand.u32 %s86, 1
        %s1264 = scalar_lea.sflag [#allocation7], %s1263
        %s1265 = sand.u32 %s628, 1
        %s1266 = smul.addr %s1265, 128
        %s1267 = scalar_lea.vmem [#allocation12], %s1266
        // Predicated region
        $region181: #{_lambda_.1} parent=163 // pred_check
          %p1268 = pneg %p641
        $region182: #{_lambda_.1} parent=163 // pred_check_branch
          %1270 = sbr.rel (%p1268) target = $region184
        $region183: #{_lambda_.1} parent=163 // pred_region
          %1272 = dma.done %s1264, 2048
        $region184: #{_lambda_.1} parent=163 // pred_fallthru
          _
        %s1273 = sand.u32 %s86, 1
        %s1274 = scalar_lea.sflag [#allocation7], %s1273
        %s1275 = sand.u32 %s680, 1
        %s1276 = smul.addr %s1275, 64
        %s1277 = scalar_lea.vmem [#allocation13], %s1276
        // Predicated region
        $region185: #{_lambda_.1} parent=163 // pred_check
          %p1278 = pneg %p693
        $region186: #{_lambda_.1} parent=163 // pred_check_branch
          %1280 = sbr.rel (%p1278) target = $region188
        $region187: #{_lambda_.1} parent=163 // pred_region
          %1282 = dma.done %s1274, 1024
        $region188: #{_lambda_.1} parent=163 // pred_fallthru
          _
        %s1283 = sand.u32 %s86, 1
        %s1284 = scalar_lea.sflag [#allocation7], %s1283
        %s1285 = sand.u32 %s784, 1
        %s1286 = smul.addr %s1285, 192
        %s1287 = scalar_lea.vmem [#allocation14], %s1286
        // Predicated region
        $region189: #{_lambda_.1} parent=163 // pred_check
          %p1288 = pneg %p797
        $region190: #{_lambda_.1} parent=163 // pred_check_branch
          %1290 = sbr.rel (%p1288) target = $region192
        $region191: #{_lambda_.1} parent=163 // pred_region
          %1292 = dma.done %s1284, 3072
        $region192: #{_lambda_.1} parent=163 // pred_fallthru
          _
        %s1293 = sand.u32 %s86, 1
        %s1294 = scalar_lea.sflag [#allocation7], %s1293
        %s1295 = sand.u32 %s810, 1
        %s1296 = smul.addr %s1295, 64
        %s1297 = scalar_lea.vmem [#allocation15], %s1296
        // Predicated region
        $region193: #{_lambda_.1} parent=163 // pred_check
          %p1298 = pneg %p823
        $region194: #{_lambda_.1} parent=163 // pred_check_branch
          %1300 = sbr.rel (%p1298) target = $region196
        $region195: #{_lambda_.1} parent=163 // pred_region
          %1302 = dma.done %s1294, 1024
        $region196: #{_lambda_.1} parent=163 // pred_fallthru
          _
        // Predicated region
        $region197: #{_lambda_.1} parent=163 // pred_check
          %p1303 = pneg %p844
        $region198: #{_lambda_.1} parent=163 // pred_check_branch
          %1305 = sbr.rel (%p1303) target = $region200
        $region199: #{_lambda_.1} parent=163 // pred_region
          %1307 = dma.done [#allocation9], 1024
        $region200: #{_lambda_.1} parent=163 // pred_fallthru
          _
        %p1308 = pneg %p102
        %p1309 = pneg %p99
        %p1310 = pneg %p123
        %p1311 = pneg %p120
        %p1312 = pneg %p144
        %p1313 = pneg %p141
        %p1314 = pneg %p165
        %p1315 = pneg %p162
        %p1316 = pneg %p186
        %p1317 = pneg %p183
        %p1318 = pneg %p207
        %p1319 = pneg %p204
        %p1320 = pneg %p228
        %p1321 = pneg %p225
        %p1322 = pneg %p249
        %p1323 = pneg %p246
        %p1324 = pneg %p270
        %p1325 = pneg %p267
        %p1326 = pneg %p291
        %p1327 = pneg %p288
        %p1328 = pneg %p312
        %p1329 = pneg %p309
        %p1330 = pneg %p333
        %p1331 = pneg %p330
        %p1332 = pneg %p354
        %p1333 = pneg %p351
        %p1334 = pneg %p375
        %p1335 = pneg %p372
        %p1336 = pneg %p396
        %p1337 = pneg %p393
        %p1338 = pneg %p417
        %p1339 = pneg %p414
        %p1340 = pneg %p438
        %p1341 = pneg %p435
        %p1342 = pneg %p459
        %p1343 = pneg %p456
        %s1344 = sand.u32 %s86, 1
        %s1345 = scalar_lea.sflag [#allocation7], %s1344
        %s1346 = sand.u32 %s472, 1
        %s1347 = smul.addr %s1346, 192
        %s1348 = scalar_lea.vmem [#allocation10], %s1347
        %p1349 = pneg %p485
        %p1350 = pneg %p482
        %p1351 = scmp.lt.s32.totalorder %s86, 1
        %s1352 = scalar_select %p1351, %s86, 1
        %s1353 = scalar_lea.vmem %s39, %s1352
        %p1354 = pneg %p511
        %p1355 = pneg %p508
        %s1356 = sand.u32 %s86, 1
        %s1357 = scalar_lea.sflag [#allocation7], %s1356
        %s1358 = sand.u32 %s524, 1
        %s1359 = smul.addr %s1358, 64
        %s1360 = scalar_lea.vmem [#allocation11], %s1359
        %p1361 = pneg %p537
        %p1362 = pneg %p534
        %p1363 = scmp.lt.s32.totalorder %s86, 1
        %s1364 = scalar_select %p1363, %s86, 1
        %s1365 = scalar_lea.vmem %s43, %s1364
        %p1366 = pneg %p563
        %p1367 = pneg %p560
        %p1368 = scmp.lt.s32.totalorder %s86, 1
        %s1369 = scalar_select %p1368, %s86, 1
        %s1370 = scalar_lea.vmem %s45, %s1369
        %p1371 = pneg %p589
        %p1372 = pneg %p586
        %p1373 = scmp.lt.s32.totalorder %s86, 1
        %s1374 = scalar_select %p1373, %s86, 1
        %s1375 = scalar_lea.vmem %s47, %s1374
        %p1376 = pneg %p615
        %p1377 = pneg %p612
        %s1378 = sand.u32 %s86, 1
        %s1379 = scalar_lea.sflag [#allocation7], %s1378
        %s1380 = sand.u32 %s628, 1
        %s1381 = smul.addr %s1380, 128
        %s1382 = scalar_lea.vmem [#allocation12], %s1381
        %p1383 = pneg %p641
        %p1384 = pneg %p638
        %p1385 = scmp.lt.s32.totalorder %s86, 1
        %s1386 = scalar_select %p1385, %s86, 1
        %s1387 = scalar_lea.vmem %s51, %s1386
        %p1388 = pneg %p667
        %p1389 = pneg %p664
        %s1390 = sand.u32 %s86, 1
        %s1391 = scalar_lea.sflag [#allocation7], %s1390
        %s1392 = sand.u32 %s680, 1
        %s1393 = smul.addr %s1392, 64
        %s1394 = scalar_lea.vmem [#allocation13], %s1393
        %p1395 = pneg %p693
        %p1396 = pneg %p690
        %p1397 = scmp.lt.s32.totalorder %s86, 1
        %s1398 = scalar_select %p1397, %s86, 1
        %s1399 = scalar_lea.vmem %s55, %s1398
        %p1400 = pneg %p719
        %p1401 = pneg %p716
        %p1402 = scmp.lt.s32.totalorder %s86, 1
        %s1403 = scalar_select %p1402, %s86, 1
        %s1404 = scalar_lea.vmem %s57, %s1403
        %p1405 = pneg %p745
        %p1406 = pneg %p742
        %p1407 = scmp.lt.s32.totalorder %s86, 1
        %s1408 = scalar_select %p1407, %s86, 1
        %s1409 = scalar_lea.vmem %s59, %s1408
        %p1410 = pneg %p771
        %p1411 = pneg %p768
        %s1412 = sand.u32 %s86, 1
        %s1413 = scalar_lea.sflag [#allocation7], %s1412
        %s1414 = sand.u32 %s784, 1
        %s1415 = smul.addr %s1414, 192
        %s1416 = scalar_lea.vmem [#allocation14], %s1415
        %p1417 = pneg %p797
        %p1418 = pneg %p794
        %s1419 = sand.u32 %s86, 1
        %s1420 = scalar_lea.sflag [#allocation7], %s1419
        %s1421 = sand.u32 %s810, 1
        %s1422 = smul.addr %s1421, 64
        %s1423 = scalar_lea.vmem [#allocation15], %s1422
        %p1424 = pneg %p823
        %p1425 = pneg %p820
        %p1426 = pneg %p844
        %p1427 = pneg %p841
        %p1428 = pneg %p865
        %p1429 = pneg %p862
        %p1430 = pneg %p886
        %p1431 = pneg %p883
        %p1432 = pneg %p907
        %p1433 = pneg %p904
        %p1434 = pneg %p928
        %p1435 = pneg %p925
        %p1436 = scmp.lt.s32.totalorder %s86, 1
        %s1437 = scalar_select %p1436, %s86, 1
        %s1438 = scalar_lea.vmem %s39, %s1437
        %p1439 = scmp.lt.s32.totalorder %s86, 1
        %s1440 = scalar_select %p1439, %s86, 1
        %s1441 = scalar_lea.vmem %s43, %s1440
        %p1442 = scmp.lt.s32.totalorder %s86, 1
        %s1443 = scalar_select %p1442, %s86, 1
        %s1444 = scalar_lea.vmem %s45, %s1443
        %p1445 = scmp.lt.s32.totalorder %s86, 1
        %s1446 = scalar_select %p1445, %s86, 1
        %s1447 = scalar_lea.vmem %s47, %s1446
        %p1448 = scmp.lt.s32.totalorder %s86, 1
        %s1449 = scalar_select %p1448, %s86, 1
        %s1450 = scalar_lea.vmem %s51, %s1449
        %p1451 = scmp.lt.s32.totalorder %s86, 1
        %s1452 = scalar_select %p1451, %s86, 1
        %s1453 = scalar_lea.vmem %s55, %s1452
        %p1454 = scmp.lt.s32.totalorder %s86, 1
        %s1455 = scalar_select %p1454, %s86, 1
        %s1456 = scalar_lea.vmem %s57, %s1455
        %p1457 = scmp.lt.s32.totalorder %s86, 1
        %s1458 = scalar_select %p1457, %s86, 1
        %s1459 = scalar_lea.vmem %s59, %s1458
        %p1461 = scmp.eq.s32.totalorder %s86, 0
        // Predicated region
        $region201: #{_lambda_.1} parent=163 // pred_check
          %p1462 = pneg %p1461
        $region202: #{_lambda_.1} parent=163 // pred_check_branch
          %1464 = sbr.rel (%p1462) target = $region204
        $region203: #{_lambda_.1} parent=163 // pred_region
          %v1465 = vld [vmem:[%s1] sm:$0xff]
          %v1466 = vld [vmem:[%s1 + $0x8] sm:$0xff]
          %v1467 = vpack.c.bf16 %v1466, %v1465
          %v1468 = vld [vmem:[%s13] sm:$0xf]
          %v1469 = vld [vmem:[%s15] sm:$0x1]
          %v1471 = vperm.slane %v1469, 0
          %vm1473 = vcmask 64512
          %v1475 = vsel %vm1473, %v1467, 0
          %vm1477 = vcmask 1043456
          %v1479 = vsel %vm1477, %v1468, 0
          %1481 = vmatpush.bf16.msra.mxu0 0
          %1482 = vmatpush.bf16.msra.mxu0 0
          %1483 = vmatpush.bf16.msra.mxu0 0
          %1484 = vmatpush.bf16.msra.mxu0 0
          %1485 = vmatpush.bf16.msra.mxu0 0
          %1486 = vmatpush.bf16.msra.mxu0 0
          %1487 = vmatpush.bf16.msra.mxu0 0
          %1488 = vmatpush.bf16.msra.mxu0 %v1479
          %1489 = vmatmul.bf16.gmra.mxu0 %v1475
          %v1490 = vpop.f32.mrf.mxu0
          %v1491 = vadd.f32 %v1471, %v1490
          %v1492 = vpop.f32.mrf.mxu0
          %v1493 = vadd.f32 %v1471, %v1492
          %1494 = vdwg.mxu0
          %v1495 = vmax.f32 %v1491, 0.0
          %v1496 = vmax.f32 %v1493, 0.0
          %v1497 = vpack.c.bf16 %v1496, %v1495
          %v1498 = vld [vmem:[#allocation6] sm:$0xf]
          %v1499 = vld [vmem:[#allocation6 + $0x4] sm:$0xf]
          %v1500 = vld [vmem:[#allocation6 + $0x8] sm:$0xf]
          %v1501 = vld [vmem:[#allocation6 + $0xc] sm:$0xf]
          %v1502 = vld [vmem:[#allocation6 + $0x10] sm:$0xf]
          %v1503 = vld [vmem:[#allocation6 + $0x14] sm:$0xf]
          %v1504 = vld [vmem:[#allocation6 + $0x18] sm:$0xf]
          %v1505 = vld [vmem:[#allocation6 + $0x1c] sm:$0xf]
          %v1506 = vld [vmem:[#allocation6 + $0x20] sm:$0xf]
          %v1507 = vld [vmem:[#allocation6 + $0x24] sm:$0xf]
          %v1508 = vld [vmem:[#allocation6 + $0x28] sm:$0xf]
          %v1509 = vld [vmem:[#allocation6 + $0x2c] sm:$0xf]
          %v1510 = vld [vmem:[#allocation6 + $0x30] sm:$0xf]
          %v1511 = vld [vmem:[#allocation6 + $0x34] sm:$0xf]
          %v1512 = vld [vmem:[#allocation6 + $0x38] sm:$0xf]
          %v1513 = vld [vmem:[#allocation6 + $0x3c] sm:$0xf]
          %v1514 = vld [vmem:[%s19] sm:$0x1]
          %v1516 = vperm.slane %v1514, 0
          %v1534 = vunpack.c.l.b16 %v1498
          %v1535 = vunpack.c.l.b16 %v1499
          %v1536 = vunpack.c.l.b16 %v1500
          %v1537 = vunpack.c.l.b16 %v1501
          %v1538 = vunpack.c.l.b16 %v1502
          %v1539 = vunpack.c.l.b16 %v1503
          %v1540 = vunpack.c.l.b16 %v1504
          %v1541 = vunpack.c.l.b16 %v1505
          %v1542 = vunpack.c.l.b16 %v1506
          %v1543 = vunpack.c.l.b16 %v1507
          %v1544 = vunpack.c.l.b16 %v1508
          %v1545 = vunpack.c.l.b16 %v1509
          %v1546 = vunpack.c.l.b16 %v1510
          %v1547 = vunpack.c.l.b16 %v1511
          %v1548 = vunpack.c.l.b16 %v1512
          %v1549 = vunpack.c.l.b16 %v1513
          %v1550 = vpack.c.b16 %v1535, %v1534
          %v1551 = vpack.c.b16 %v1537, %v1536
          %v1552 = vpack.c.b16 %v1539, %v1538
          %v1553 = vpack.c.b16 %v1541, %v1540
          %v1554 = vpack.c.b16 %v1543, %v1542
          %v1555 = vpack.c.b16 %v1545, %v1544
          %v1556 = vpack.c.b16 %v1547, %v1546
          %v1557 = vpack.c.b16 %v1549, %v1548
          %1566 = vmatpush.bf16.msra.mxu0 %v1557
          %1567 = vmatpush.bf16.msra.mxu0 %v1556
          %1568 = vmatpush.bf16.msra.mxu0 %v1555
          %1569 = vmatpush.bf16.msra.mxu0 %v1554
          %1570 = vmatpush.bf16.msra.mxu0 %v1553
          %1571 = vmatpush.bf16.msra.mxu0 %v1552
          %1572 = vmatpush.bf16.msra.mxu0 %v1551
          %1573 = vmatpush.bf16.msra.mxu0 %v1550
          %1574 = vmatmul.bf16.gmra.mxu0 %v1497
          %v1575 = vpop.f32.mrf.mxu0
          %v1576 = vadd.f32 %v1516, %v1575
          %v1577 = vpop.f32.mrf.mxu0
          %v1578 = vadd.f32 %v1516, %v1577
          %1579 = vdwg.mxu0
          %v1580 = vld [vmem:[%s21] sm:$0x1]
          %v1581 = vld [vmem:[%s23] sm:$0x1]
          %1582 = vadd.xlane.f32.xlu0 %v1576
          %v1583 = vpop.xlane.xlu0 %1582
          %1584 = vadd.xlane.f32.xlu0 %v1578
          %v1585 = vpop.xlane.xlu0 %1584
          %v1586 = vrcp.pop 128.0
          %v1587 = vmul.f32 128.0, %v1586
          %v1588 = vsub.f32 1.0, %v1587
          %v1589 = vmul.f32 %v1586, %v1588
          %v1590 = vadd.f32 %v1586, %v1589
          %vm1591 = vweird.f32 %v1586
          %v1592 = vsel %vm1591, %v1586, %v1590
          %v1593 = vmul.f32 %v1583, %v1592
          %v1594 = vmul.f32 %v1585, %v1592
          %v1595 = vsub.f32 %v1576, %v1593
          %v1596 = vsub.f32 %v1578, %v1594
          %v1597 = vmul.f32 %v1595, %v1595
          %v1598 = vmul.f32 %v1596, %v1596
          %1599 = vadd.xlane.f32.xlu0 %v1597
          %v1600 = vpop.xlane.xlu0 %1599
          %1601 = vadd.xlane.f32.xlu0 %v1598
          %v1602 = vpop.xlane.xlu0 %1601
          %v1603 = vmul.f32 %v1600, %v1592
          %v1604 = vmul.f32 %v1602, %v1592
          %v1605 = vadd.f32 %v1603, 1e-05
          %v1606 = vadd.f32 %v1604, 1e-05
          %v1607 = vrsqrt.pop %v1605
          %v1608 = vmul.f32 %v1607, %v1605
          %v1609 = vmul.f32 %v1608, %v1607
          %v1610 = vmul.f32 0.5, %v1609
          %v1611 = vsub.f32 1.5, %v1610
          %v1612 = vmul.f32 %v1607, %v1611
          %vm1613 = vweird.f32 %v1605
          %vm1614 = vweird.f32 %v1607
          %vm1615 = vmor %vm1613, %vm1614
          %v1616 = vsel %vm1615, %v1607, %v1612
          %v1617 = vrsqrt.pop %v1606
          %v1618 = vmul.f32 %v1617, %v1606
          %v1619 = vmul.f32 %v1618, %v1617
          %v1620 = vmul.f32 0.5, %v1619
          %v1621 = vsub.f32 1.5, %v1620
          %v1622 = vmul.f32 %v1617, %v1621
          %vm1623 = vweird.f32 %v1606
          %vm1624 = vweird.f32 %v1617
          %vm1625 = vmor %vm1623, %vm1624
          %v1626 = vsel %vm1625, %v1617, %v1622
          %v1627 = vmul.f32 %v1595, %v1616
          %v1628 = vmul.f32 %v1596, %v1626
          %v1630 = vperm.slane %v1580, 0
          %v1632 = vmul.f32 %v1627, %v1630
          %v1633 = vmul.f32 %v1628, %v1630
          %v1635 = vperm.slane %v1581, 0
          %v1637 = vadd.f32 %v1632, %v1635
          %v1638 = vadd.f32 %v1633, %v1635
          %1639 = vst [vmem:[#allocation2] sm:$0xff] %v1637
          %1640 = vst [vmem:[#allocation2 + $0x8] sm:$0xff] %v1638
          %v1641 = vld [vmem:[%s3] sm:$0xff]
          %v1642 = vld [vmem:[%s3 + $0x8] sm:$0xff]
          %v1643 = vld [vmem:[%s3 + $0x10] sm:$0xff]
          %v1644 = vld [vmem:[%s3 + $0x18] sm:$0xff]
          %v1645 = vpack.c.bf16 %v1642, %v1641
          %v1646 = vpack.c.bf16 %v1644, %v1643
          %v1647 = vld [vmem:[%s25] sm:$0xf]
          %v1648 = vld [vmem:[%s27] sm:$0x1]
          %v1650 = vperm.slane %v1648, 0
          %v1653 = vsel %vm1473, %v1645, 0
          %v1656 = vsel %vm1473, %v1646, 0
          %v1659 = vsel %vm1477, %v1647, 0
          %1661 = vmatpush.bf16.msra.mxu0 0
          %1662 = vmatpush.bf16.msra.mxu0 0
          %1663 = vmatpush.bf16.msra.mxu0 0
          %1664 = vmatpush.bf16.msra.mxu0 0
          %1665 = vmatpush.bf16.msra.mxu0 0
          %1666 = vmatpush.bf16.msra.mxu0 0
          %1667 = vmatpush.bf16.msra.mxu0 0
          %1668 = vmatpush.bf16.msra.mxu0 %v1659
          %1669 = vmatmul.bf16.gmra.mxu0 %v1653
          %v1670 = vpop.f32.mrf.mxu0
          %v1671 = vadd.f32 %v1650, %v1670
          %v1672 = vpop.f32.mrf.mxu0
          %v1673 = vadd.f32 %v1650, %v1672
          %1674 = vmatmul.bf16.gmra.mxu0 %v1656
          %v1675 = vpop.f32.mrf.mxu0
          %v1676 = vadd.f32 %v1650, %v1675
          %v1677 = vpop.f32.mrf.mxu0
          %v1678 = vadd.f32 %v1650, %v1677
          %1679 = vdwg.mxu0
          %v1680 = vmax.f32 %v1671, 0.0
          %v1681 = vmax.f32 %v1673, 0.0
          %v1682 = vmax.f32 %v1676, 0.0
          %v1683 = vmax.f32 %v1678, 0.0
          %v1684 = vpack.c.bf16 %v1681, %v1680
          %v1685 = vpack.c.bf16 %v1683, %v1682
          %v1686 = vld [vmem:[#allocation8] sm:$0xf]
          %v1687 = vld [vmem:[#allocation8 + $0x4] sm:$0xf]
          %v1688 = vld [vmem:[#allocation8 + $0x8] sm:$0xf]
          %v1689 = vld [vmem:[#allocation8 + $0xc] sm:$0xf]
          %v1690 = vld [vmem:[#allocation8 + $0x10] sm:$0xf]
          %v1691 = vld [vmem:[#allocation8 + $0x14] sm:$0xf]
          %v1692 = vld [vmem:[#allocation8 + $0x18] sm:$0xf]
          %v1693 = vld [vmem:[#allocation8 + $0x1c] sm:$0xf]
          %v1694 = vld [vmem:[#allocation8 + $0x20] sm:$0xf]
          %v1695 = vld [vmem:[#allocation8 + $0x24] sm:$0xf]
          %v1696 = vld [vmem:[#allocation8 + $0x28] sm:$0xf]
          %v1697 = vld [vmem:[#allocation8 + $0x2c] sm:$0xf]
          %v1698 = vld [vmem:[#allocation8 + $0x30] sm:$0xf]
          %v1699 = vld [vmem:[#allocation8 + $0x34] sm:$0xf]
          %v1700 = vld [vmem:[#allocation8 + $0x38] sm:$0xf]
          %v1701 = vld [vmem:[#allocation8 + $0x3c] sm:$0xf]
          %v1702 = vld [vmem:[%s31] sm:$0x1]
          %v1704 = vperm.slane %v1702, 0
          %v1722 = vunpack.c.l.b16 %v1686
          %v1723 = vunpack.c.l.b16 %v1687
          %v1724 = vunpack.c.l.b16 %v1688
          %v1725 = vunpack.c.l.b16 %v1689
          %v1726 = vunpack.c.l.b16 %v1690
          %v1727 = vunpack.c.l.b16 %v1691
          %v1728 = vunpack.c.l.b16 %v1692
          %v1729 = vunpack.c.l.b16 %v1693
          %v1730 = vunpack.c.l.b16 %v1694
          %v1731 = vunpack.c.l.b16 %v1695
          %v1732 = vunpack.c.l.b16 %v1696
          %v1733 = vunpack.c.l.b16 %v1697
          %v1734 = vunpack.c.l.b16 %v1698
          %v1735 = vunpack.c.l.b16 %v1699
          %v1736 = vunpack.c.l.b16 %v1700
          %v1737 = vunpack.c.l.b16 %v1701
          %v1738 = vpack.c.b16 %v1723, %v1722
          %v1739 = vpack.c.b16 %v1725, %v1724
          %v1740 = vpack.c.b16 %v1727, %v1726
          %v1741 = vpack.c.b16 %v1729, %v1728
          %v1742 = vpack.c.b16 %v1731, %v1730
          %v1743 = vpack.c.b16 %v1733, %v1732
          %v1744 = vpack.c.b16 %v1735, %v1734
          %v1745 = vpack.c.b16 %v1737, %v1736
          %1754 = vmatpush.bf16.msra.mxu0 %v1745
          %1755 = vmatpush.bf16.msra.mxu0 %v1744
          %1756 = vmatpush.bf16.msra.mxu0 %v1743
          %1757 = vmatpush.bf16.msra.mxu0 %v1742
          %1758 = vmatpush.bf16.msra.mxu0 %v1741
          %1759 = vmatpush.bf16.msra.mxu0 %v1740
          %1760 = vmatpush.bf16.msra.mxu0 %v1739
          %1761 = vmatpush.bf16.msra.mxu0 %v1738
          %1762 = vmatmul.bf16.gmra.mxu0 %v1684
          %v1763 = vpop.f32.mrf.mxu0
          %v1764 = vadd.f32 %v1704, %v1763
          %v1765 = vpop.f32.mrf.mxu0
          %v1766 = vadd.f32 %v1704, %v1765
          %1767 = vmatmul.bf16.gmra.mxu0 %v1685
          %v1768 = vpop.f32.mrf.mxu0
          %v1769 = vadd.f32 %v1704, %v1768
          %v1770 = vpop.f32.mrf.mxu0
          %v1771 = vadd.f32 %v1704, %v1770
          %1772 = vdwg.mxu0
          %v1773 = vld [vmem:[%s33] sm:$0x1]
          %v1774 = vld [vmem:[%s35] sm:$0x1]
          %1775 = vadd.xlane.f32.xlu0 %v1764
          %v1776 = vpop.xlane.xlu0 %1775
          %1777 = vadd.xlane.f32.xlu0 %v1766
          %v1778 = vpop.xlane.xlu0 %1777
          %1779 = vadd.xlane.f32.xlu0 %v1769
          %v1780 = vpop.xlane.xlu0 %1779
          %1781 = vadd.xlane.f32.xlu0 %v1771
          %v1782 = vpop.xlane.xlu0 %1781
          %v1783 = vmul.f32 %v1776, %v1592
          %v1784 = vmul.f32 %v1778, %v1592
          %v1785 = vmul.f32 %v1780, %v1592
          %v1786 = vmul.f32 %v1782, %v1592
          %v1787 = vsub.f32 %v1764, %v1783
          %v1788 = vsub.f32 %v1766, %v1784
          %v1789 = vsub.f32 %v1769, %v1785
          %v1790 = vsub.f32 %v1771, %v1786
          %v1791 = vmul.f32 %v1787, %v1787
          %v1792 = vmul.f32 %v1788, %v1788
          %v1793 = vmul.f32 %v1789, %v1789
          %v1794 = vmul.f32 %v1790, %v1790
          %1795 = vadd.xlane.f32.xlu0 %v1791
          %v1796 = vpop.xlane.xlu0 %1795
          %1797 = vadd.xlane.f32.xlu0 %v1792
          %v1798 = vpop.xlane.xlu0 %1797
          %1799 = vadd.xlane.f32.xlu0 %v1793
          %v1800 = vpop.xlane.xlu0 %1799
          %1801 = vadd.xlane.f32.xlu0 %v1794
          %v1802 = vpop.xlane.xlu0 %1801
          %v1803 = vmul.f32 %v1796, %v1592
          %v1804 = vmul.f32 %v1798, %v1592
          %v1805 = vmul.f32 %v1800, %v1592
          %v1806 = vmul.f32 %v1802, %v1592
          %v1807 = vadd.f32 %v1803, 1e-05
          %v1808 = vadd.f32 %v1804, 1e-05
          %v1809 = vadd.f32 %v1805, 1e-05
          %v1810 = vadd.f32 %v1806, 1e-05
          %v1811 = vrsqrt.pop %v1807
          %v1812 = vmul.f32 %v1811, %v1807
          %v1813 = vmul.f32 %v1812, %v1811
          %v1814 = vmul.f32 0.5, %v1813
          %v1815 = vsub.f32 1.5, %v1814
          %v1816 = vmul.f32 %v1811, %v1815
          %vm1817 = vweird.f32 %v1807
          %vm1818 = vweird.f32 %v1811
          %vm1819 = vmor %vm1817, %vm1818
          %v1820 = vsel %vm1819, %v1811, %v1816
          %v1821 = vrsqrt.pop %v1808
          %v1822 = vmul.f32 %v1821, %v1808
          %v1823 = vmul.f32 %v1822, %v1821
          %v1824 = vmul.f32 0.5, %v1823
          %v1825 = vsub.f32 1.5, %v1824
          %v1826 = vmul.f32 %v1821, %v1825
          %vm1827 = vweird.f32 %v1808
          %vm1828 = vweird.f32 %v1821
          %vm1829 = vmor %vm1827, %vm1828
          %v1830 = vsel %vm1829, %v1821, %v1826
          %v1831 = vrsqrt.pop %v1809
          %v1832 = vmul.f32 %v1831, %v1809
          %v1833 = vmul.f32 %v1832, %v1831
          %v1834 = vmul.f32 0.5, %v1833
          %v1835 = vsub.f32 1.5, %v1834
          %v1836 = vmul.f32 %v1831, %v1835
          %vm1837 = vweird.f32 %v1809
          %vm1838 = vweird.f32 %v1831
          %vm1839 = vmor %vm1837, %vm1838
          %v1840 = vsel %vm1839, %v1831, %v1836
          %v1841 = vrsqrt.pop %v1810
          %v1842 = vmul.f32 %v1841, %v1810
          %v1843 = vmul.f32 %v1842, %v1841
          %v1844 = vmul.f32 0.5, %v1843
          %v1845 = vsub.f32 1.5, %v1844
          %v1846 = vmul.f32 %v1841, %v1845
          %vm1847 = vweird.f32 %v1810
          %vm1848 = vweird.f32 %v1841
          %vm1849 = vmor %vm1847, %vm1848
          %v1850 = vsel %vm1849, %v1841, %v1846
          %v1851 = vmul.f32 %v1787, %v1820
          %v1852 = vmul.f32 %v1788, %v1830
          %v1853 = vmul.f32 %v1789, %v1840
          %v1854 = vmul.f32 %v1790, %v1850
          %v1856 = vperm.slane %v1773, 0
          %v1858 = vmul.f32 %v1851, %v1856
          %v1859 = vmul.f32 %v1852, %v1856
          %v1860 = vmul.f32 %v1853, %v1856
          %v1861 = vmul.f32 %v1854, %v1856
          %v1863 = vperm.slane %v1774, 0
          %v1865 = vadd.f32 %v1858, %v1863
          %v1866 = vadd.f32 %v1859, %v1863
          %v1867 = vadd.f32 %v1860, %v1863
          %v1868 = vadd.f32 %v1861, %v1863
          %1869 = vst [vmem:[#allocation3] sm:$0xff] %v1865
          %1870 = vst [vmem:[#allocation3 + $0x8] sm:$0xff] %v1866
          %1871 = vst [vmem:[#allocation3 + $0x10] sm:$0xff] %v1867
          %1872 = vst [vmem:[#allocation3 + $0x18] sm:$0xff] %v1868
          %v1873 = vlaneseq
          %v1874 = vand.u32 %v1873, 127
          %vm1875 = vcmp.lt.s32.totalorder %v1874, 16
          %v1876 = vld [vmem:[%s5] sm:$0xff]
          %v1877 = vld [vmem:[%s5 + $0x8] sm:$0xff]
          %v1878 = vld [vmem:[%s5 + $0x10] sm:$0xff]
          %v1879 = vld [vmem:[%s5 + $0x18] sm:$0xff]
          %v1880 = vld [vmem:[%s7] sm:$0xff]
          %v1881 = vld [vmem:[%s7 + $0x8] sm:$0xff]
          %v1882 = vld [vmem:[%s7 + $0x10] sm:$0xff]
          %v1883 = vld [vmem:[%s7 + $0x18] sm:$0xff]
          %v1884 = vadd.s32 %v1880, 16
          %v1885 = vadd.s32 %v1881, 16
          %v1886 = vadd.s32 %v1882, 16
          %v1887 = vadd.s32 %v1883, 16
          %1888 = vset.pattern.permute.xlu0 0
          %1889 = vperm.xlu0 %1888, %v1876
          %v1890 = vpop.permute.xlu0 %1889
          %1891 = vset.pattern.permute.xlu0 0
          %1892 = vperm.xlu0 %1891, %v1877
          %v1893 = vpop.permute.xlu0 %1892
          %1894 = vset.pattern.permute.xlu0 0
          %1895 = vperm.xlu0 %1894, %v1878
          %v1896 = vpop.permute.xlu0 %1895
          %1897 = vset.pattern.permute.xlu0 0
          %1898 = vperm.xlu0 %1897, %v1879
          %v1899 = vpop.permute.xlu0 %1898
          %1900 = vset.pattern.permute.xlu0 0
          %1901 = vperm.xlu0 %1900, %v1884
          %v1902 = vpop.permute.xlu0 %1901
          %1903 = vset.pattern.permute.xlu0 0
          %1904 = vperm.xlu0 %1903, %v1885
          %v1905 = vpop.permute.xlu0 %1904
          %1906 = vset.pattern.permute.xlu0 0
          %1907 = vperm.xlu0 %1906, %v1886
          %v1908 = vpop.permute.xlu0 %1907
          %1909 = vset.pattern.permute.xlu0 0
          %1910 = vperm.xlu0 %1909, %v1887
          %v1911 = vpop.permute.xlu0 %1910
          %v1912 = vsel %vm1875, %v1890, %v1902
          %v1913 = vsel %vm1875, %v1893, %v1905
          %v1914 = vsel %vm1875, %v1896, %v1908
          %v1915 = vsel %vm1875, %v1899, %v1911
          %vm1916 = vcmp.eq.s32.totalorder %v1874, %v1912
          %vm1917 = vcmp.eq.s32.totalorder %v1874, %v1913
          %vm1918 = vcmp.eq.s32.totalorder %v1874, %v1914
          %vm1919 = vcmp.eq.s32.totalorder %v1874, %v1915
          %v1920 = vsel %vm1916, 1.0, 0.0
          %v1921 = vsel %vm1917, 1.0, 0.0
          %v1922 = vsel %vm1918, 1.0, 0.0
          %v1923 = vsel %vm1919, 1.0, 0.0
          %v1924 = vpack.c.bf16 %v1920, %v1920
          %v1925 = vpack.c.bf16 %v1921, %v1921
          %v1926 = vpack.c.bf16 %v1922, %v1922
          %v1927 = vpack.c.bf16 %v1923, %v1923
          %vm1928 = vcmask 257024
          %1929 = vst.msk [vmem:[#allocation4] sm:$0xf] %vm1928, %v1924
          %1930 = vst.msk [vmem:[#allocation4 + $0x4] sm:$0xf] %vm1928, %v1925
          %1931 = vst.msk [vmem:[#allocation4 + $0x8] sm:$0xf] %vm1928, %v1926
          %1932 = vst.msk [vmem:[#allocation4 + $0xc] sm:$0xf] %vm1928, %v1927
          %v1933 = vlaneseq
          %v1934 = vshrl.u32 %v1933, 7
          %v1935 = vadd.s32 %v1934, 8
          %v1936 = vld [vmem:[%s9] sm:$0x1]
          %v1937 = vperm.slane %v1936, 0
          %vm1938 = vcmp.eq.s32.totalorder %v1934, %v1937
          %vm1939 = vcmp.eq.s32.totalorder %v1935, %v1937
          %v1940 = vsel %vm1938, 1.0, 0.0
          %v1941 = vsel %vm1939, 1.0, 0.0
          %v1942 = vpack.c.bf16 %v1940, %v1940
          %v1943 = vpack.c.bf16 %v1941, %v1941
          %1944 = vst.msk [vmem:[#allocation5] sm:$0xf] %vm1928, %v1942
          %1945 = vst.msk [vmem:[#allocation5 + $0x4] sm:$0xf] %vm1928, %v1943
        $region204: #{_lambda_.1} parent=163 // pred_fallthru
          _
        %v1946 = vld [vmem:[#allocation2] sm:$0xff]
        %v1947 = vld [vmem:[#allocation2 + $0x8] sm:$0xff]
        %v1948 = vld [vmem:[#allocation3] sm:$0xff]
        %v1949 = vld [vmem:[#allocation3 + $0x8] sm:$0xff]
        %v1950 = vld [vmem:[#allocation3 + $0x10] sm:$0xff]
        %v1951 = vld [vmem:[#allocation3 + $0x18] sm:$0xff]
        %v1952 = vpack.c.bf16 %v1946, %v1946
        %v1953 = vpack.c.bf16 %v1947, %v1947
        %v1954 = vpack.c.bf16 %v1949, %v1948
        %v1955 = vpack.c.bf16 %v1951, %v1950
        %v1956 = vld [vmem:[#allocation4] sm:$0xf]
        %v1957 = vld [vmem:[#allocation4 + $0x4] sm:$0xf]
        %v1958 = vld [vmem:[#allocation4 + $0x8] sm:$0xf]
        %v1959 = vld [vmem:[#allocation4 + $0xc] sm:$0xf]
        %v1960 = vld [vmem:[#allocation5] sm:$0xf]
        %v1961 = vld [vmem:[#allocation5 + $0x4] sm:$0xf]
        %v1962 = vld [vmem:[%s1247] sm:$0xf]
        %v1963 = vld [vmem:[%s1247 + $0x4] sm:$0xf]
        %v1964 = vld [vmem:[%s1247 + $0x8] sm:$0xf]
        %v1965 = vld [vmem:[%s1247 + $0xc] sm:$0xf]
        %v1966 = vld [vmem:[%s1247 + $0x10] sm:$0xf]
        %v1967 = vld [vmem:[%s1247 + $0x14] sm:$0xf]
        %v1968 = vld [vmem:[%s1247 + $0x18] sm:$0xf]
        %v1969 = vld [vmem:[%s1247 + $0x1c] sm:$0xf]
        %v1970 = vld [vmem:[%s1247 + $0x20] sm:$0xf]
        %v1971 = vld [vmem:[%s1247 + $0x24] sm:$0xf]
        %v1972 = vld [vmem:[%s1247 + $0x28] sm:$0xf]
        %v1973 = vld [vmem:[%s1247 + $0x2c] sm:$0xf]
        %v1974 = vld [vmem:[%s1247 + $0x30] sm:$0xf]
        %v1975 = vld [vmem:[%s1247 + $0x34] sm:$0xf]
        %v1976 = vld [vmem:[%s1247 + $0x38] sm:$0xf]
        %v1977 = vld [vmem:[%s1247 + $0x3c] sm:$0xf]
        %v1978 = vld [vmem:[%s1247 + $0x40] sm:$0xf]
        %v1979 = vld [vmem:[%s1247 + $0x44] sm:$0xf]
        %v1980 = vld [vmem:[%s1247 + $0x48] sm:$0xf]
        %v1981 = vld [vmem:[%s1247 + $0x4c] sm:$0xf]
        %v1982 = vld [vmem:[%s1247 + $0x50] sm:$0xf]
        %v1983 = vld [vmem:[%s1247 + $0x54] sm:$0xf]
        %v1984 = vld [vmem:[%s1247 + $0x58] sm:$0xf]
        %v1985 = vld [vmem:[%s1247 + $0x5c] sm:$0xf]
        %v1986 = vld [vmem:[%s1247 + $0x60] sm:$0xf]
        %v1987 = vld [vmem:[%s1247 + $0x64] sm:$0xf]
        %v1988 = vld [vmem:[%s1247 + $0x68] sm:$0xf]
        %v1989 = vld [vmem:[%s1247 + $0x6c] sm:$0xf]
        %v1990 = vld [vmem:[%s1247 + $0x70] sm:$0xf]
        %v1991 = vld [vmem:[%s1247 + $0x74] sm:$0xf]
        %v1992 = vld [vmem:[%s1247 + $0x78] sm:$0xf]
        %v1993 = vld [vmem:[%s1247 + $0x7c] sm:$0xf]
        %v1994 = vld [vmem:[%s1247 + $0x80] sm:$0xf]
        %v1995 = vld [vmem:[%s1247 + $0x84] sm:$0xf]
        %v1996 = vld [vmem:[%s1247 + $0x88] sm:$0xf]
        %v1997 = vld [vmem:[%s1247 + $0x8c] sm:$0xf]
        %v1998 = vld [vmem:[%s1247 + $0x90] sm:$0xf]
        %v1999 = vld [vmem:[%s1247 + $0x94] sm:$0xf]
        %v2000 = vld [vmem:[%s1247 + $0x98] sm:$0xf]
        %v2001 = vld [vmem:[%s1247 + $0x9c] sm:$0xf]
        %v2002 = vld [vmem:[%s1247 + $0xa0] sm:$0xf]
        %v2003 = vld [vmem:[%s1247 + $0xa4] sm:$0xf]
        %v2004 = vld [vmem:[%s1247 + $0xa8] sm:$0xf]
        %v2005 = vld [vmem:[%s1247 + $0xac] sm:$0xf]
        %v2006 = vld [vmem:[%s1247 + $0xb0] sm:$0xf]
        %v2007 = vld [vmem:[%s1247 + $0xb4] sm:$0xf]
        %v2008 = vld [vmem:[%s1247 + $0xb8] sm:$0xf]
        %v2009 = vld [vmem:[%s1247 + $0xbc] sm:$0xf]
        %v2012 = vunpack.c.l.b16 %v1952
        %v2013 = vunpack.c.l.b16 %v1953
        %v2014 = vpack.c.b16 %v2013, %v2012
        %v2032 = vunpack.c.l.b16 %v1978
        %v2033 = vunpack.c.l.b16 %v1979
        %v2034 = vunpack.c.l.b16 %v1980
        %v2035 = vunpack.c.l.b16 %v1981
        %v2036 = vunpack.c.l.b16 %v1982
        %v2037 = vunpack.c.l.b16 %v1983
        %v2038 = vunpack.c.l.b16 %v1984
        %v2039 = vunpack.c.l.b16 %v1985
        %v2040 = vunpack.c.l.b16 %v1986
        %v2041 = vunpack.c.l.b16 %v1987
        %v2042 = vunpack.c.l.b16 %v1988
        %v2043 = vunpack.c.l.b16 %v1989
        %v2044 = vunpack.c.l.b16 %v1990
        %v2045 = vunpack.c.l.b16 %v1991
        %v2046 = vunpack.c.l.b16 %v1992
        %v2047 = vunpack.c.l.b16 %v1993
        %v2048 = vpack.c.b16 %v2033, %v2032
        %v2049 = vpack.c.b16 %v2035, %v2034
        %v2050 = vpack.c.b16 %v2037, %v2036
        %v2051 = vpack.c.b16 %v2039, %v2038
        %v2052 = vpack.c.b16 %v2041, %v2040
        %v2053 = vpack.c.b16 %v2043, %v2042
        %v2054 = vpack.c.b16 %v2045, %v2044
        %v2055 = vpack.c.b16 %v2047, %v2046
        %2064 = vmatpush.bf16.msra.mxu0 %v2055
        %2065 = vmatpush.bf16.msra.mxu0 %v2054
        %2066 = vmatpush.bf16.msra.mxu0 %v2053
        %2067 = vmatpush.bf16.msra.mxu0 %v2052
        %2068 = vmatpush.bf16.msra.mxu0 %v2051
        %2069 = vmatpush.bf16.msra.mxu0 %v2050
        %2070 = vmatpush.bf16.msra.mxu0 %v2049
        %2071 = vmatpush.bf16.msra.mxu0 %v2048
        %2072 = vmatmul.bf16.gmra.mxu0 %v2014
        %v2073 = vpop.f32.mrf.mxu0
        %v2074 = vadd.f32 0.0, %v2073
        %v2075 = vpop.f32.mrf.mxu0
        %v2076 = vadd.f32 0.0, %v2075
        %2077 = vdwg.mxu0
        %v2094 = vunpack.c.l.b16 %v1994
        %v2095 = vunpack.c.l.b16 %v1995
        %v2096 = vunpack.c.l.b16 %v1996
        %v2097 = vunpack.c.l.b16 %v1997
        %v2098 = vunpack.c.l.b16 %v1998
        %v2099 = vunpack.c.l.b16 %v1999
        %v2100 = vunpack.c.l.b16 %v2000
        %v2101 = vunpack.c.l.b16 %v2001
        %v2102 = vunpack.c.l.b16 %v2002
        %v2103 = vunpack.c.l.b16 %v2003
        %v2104 = vunpack.c.l.b16 %v2004
        %v2105 = vunpack.c.l.b16 %v2005
        %v2106 = vunpack.c.l.b16 %v2006
        %v2107 = vunpack.c.l.b16 %v2007
        %v2108 = vunpack.c.l.b16 %v2008
        %v2109 = vunpack.c.l.b16 %v2009
        %v2110 = vpack.c.b16 %v2095, %v2094
        %v2111 = vpack.c.b16 %v2097, %v2096
        %v2112 = vpack.c.b16 %v2099, %v2098
        %v2113 = vpack.c.b16 %v2101, %v2100
        %v2114 = vpack.c.b16 %v2103, %v2102
        %v2115 = vpack.c.b16 %v2105, %v2104
        %v2116 = vpack.c.b16 %v2107, %v2106
        %v2117 = vpack.c.b16 %v2109, %v2108
        %2126 = vmatpush.bf16.msra.mxu0 %v2117
        %2127 = vmatpush.bf16.msra.mxu0 %v2116
        %2128 = vmatpush.bf16.msra.mxu0 %v2115
        %2129 = vmatpush.bf16.msra.mxu0 %v2114
        %2130 = vmatpush.bf16.msra.mxu0 %v2113
        %2131 = vmatpush.bf16.msra.mxu0 %v2112
        %2132 = vmatpush.bf16.msra.mxu0 %v2111
        %2133 = vmatpush.bf16.msra.mxu0 %v2110
        %2134 = vmatmul.bf16.gmra.mxu0 %v2014
        %v2135 = vpop.f32.mrf.mxu0
        %v2136 = vadd.f32 0.0, %v2135
        %v2137 = vpop.f32.mrf.mxu0
        %v2138 = vadd.f32 0.0, %v2137
        %2139 = vdwg.mxu0
        %v2140 = vpack.c.bf16 %v2076, %v2074
        %v2141 = vpack.c.bf16 %v2138, %v2136
        %v2146 = vunpack.c.l.b16 %v1956
        %v2147 = vunpack.c.l.b16 %v1957
        %v2148 = vunpack.c.l.b16 %v1958
        %v2149 = vunpack.c.l.b16 %v1959
        %v2150 = vpack.c.b16 %v2147, %v2146
        %v2151 = vpack.c.b16 %v2149, %v2148
        %vm2152 = vcmask 261120
        %v2154 = vsel %vm2152, %v2150, 0
        %v2157 = vsel %vm2152, %v2151, 0
        %2159 = vmatpush.bf16.msra.mxu0 0
        %2160 = vmatpush.bf16.msra.mxu0 0
        %2161 = vmatpush.bf16.msra.mxu0 0
        %2162 = vmatpush.bf16.msra.mxu0 0
        %2163 = vmatpush.bf16.msra.mxu0 0
        %2164 = vmatpush.bf16.msra.mxu0 0
        %2165 = vmatpush.bf16.msra.mxu0 %v2141
        %2166 = vmatpush.bf16.msra.mxu0 %v2140
        %2167 = vmatmul.bf16.gmra.mxu0 %v2154
        %v2168 = vpop.f32.mrf.mxu0
        %v2169 = vadd.f32 0.0, %v2168
        %v2170 = vpop.f32.mrf.mxu0
        %v2171 = vadd.f32 0.0, %v2170
        %2172 = vmatmul.bf16.gmra.mxu0 %v2157
        %v2173 = vpop.f32.mrf.mxu0
        %v2174 = vadd.f32 0.0, %v2173
        %v2175 = vpop.f32.mrf.mxu0
        %v2176 = vadd.f32 0.0, %v2175
        %2177 = vdwg.mxu0
        %v2194 = vunpack.c.l.b16 %v1962
        %v2195 = vunpack.c.l.b16 %v1963
        %v2196 = vunpack.c.l.b16 %v1964
        %v2197 = vunpack.c.l.b16 %v1965
        %v2198 = vunpack.c.l.b16 %v1966
        %v2199 = vunpack.c.l.b16 %v1967
        %v2200 = vunpack.c.l.b16 %v1968
        %v2201 = vunpack.c.l.b16 %v1969
        %v2202 = vunpack.c.l.b16 %v1970
        %v2203 = vunpack.c.l.b16 %v1971
        %v2204 = vunpack.c.l.b16 %v1972
        %v2205 = vunpack.c.l.b16 %v1973
        %v2206 = vunpack.c.l.b16 %v1974
        %v2207 = vunpack.c.l.b16 %v1975
        %v2208 = vunpack.c.l.b16 %v1976
        %v2209 = vunpack.c.l.b16 %v1977
        %v2210 = vpack.c.b16 %v2195, %v2194
        %v2211 = vpack.c.b16 %v2197, %v2196
        %v2212 = vpack.c.b16 %v2199, %v2198
        %v2213 = vpack.c.b16 %v2201, %v2200
        %v2214 = vpack.c.b16 %v2203, %v2202
        %v2215 = vpack.c.b16 %v2205, %v2204
        %v2216 = vpack.c.b16 %v2207, %v2206
        %v2217 = vpack.c.b16 %v2209, %v2208
        %2226 = vmatpush.bf16.msra.mxu0 %v2217
        %2227 = vmatpush.bf16.msra.mxu0 %v2216
        %2228 = vmatpush.bf16.msra.mxu0 %v2215
        %2229 = vmatpush.bf16.msra.mxu0 %v2214
        %2230 = vmatpush.bf16.msra.mxu0 %v2213
        %2231 = vmatpush.bf16.msra.mxu0 %v2212
        %2232 = vmatpush.bf16.msra.mxu0 %v2211
        %2233 = vmatpush.bf16.msra.mxu0 %v2210
        %2234 = vmatmul.bf16.gmra.mxu0 %v1954
        %v2235 = vpop.f32.mrf.mxu0
        %v2236 = vadd.f32 %v2169, %v2235
        %v2237 = vpop.f32.mrf.mxu0
        %v2238 = vadd.f32 %v2171, %v2237
        %2239 = vmatmul.bf16.gmra.mxu0 %v1955
        %v2240 = vpop.f32.mrf.mxu0
        %v2241 = vadd.f32 %v2174, %v2240
        %v2242 = vpop.f32.mrf.mxu0
        %v2243 = vadd.f32 %v2176, %v2242
        %2244 = vdwg.mxu0
        %v2245 = vld [vmem:[%s1438] sm:$0x1]
        %v2247 = vperm.slane %v2245, 0
        %v2249 = vadd.f32 %v2236, %v2247
        %v2250 = vadd.f32 %v2238, %v2247
        %v2251 = vadd.f32 %v2241, %v2247
        %v2252 = vadd.f32 %v2243, %v2247
        %v2253 = vmax.f32 %v2249, 0.0
        %v2254 = vmax.f32 %v2250, 0.0
        %v2255 = vmax.f32 %v2251, 0.0
        %v2256 = vmax.f32 %v2252, 0.0
        %v2257 = vpack.c.bf16 %v2254, %v2253
        %v2258 = vpack.c.bf16 %v2256, %v2255
        %v2259 = vld [vmem:[%s1257] sm:$0xf]
        %v2260 = vld [vmem:[%s1257 + $0x4] sm:$0xf]
        %v2261 = vld [vmem:[%s1257 + $0x8] sm:$0xf]
        %v2262 = vld [vmem:[%s1257 + $0xc] sm:$0xf]
        %v2263 = vld [vmem:[%s1257 + $0x10] sm:$0xf]
        %v2264 = vld [vmem:[%s1257 + $0x14] sm:$0xf]
        %v2265 = vld [vmem:[%s1257 + $0x18] sm:$0xf]
        %v2266 = vld [vmem:[%s1257 + $0x1c] sm:$0xf]
        %v2267 = vld [vmem:[%s1257 + $0x20] sm:$0xf]
        %v2268 = vld [vmem:[%s1257 + $0x24] sm:$0xf]
        %v2269 = vld [vmem:[%s1257 + $0x28] sm:$0xf]
        %v2270 = vld [vmem:[%s1257 + $0x2c] sm:$0xf]
        %v2271 = vld [vmem:[%s1257 + $0x30] sm:$0xf]
        %v2272 = vld [vmem:[%s1257 + $0x34] sm:$0xf]
        %v2273 = vld [vmem:[%s1257 + $0x38] sm:$0xf]
        %v2274 = vld [vmem:[%s1257 + $0x3c] sm:$0xf]
        %v2275 = vld [vmem:[%s1441] sm:$0x1]
        %v2277 = vperm.slane %v2275, 0
        %v2295 = vunpack.c.l.b16 %v2259
        %v2296 = vunpack.c.l.b16 %v2260
        %v2297 = vunpack.c.l.b16 %v2261
        %v2298 = vunpack.c.l.b16 %v2262
        %v2299 = vunpack.c.l.b16 %v2263
        %v2300 = vunpack.c.l.b16 %v2264
        %v2301 = vunpack.c.l.b16 %v2265
        %v2302 = vunpack.c.l.b16 %v2266
        %v2303 = vunpack.c.l.b16 %v2267
        %v2304 = vunpack.c.l.b16 %v2268
        %v2305 = vunpack.c.l.b16 %v2269
        %v2306 = vunpack.c.l.b16 %v2270
        %v2307 = vunpack.c.l.b16 %v2271
        %v2308 = vunpack.c.l.b16 %v2272
        %v2309 = vunpack.c.l.b16 %v2273
        %v2310 = vunpack.c.l.b16 %v2274
        %v2311 = vpack.c.b16 %v2296, %v2295
        %v2312 = vpack.c.b16 %v2298, %v2297
        %v2313 = vpack.c.b16 %v2300, %v2299
        %v2314 = vpack.c.b16 %v2302, %v2301
        %v2315 = vpack.c.b16 %v2304, %v2303
        %v2316 = vpack.c.b16 %v2306, %v2305
        %v2317 = vpack.c.b16 %v2308, %v2307
        %v2318 = vpack.c.b16 %v2310, %v2309
        %2327 = vmatpush.bf16.msra.mxu0 %v2318
        %2328 = vmatpush.bf16.msra.mxu0 %v2317
        %2329 = vmatpush.bf16.msra.mxu0 %v2316
        %2330 = vmatpush.bf16.msra.mxu0 %v2315
        %2331 = vmatpush.bf16.msra.mxu0 %v2314
        %2332 = vmatpush.bf16.msra.mxu0 %v2313
        %2333 = vmatpush.bf16.msra.mxu0 %v2312
        %2334 = vmatpush.bf16.msra.mxu0 %v2311
        %2335 = vmatmul.bf16.gmra.mxu0 %v2257
        %v2336 = vpop.f32.mrf.mxu0
        %v2337 = vadd.f32 %v2277, %v2336
        %v2338 = vpop.f32.mrf.mxu0
        %v2339 = vadd.f32 %v2277, %v2338
        %2340 = vmatmul.bf16.gmra.mxu0 %v2258
        %v2341 = vpop.f32.mrf.mxu0
        %v2342 = vadd.f32 %v2277, %v2341
        %v2343 = vpop.f32.mrf.mxu0
        %v2344 = vadd.f32 %v2277, %v2343
        %2345 = vdwg.mxu0
        %v2346 = vld [vmem:[%s1444] sm:$0x1]
        %v2347 = vld [vmem:[%s1447] sm:$0x1]
        %2348 = vadd.xlane.f32.xlu0 %v2337
        %v2349 = vpop.xlane.xlu0 %2348
        %2350 = vadd.xlane.f32.xlu0 %v2339
        %v2351 = vpop.xlane.xlu0 %2350
        %2352 = vadd.xlane.f32.xlu0 %v2342
        %v2353 = vpop.xlane.xlu0 %2352
        %2354 = vadd.xlane.f32.xlu0 %v2344
        %v2355 = vpop.xlane.xlu0 %2354
        %v2356 = vrcp.pop 128.0
        %v2357 = vmul.f32 128.0, %v2356
        %v2358 = vsub.f32 1.0, %v2357
        %v2359 = vmul.f32 %v2356, %v2358
        %v2360 = vadd.f32 %v2356, %v2359
        %vm2361 = vweird.f32 %v2356
        %v2362 = vsel %vm2361, %v2356, %v2360
        %v2363 = vmul.f32 %v2349, %v2362
        %v2364 = vmul.f32 %v2351, %v2362
        %v2365 = vmul.f32 %v2353, %v2362
        %v2366 = vmul.f32 %v2355, %v2362
        %v2367 = vsub.f32 %v2337, %v2363
        %v2368 = vsub.f32 %v2339, %v2364
        %v2369 = vsub.f32 %v2342, %v2365
        %v2370 = vsub.f32 %v2344, %v2366
        %v2371 = vmul.f32 %v2367, %v2367
        %v2372 = vmul.f32 %v2368, %v2368
        %v2373 = vmul.f32 %v2369, %v2369
        %v2374 = vmul.f32 %v2370, %v2370
        %2375 = vadd.xlane.f32.xlu0 %v2371
        %v2376 = vpop.xlane.xlu0 %2375
        %2377 = vadd.xlane.f32.xlu0 %v2372
        %v2378 = vpop.xlane.xlu0 %2377
        %2379 = vadd.xlane.f32.xlu0 %v2373
        %v2380 = vpop.xlane.xlu0 %2379
        %2381 = vadd.xlane.f32.xlu0 %v2374
        %v2382 = vpop.xlane.xlu0 %2381
        %v2383 = vmul.f32 %v2376, %v2362
        %v2384 = vmul.f32 %v2378, %v2362
        %v2385 = vmul.f32 %v2380, %v2362
        %v2386 = vmul.f32 %v2382, %v2362
        %v2387 = vadd.f32 %v2383, 1e-05
        %v2388 = vadd.f32 %v2384, 1e-05
        %v2389 = vadd.f32 %v2385, 1e-05
        %v2390 = vadd.f32 %v2386, 1e-05
        %v2391 = vrsqrt.pop %v2387
        %v2392 = vmul.f32 %v2391, %v2387
        %v2393 = vmul.f32 %v2392, %v2391
        %v2394 = vmul.f32 0.5, %v2393
        %v2395 = vsub.f32 1.5, %v2394
        %v2396 = vmul.f32 %v2391, %v2395
        %vm2397 = vweird.f32 %v2387
        %vm2398 = vweird.f32 %v2391
        %vm2399 = vmor %vm2397, %vm2398
        %v2400 = vsel %vm2399, %v2391, %v2396
        %v2401 = vrsqrt.pop %v2388
        %v2402 = vmul.f32 %v2401, %v2388
        %v2403 = vmul.f32 %v2402, %v2401
        %v2404 = vmul.f32 0.5, %v2403
        %v2405 = vsub.f32 1.5, %v2404
        %v2406 = vmul.f32 %v2401, %v2405
        %vm2407 = vweird.f32 %v2388
        %vm2408 = vweird.f32 %v2401
        %vm2409 = vmor %vm2407, %vm2408
        %v2410 = vsel %vm2409, %v2401, %v2406
        %v2411 = vrsqrt.pop %v2389
        %v2412 = vmul.f32 %v2411, %v2389
        %v2413 = vmul.f32 %v2412, %v2411
        %v2414 = vmul.f32 0.5, %v2413
        %v2415 = vsub.f32 1.5, %v2414
        %v2416 = vmul.f32 %v2411, %v2415
        %vm2417 = vweird.f32 %v2389
        %vm2418 = vweird.f32 %v2411
        %vm2419 = vmor %vm2417, %vm2418
        %v2420 = vsel %vm2419, %v2411, %v2416
        %v2421 = vrsqrt.pop %v2390
        %v2422 = vmul.f32 %v2421, %v2390
        %v2423 = vmul.f32 %v2422, %v2421
        %v2424 = vmul.f32 0.5, %v2423
        %v2425 = vsub.f32 1.5, %v2424
        %v2426 = vmul.f32 %v2421, %v2425
        %vm2427 = vweird.f32 %v2390
        %vm2428 = vweird.f32 %v2421
        %vm2429 = vmor %vm2427, %vm2428
        %v2430 = vsel %vm2429, %v2421, %v2426
        %v2431 = vmul.f32 %v2367, %v2400
        %v2432 = vmul.f32 %v2368, %v2410
        %v2433 = vmul.f32 %v2369, %v2420
        %v2434 = vmul.f32 %v2370, %v2430
        %v2436 = vperm.slane %v2346, 0
        %v2438 = vmul.f32 %v2431, %v2436
        %v2439 = vmul.f32 %v2432, %v2436
        %v2440 = vmul.f32 %v2433, %v2436
        %v2441 = vmul.f32 %v2434, %v2436
        %v2443 = vperm.slane %v2347, 0
        %v2445 = vadd.f32 %v2438, %v2443
        %v2446 = vadd.f32 %v2439, %v2443
        %v2447 = vadd.f32 %v2440, %v2443
        %v2448 = vadd.f32 %v2441, %v2443
        %v2449 = vadd.f32 %v1948, %v2445
        %v2450 = vadd.f32 %v1949, %v2446
        %v2451 = vadd.f32 %v1950, %v2447
        %v2452 = vadd.f32 %v1951, %v2448
        %2453 = vst [vmem:[#allocation3] sm:$0xff] %v2449
        %2454 = vst [vmem:[#allocation3 + $0x8] sm:$0xff] %v2450
        %2455 = vst [vmem:[#allocation3 + $0x10] sm:$0xff] %v2451
        %2456 = vst [vmem:[#allocation3 + $0x18] sm:$0xff] %v2452
        %v2457 = vld [vmem:[%s11] sm:$0xff]
        %v2458 = vld [vmem:[%s11 + $0x8] sm:$0xff]
        %v2459 = vld [vmem:[%s11 + $0x10] sm:$0xff]
        %v2460 = vld [vmem:[%s11 + $0x18] sm:$0xff]
        %2462 = vset.pattern.permute.xlu0 0
        %2463 = vperm.xlu0 %2462, %v2457
        %v2464 = vpop.permute.xlu0 %2463
        %2467 = vset.pattern.permute.xlu0 0
        %2468 = vperm.xlu0 %2467, %v2458
        %v2469 = vpop.permute.xlu0 %2468
        %2472 = vset.pattern.permute.xlu0 0
        %2473 = vperm.xlu0 %2472, %v2459
        %v2474 = vpop.permute.xlu0 %2473
        %2477 = vset.pattern.permute.xlu0 0
        %2478 = vperm.xlu0 %2477, %v2460
        %v2479 = vpop.permute.xlu0 %2478
        %v2481 = vmul.f32 %v2464, %v2449
        %v2482 = vmul.f32 %v2469, %v2450
        %v2483 = vmul.f32 %v2474, %v2451
        %v2484 = vmul.f32 %v2479, %v2452
        %v2485 = vpack.c.bf16 %v2482, %v2481
        %v2486 = vpack.c.bf16 %v2484, %v2483
        %v2489 = vunpack.c.l.b16 %v1960
        %v2490 = vunpack.c.l.b16 %v1961
        %v2491 = vpack.c.b16 %v2490, %v2489
        %v2493 = vsel %vm2152, %v2491, 0
        %2495 = vmatpush.bf16.msra.mxu0 0
        %2496 = vmatpush.bf16.msra.mxu0 0
        %2497 = vmatpush.bf16.msra.mxu0 0
        %2498 = vmatpush.bf16.msra.mxu0 0
        %2499 = vmatpush.bf16.msra.mxu0 0
        %2500 = vmatpush.bf16.msra.mxu0 0
        %2501 = vmatpush.bf16.msra.mxu0 %v2486
        %2502 = vmatpush.bf16.msra.mxu0 %v2485
        %2503 = vmatmul.bf16.gmra.mxu0 %v2493
        %v2504 = vpop.f32.mrf.mxu0
        %v2505 = vadd.f32 0.0, %v2504
        %v2506 = vpop.f32.mrf.mxu0
        %v2507 = vadd.f32 0.0, %v2506
        %2508 = vdwg.mxu0
        %v2509 = vpack.c.bf16 %v2505, %v2505
        %v2510 = vpack.c.bf16 %v2507, %v2507
        %v2513 = vunpack.c.l.b16 %v2509
        %v2514 = vunpack.c.l.b16 %v2510
        %v2515 = vpack.c.b16 %v2514, %v2513
        %v2517 = vld [vmem:[%s1267] sm:$0xf]
        %v2518 = vld [vmem:[%s1267 + $0x4] sm:$0xf]
        %v2519 = vld [vmem:[%s1267 + $0x8] sm:$0xf]
        %v2520 = vld [vmem:[%s1267 + $0xc] sm:$0xf]
        %v2521 = vld [vmem:[%s1267 + $0x10] sm:$0xf]
        %v2522 = vld [vmem:[%s1267 + $0x14] sm:$0xf]
        %v2523 = vld [vmem:[%s1267 + $0x18] sm:$0xf]
        %v2524 = vld [vmem:[%s1267 + $0x1c] sm:$0xf]
        %v2525 = vld [vmem:[%s1267 + $0x20] sm:$0xf]
        %v2526 = vld [vmem:[%s1267 + $0x24] sm:$0xf]
        %v2527 = vld [vmem:[%s1267 + $0x28] sm:$0xf]
        %v2528 = vld [vmem:[%s1267 + $0x2c] sm:$0xf]
        %v2529 = vld [vmem:[%s1267 + $0x30] sm:$0xf]
        %v2530 = vld [vmem:[%s1267 + $0x34] sm:$0xf]
        %v2531 = vld [vmem:[%s1267 + $0x38] sm:$0xf]
        %v2532 = vld [vmem:[%s1267 + $0x3c] sm:$0xf]
        %v2533 = vld [vmem:[%s1267 + $0x40] sm:$0xf]
        %v2534 = vld [vmem:[%s1267 + $0x44] sm:$0xf]
        %v2535 = vld [vmem:[%s1267 + $0x48] sm:$0xf]
        %v2536 = vld [vmem:[%s1267 + $0x4c] sm:$0xf]
        %v2537 = vld [vmem:[%s1267 + $0x50] sm:$0xf]
        %v2538 = vld [vmem:[%s1267 + $0x54] sm:$0xf]
        %v2539 = vld [vmem:[%s1267 + $0x58] sm:$0xf]
        %v2540 = vld [vmem:[%s1267 + $0x5c] sm:$0xf]
        %v2541 = vld [vmem:[%s1267 + $0x60] sm:$0xf]
        %v2542 = vld [vmem:[%s1267 + $0x64] sm:$0xf]
        %v2543 = vld [vmem:[%s1267 + $0x68] sm:$0xf]
        %v2544 = vld [vmem:[%s1267 + $0x6c] sm:$0xf]
        %v2545 = vld [vmem:[%s1267 + $0x70] sm:$0xf]
        %v2546 = vld [vmem:[%s1267 + $0x74] sm:$0xf]
        %v2547 = vld [vmem:[%s1267 + $0x78] sm:$0xf]
        %v2548 = vld [vmem:[%s1267 + $0x7c] sm:$0xf]
        %v2549 = vld [vmem:[%s1450] sm:$0x1]
        %v2551 = vperm.slane %v2549, 0
        %v2585 = vunpack.c.l.b16 %v2517
        %v2586 = vunpack.c.l.b16 %v2518
        %v2587 = vunpack.c.l.b16 %v2519
        %v2588 = vunpack.c.l.b16 %v2520
        %v2589 = vunpack.c.l.b16 %v2521
        %v2590 = vunpack.c.l.b16 %v2522
        %v2591 = vunpack.c.l.b16 %v2523
        %v2592 = vunpack.c.l.b16 %v2524
        %v2593 = vunpack.c.l.b16 %v2525
        %v2594 = vunpack.c.l.b16 %v2526
        %v2595 = vunpack.c.l.b16 %v2527
        %v2596 = vunpack.c.l.b16 %v2528
        %v2597 = vunpack.c.l.b16 %v2529
        %v2598 = vunpack.c.l.b16 %v2530
        %v2599 = vunpack.c.l.b16 %v2531
        %v2600 = vunpack.c.l.b16 %v2532
        %v2601 = vunpack.c.l.b16 %v2533
        %v2602 = vunpack.c.l.b16 %v2534
        %v2603 = vunpack.c.l.b16 %v2535
        %v2604 = vunpack.c.l.b16 %v2536
        %v2605 = vunpack.c.l.b16 %v2537
        %v2606 = vunpack.c.l.b16 %v2538
        %v2607 = vunpack.c.l.b16 %v2539
        %v2608 = vunpack.c.l.b16 %v2540
        %v2609 = vunpack.c.l.b16 %v2541
        %v2610 = vunpack.c.l.b16 %v2542
        %v2611 = vunpack.c.l.b16 %v2543
        %v2612 = vunpack.c.l.b16 %v2544
        %v2613 = vunpack.c.l.b16 %v2545
        %v2614 = vunpack.c.l.b16 %v2546
        %v2615 = vunpack.c.l.b16 %v2547
        %v2616 = vunpack.c.l.b16 %v2548
        %v2617 = vpack.c.b16 %v2586, %v2585
        %v2618 = vpack.c.b16 %v2588, %v2587
        %v2619 = vpack.c.b16 %v2590, %v2589
        %v2620 = vpack.c.b16 %v2592, %v2591
        %v2621 = vpack.c.b16 %v2594, %v2593
        %v2622 = vpack.c.b16 %v2596, %v2595
        %v2623 = vpack.c.b16 %v2598, %v2597
        %v2624 = vpack.c.b16 %v2600, %v2599
        %v2625 = vpack.c.b16 %v2602, %v2601
        %v2626 = vpack.c.b16 %v2604, %v2603
        %v2627 = vpack.c.b16 %v2606, %v2605
        %v2628 = vpack.c.b16 %v2608, %v2607
        %v2629 = vpack.c.b16 %v2610, %v2609
        %v2630 = vpack.c.b16 %v2612, %v2611
        %v2631 = vpack.c.b16 %v2614, %v2613
        %v2632 = vpack.c.b16 %v2616, %v2615
        %2649 = vmatpush.bf16.msra.mxu0 %v2624
        %2650 = vmatpush.bf16.msra.mxu0 %v2623
        %2651 = vmatpush.bf16.msra.mxu0 %v2622
        %2652 = vmatpush.bf16.msra.mxu0 %v2621
        %2653 = vmatpush.bf16.msra.mxu0 %v2620
        %2654 = vmatpush.bf16.msra.mxu0 %v2619
        %2655 = vmatpush.bf16.msra.mxu0 %v2618
        %2656 = vmatpush.bf16.msra.mxu0 %v2617
        %2657 = vmatmul.bf16.gmra.mxu0 %v2014
        %v2658 = vpop.f32.mrf.mxu0
        %v2659 = vadd.f32 %v2551, %v2658
        %v2660 = vpop.f32.mrf.mxu0
        %v2661 = vadd.f32 %v2551, %v2660
        %2662 = vdwg.mxu0
        %2663 = vmatpush.bf16.msra.mxu0 %v2632
        %2664 = vmatpush.bf16.msra.mxu0 %v2631
        %2665 = vmatpush.bf16.msra.mxu0 %v2630
        %2666 = vmatpush.bf16.msra.mxu0 %v2629
        %2667 = vmatpush.bf16.msra.mxu0 %v2628
        %2668 = vmatpush.bf16.msra.mxu0 %v2627
        %2669 = vmatpush.bf16.msra.mxu0 %v2626
        %2670 = vmatpush.bf16.msra.mxu0 %v2625
        %2671 = vmatmul.bf16.gmra.mxu0 %v2515
        %v2672 = vpop.f32.mrf.mxu0
        %v2673 = vadd.f32 %v2659, %v2672
        %v2674 = vpop.f32.mrf.mxu0
        %v2675 = vadd.f32 %v2661, %v2674
        %2676 = vdwg.mxu0
        %v2677 = vmax.f32 %v2673, 0.0
        %v2678 = vmax.f32 %v2675, 0.0
        %v2679 = vpack.c.bf16 %v2678, %v2677
        %v2680 = vld [vmem:[%s1277] sm:$0xf]
        %v2681 = vld [vmem:[%s1277 + $0x4] sm:$0xf]
        %v2682 = vld [vmem:[%s1277 + $0x8] sm:$0xf]
        %v2683 = vld [vmem:[%s1277 + $0xc] sm:$0xf]
        %v2684 = vld [vmem:[%s1277 + $0x10] sm:$0xf]
        %v2685 = vld [vmem:[%s1277 + $0x14] sm:$0xf]
        %v2686 = vld [vmem:[%s1277 + $0x18] sm:$0xf]
        %v2687 = vld [vmem:[%s1277 + $0x1c] sm:$0xf]
        %v2688 = vld [vmem:[%s1277 + $0x20] sm:$0xf]
        %v2689 = vld [vmem:[%s1277 + $0x24] sm:$0xf]
        %v2690 = vld [vmem:[%s1277 + $0x28] sm:$0xf]
        %v2691 = vld [vmem:[%s1277 + $0x2c] sm:$0xf]
        %v2692 = vld [vmem:[%s1277 + $0x30] sm:$0xf]
        %v2693 = vld [vmem:[%s1277 + $0x34] sm:$0xf]
        %v2694 = vld [vmem:[%s1277 + $0x38] sm:$0xf]
        %v2695 = vld [vmem:[%s1277 + $0x3c] sm:$0xf]
        %v2696 = vld [vmem:[%s1453] sm:$0x1]
        %v2698 = vperm.slane %v2696, 0
        %v2716 = vunpack.c.l.b16 %v2680
        %v2717 = vunpack.c.l.b16 %v2681
        %v2718 = vunpack.c.l.b16 %v2682
        %v2719 = vunpack.c.l.b16 %v2683
        %v2720 = vunpack.c.l.b16 %v2684
        %v2721 = vunpack.c.l.b16 %v2685
        %v2722 = vunpack.c.l.b16 %v2686
        %v2723 = vunpack.c.l.b16 %v2687
        %v2724 = vunpack.c.l.b16 %v2688
        %v2725 = vunpack.c.l.b16 %v2689
        %v2726 = vunpack.c.l.b16 %v2690
        %v2727 = vunpack.c.l.b16 %v2691
        %v2728 = vunpack.c.l.b16 %v2692
        %v2729 = vunpack.c.l.b16 %v2693
        %v2730 = vunpack.c.l.b16 %v2694
        %v2731 = vunpack.c.l.b16 %v2695
        %v2732 = vpack.c.b16 %v2717, %v2716
        %v2733 = vpack.c.b16 %v2719, %v2718
        %v2734 = vpack.c.b16 %v2721, %v2720
        %v2735 = vpack.c.b16 %v2723, %v2722
        %v2736 = vpack.c.b16 %v2725, %v2724
        %v2737 = vpack.c.b16 %v2727, %v2726
        %v2738 = vpack.c.b16 %v2729, %v2728
        %v2739 = vpack.c.b16 %v2731, %v2730
        %2748 = vmatpush.bf16.msra.mxu0 %v2739
        %2749 = vmatpush.bf16.msra.mxu0 %v2738
        %2750 = vmatpush.bf16.msra.mxu0 %v2737
        %2751 = vmatpush.bf16.msra.mxu0 %v2736
        %2752 = vmatpush.bf16.msra.mxu0 %v2735
        %2753 = vmatpush.bf16.msra.mxu0 %v2734
        %2754 = vmatpush.bf16.msra.mxu0 %v2733
        %2755 = vmatpush.bf16.msra.mxu0 %v2732
        %2756 = vmatmul.bf16.gmra.mxu0 %v2679
        %v2757 = vpop.f32.mrf.mxu0
        %v2758 = vadd.f32 %v2698, %v2757
        %v2759 = vpop.f32.mrf.mxu0
        %v2760 = vadd.f32 %v2698, %v2759
        %2761 = vdwg.mxu0
        %v2762 = vld [vmem:[%s1456] sm:$0x1]
        %v2763 = vld [vmem:[%s1459] sm:$0x1]
        %2764 = vadd.xlane.f32.xlu0 %v2758
        %v2765 = vpop.xlane.xlu0 %2764
        %2766 = vadd.xlane.f32.xlu0 %v2760
        %v2767 = vpop.xlane.xlu0 %2766
        %v2768 = vmul.f32 %v2765, %v2362
        %v2769 = vmul.f32 %v2767, %v2362
        %v2770 = vsub.f32 %v2758, %v2768
        %v2771 = vsub.f32 %v2760, %v2769
        %v2772 = vmul.f32 %v2770, %v2770
        %v2773 = vmul.f32 %v2771, %v2771
        %2774 = vadd.xlane.f32.xlu0 %v2772
        %v2775 = vpop.xlane.xlu0 %2774
        %2776 = vadd.xlane.f32.xlu0 %v2773
        %v2777 = vpop.xlane.xlu0 %2776
        %v2778 = vmul.f32 %v2775, %v2362
        %v2779 = vmul.f32 %v2777, %v2362
        %v2780 = vadd.f32 %v2778, 1e-05
        %v2781 = vadd.f32 %v2779, 1e-05
        %v2782 = vrsqrt.pop %v2780
        %v2783 = vmul.f32 %v2782, %v2780
        %v2784 = vmul.f32 %v2783, %v2782
        %v2785 = vmul.f32 0.5, %v2784
        %v2786 = vsub.f32 1.5, %v2785
        %v2787 = vmul.f32 %v2782, %v2786
        %vm2788 = vweird.f32 %v2780
        %vm2789 = vweird.f32 %v2782
        %vm2790 = vmor %vm2788, %vm2789
        %v2791 = vsel %vm2790, %v2782, %v2787
        %v2792 = vrsqrt.pop %v2781
        %v2793 = vmul.f32 %v2792, %v2781
        %v2794 = vmul.f32 %v2793, %v2792
        %v2795 = vmul.f32 0.5, %v2794
        %v2796 = vsub.f32 1.5, %v2795
        %v2797 = vmul.f32 %v2792, %v2796
        %vm2798 = vweird.f32 %v2781
        %vm2799 = vweird.f32 %v2792
        %vm2800 = vmor %vm2798, %vm2799
        %v2801 = vsel %vm2800, %v2792, %v2797
        %v2802 = vmul.f32 %v2770, %v2791
        %v2803 = vmul.f32 %v2771, %v2801
        %v2805 = vperm.slane %v2762, 0
        %v2807 = vmul.f32 %v2802, %v2805
        %v2808 = vmul.f32 %v2803, %v2805
        %v2810 = vperm.slane %v2763, 0
        %v2812 = vadd.f32 %v2807, %v2810
        %v2813 = vadd.f32 %v2808, %v2810
        %v2814 = vadd.f32 %v1946, %v2812
        %v2815 = vadd.f32 %v1947, %v2813
        %v2816 = vpack.c.bf16 %v2815, %v2814
        %v2817 = vld [vmem:[%s1287] sm:$0xff]
        %v2818 = vld [vmem:[%s1287 + $0x8] sm:$0xf]
        %v2819 = vld [vmem:[%s1287 + $0xc] sm:$0xff]
        %v2820 = vld [vmem:[%s1287 + $0x14] sm:$0xf]
        %v2821 = vld [vmem:[%s1287 + $0x18] sm:$0xff]
        %v2822 = vld [vmem:[%s1287 + $0x20] sm:$0xf]
        %v2823 = vld [vmem:[%s1287 + $0x24] sm:$0xff]
        %v2824 = vld [vmem:[%s1287 + $0x2c] sm:$0xf]
        %v2825 = vld [vmem:[%s1287 + $0x30] sm:$0xff]
        %v2826 = vld [vmem:[%s1287 + $0x38] sm:$0xf]
        %v2827 = vld [vmem:[%s1287 + $0x3c] sm:$0xff]
        %v2828 = vld [vmem:[%s1287 + $0x44] sm:$0xf]
        %v2829 = vld [vmem:[%s1287 + $0x48] sm:$0xff]
        %v2830 = vld [vmem:[%s1287 + $0x50] sm:$0xf]
        %v2831 = vld [vmem:[%s1287 + $0x54] sm:$0xff]
        %v2832 = vld [vmem:[%s1287 + $0x5c] sm:$0xf]
        %v2833 = vld [vmem:[%s1287 + $0x60] sm:$0xff]
        %v2834 = vld [vmem:[%s1287 + $0x68] sm:$0xf]
        %v2835 = vld [vmem:[%s1287 + $0x6c] sm:$0xff]
        %v2836 = vld [vmem:[%s1287 + $0x74] sm:$0xf]
        %v2837 = vld [vmem:[%s1287 + $0x78] sm:$0xff]
        %v2838 = vld [vmem:[%s1287 + $0x80] sm:$0xf]
        %v2839 = vld [vmem:[%s1287 + $0x84] sm:$0xff]
        %v2840 = vld [vmem:[%s1287 + $0x8c] sm:$0xf]
        %v2841 = vld [vmem:[%s1287 + $0x90] sm:$0xff]
        %v2842 = vld [vmem:[%s1287 + $0x98] sm:$0xf]
        %v2843 = vld [vmem:[%s1287 + $0x9c] sm:$0xff]
        %v2844 = vld [vmem:[%s1287 + $0xa4] sm:$0xf]
        %v2845 = vld [vmem:[%s1287 + $0xa8] sm:$0xff]
        %v2846 = vld [vmem:[%s1287 + $0xb0] sm:$0xf]
        %v2847 = vld [vmem:[%s1287 + $0xb4] sm:$0xff]
        %v2848 = vld [vmem:[%s1287 + $0xbc] sm:$0xf]
        %v2881 = vunpack.c.l.b16 %v2817
        %v2882 = vunpack.c.h.b16 %v2817
        %v2883 = vunpack.c.l.b16 %v2818
        %v2884 = vunpack.c.l.b16 %v2819
        %v2885 = vunpack.c.h.b16 %v2819
        %v2886 = vunpack.c.l.b16 %v2820
        %v2887 = vunpack.c.l.b16 %v2821
        %v2888 = vunpack.c.h.b16 %v2821
        %v2889 = vunpack.c.l.b16 %v2822
        %v2890 = vunpack.c.l.b16 %v2823
        %v2891 = vunpack.c.h.b16 %v2823
        %v2892 = vunpack.c.l.b16 %v2824
        %v2893 = vunpack.c.l.b16 %v2825
        %v2894 = vunpack.c.h.b16 %v2825
        %v2895 = vunpack.c.l.b16 %v2826
        %v2896 = vunpack.c.l.b16 %v2827
        %v2897 = vunpack.c.h.b16 %v2827
        %v2898 = vunpack.c.l.b16 %v2828
        %v2899 = vunpack.c.l.b16 %v2829
        %v2900 = vunpack.c.h.b16 %v2829
        %v2901 = vunpack.c.l.b16 %v2830
        %v2902 = vunpack.c.l.b16 %v2831
        %v2903 = vunpack.c.h.b16 %v2831
        %v2904 = vunpack.c.l.b16 %v2832
        %v2905 = vunpack.c.l.b16 %v2833
        %v2906 = vunpack.c.h.b16 %v2833
        %v2907 = vunpack.c.l.b16 %v2834
        %v2908 = vunpack.c.l.b16 %v2835
        %v2909 = vunpack.c.h.b16 %v2835
        %v2910 = vunpack.c.l.b16 %v2836
        %v2911 = vunpack.c.l.b16 %v2837
        %v2912 = vunpack.c.h.b16 %v2837
        %v2913 = vunpack.c.l.b16 %v2838
        %v2914 = vunpack.c.l.b16 %v2839
        %v2915 = vunpack.c.h.b16 %v2839
        %v2916 = vunpack.c.l.b16 %v2840
        %v2917 = vunpack.c.l.b16 %v2841
        %v2918 = vunpack.c.h.b16 %v2841
        %v2919 = vunpack.c.l.b16 %v2842
        %v2920 = vunpack.c.l.b16 %v2843
        %v2921 = vunpack.c.h.b16 %v2843
        %v2922 = vunpack.c.l.b16 %v2844
        %v2923 = vunpack.c.l.b16 %v2845
        %v2924 = vunpack.c.h.b16 %v2845
        %v2925 = vunpack.c.l.b16 %v2846
        %v2926 = vunpack.c.l.b16 %v2847
        %v2927 = vunpack.c.h.b16 %v2847
        %v2928 = vunpack.c.l.b16 %v2848
        %v2929 = vpack.c.b16 %v2884, %v2881
        %v2930 = vpack.c.b16 %v2885, %v2882
        %v2931 = vpack.c.b16 %v2886, %v2883
        %v2932 = vpack.c.b16 %v2890, %v2887
        %v2933 = vpack.c.b16 %v2891, %v2888
        %v2934 = vpack.c.b16 %v2892, %v2889
        %v2935 = vpack.c.b16 %v2896, %v2893
        %v2936 = vpack.c.b16 %v2897, %v2894
        %v2937 = vpack.c.b16 %v2898, %v2895
        %v2938 = vpack.c.b16 %v2902, %v2899
        %v2939 = vpack.c.b16 %v2903, %v2900
        %v2940 = vpack.c.b16 %v2904, %v2901
        %v2941 = vpack.c.b16 %v2908, %v2905
        %v2942 = vpack.c.b16 %v2909, %v2906
        %v2943 = vpack.c.b16 %v2910, %v2907
        %v2944 = vpack.c.b16 %v2914, %v2911
        %v2945 = vpack.c.b16 %v2915, %v2912
        %v2946 = vpack.c.b16 %v2916, %v2913
        %v2947 = vpack.c.b16 %v2920, %v2917
        %v2948 = vpack.c.b16 %v2921, %v2918
        %v2949 = vpack.c.b16 %v2922, %v2919
        %v2950 = vpack.c.b16 %v2926, %v2923
        %v2951 = vpack.c.b16 %v2927, %v2924
        %v2952 = vpack.c.b16 %v2928, %v2925
        %2977 = vmatpush.bf16.msra.mxu0 %v2950
        %2978 = vmatpush.bf16.msra.mxu0 %v2947
        %2979 = vmatpush.bf16.msra.mxu0 %v2944
        %2980 = vmatpush.bf16.msra.mxu0 %v2941
        %2981 = vmatpush.bf16.msra.mxu0 %v2938
        %2982 = vmatpush.bf16.msra.mxu0 %v2935
        %2983 = vmatpush.bf16.msra.mxu0 %v2932
        %2984 = vmatpush.bf16.msra.mxu0 %v2929
        %2985 = vmatmul.bf16.gmra.mxu0 %v2816
        %v2986 = vpop.f32.mrf.mxu0
        %v2987 = vadd.f32 0.0, %v2986
        %v2988 = vpop.f32.mrf.mxu0
        %v2989 = vadd.f32 0.0, %v2988
        %2990 = vdwg.mxu0
        %2991 = vmatpush.bf16.msra.mxu0 %v2951
        %2992 = vmatpush.bf16.msra.mxu0 %v2948
        %2993 = vmatpush.bf16.msra.mxu0 %v2945
        %2994 = vmatpush.bf16.msra.mxu0 %v2942
        %2995 = vmatpush.bf16.msra.mxu0 %v2939
        %2996 = vmatpush.bf16.msra.mxu0 %v2936
        %2997 = vmatpush.bf16.msra.mxu0 %v2933
        %2998 = vmatpush.bf16.msra.mxu0 %v2930
        %2999 = vmatmul.bf16.gmra.mxu0 %v2816
        %v3000 = vpop.f32.mrf.mxu0
        %v3001 = vadd.f32 0.0, %v3000
        %v3002 = vpop.f32.mrf.mxu0
        %v3003 = vadd.f32 0.0, %v3002
        %3004 = vdwg.mxu0
        %3005 = vmatpush.bf16.msra.mxu0 %v2952
        %3006 = vmatpush.bf16.msra.mxu0 %v2949
        %3007 = vmatpush.bf16.msra.mxu0 %v2946
        %3008 = vmatpush.bf16.msra.mxu0 %v2943
        %3009 = vmatpush.bf16.msra.mxu0 %v2940
        %3010 = vmatpush.bf16.msra.mxu0 %v2937
        %3011 = vmatpush.bf16.msra.mxu0 %v2934
        %3012 = vmatpush.bf16.msra.mxu0 %v2931
        %3013 = vmatmul.bf16.gmra.mxu0 %v2816
        %v3014 = vpop.f32.mrf.mxu0
        %v3015 = vadd.f32 0.0, %v3014
        %v3016 = vpop.f32.mrf.mxu0
        %v3017 = vadd.f32 0.0, %v3016
        %3018 = vdwg.mxu0
        %v3019 = vpack.c.bf16 %v2989, %v2987
        %v3020 = vpack.c.bf16 %v3003, %v3001
        %3021 = vmatpush.bf16.xpose.msra.mxu0 0
        %3022 = vmatpush.bf16.xpose.msra.mxu0 0
        %3023 = vmatpush.bf16.xpose.msra.mxu0 0
        %3024 = vmatpush.bf16.xpose.msra.mxu0 0
        %3025 = vmatpush.bf16.xpose.msra.mxu0 0
        %3026 = vmatpush.bf16.xpose.msra.mxu0 0
        %3027 = vmatpush.bf16.xpose.msra.mxu0 0
        %3028 = vmatpush.bf16.xpose.msra.mxu0 %v3020
        %3029 = vmatmul.bf16.gmra.mxu0 %v3019
        %v3030 = vpop.f32.mrf.mxu0
        %v3031 = vadd.f32 0.0, %v3030
        %v3032 = vpop.f32.mrf.mxu0
        %v3033 = vadd.f32 0.0, %v3032
        %3034 = vdwg.mxu0
        %vm3035 = vcmask 130048
        %v3036 = vsel %vm3035, %v3031, -inf
        %3037 = vmax.xlane.f32.xlu0 %v3036
        %v3038 = vpop.xlane.xlu0 %3037
        %v3039 = vsel %vm3035, %v3033, -inf
        %3040 = vmax.xlane.f32.xlu0 %v3039
        %v3041 = vpop.xlane.xlu0 %3040
        %v3042 = vsub.f32 %v3031, %v3038
        %v3043 = vsub.f32 %v3033, %v3041
        %v3044 = vmul.f32 %v3042, 1.442695
        %v3045 = vpow.pop %v3044
        %v3046 = vmul.f32 %v3043, 1.442695
        %v3047 = vpow.pop %v3046
        %v3048 = vsel %vm3035, %v3045, 0.0
        %3049 = vadd.xlane.f32.xlu0 %v3048
        %v3050 = vpop.xlane.xlu0 %3049
        %v3051 = vsel %vm3035, %v3047, 0.0
        %3052 = vadd.xlane.f32.xlu0 %v3051
        %v3053 = vpop.xlane.xlu0 %3052
        %v3054 = vrcp.pop %v3050
        %v3055 = vrcp.pop %v3053
        %v3056 = vmul.f32 %v3045, %v3054
        %v3057 = vmul.f32 %v3047, %v3055
        %v3058 = vpack.c.bf16 %v3057, %v3056
        %v3059 = vpack.c.bf16 %v3017, %v3015
        %v3061 = vsel %vm3035, %v3058, 0
        %3063 = vmatpush.bf16.msra.mxu0 0
        %3064 = vmatpush.bf16.msra.mxu0 0
        %3065 = vmatpush.bf16.msra.mxu0 0
        %3066 = vmatpush.bf16.msra.mxu0 0
        %3067 = vmatpush.bf16.msra.mxu0 0
        %3068 = vmatpush.bf16.msra.mxu0 0
        %3069 = vmatpush.bf16.msra.mxu0 0
        %3070 = vmatpush.bf16.msra.mxu0 %v3059
        %3071 = vmatmul.bf16.gmra.mxu0 %v3061
        %v3072 = vpop.f32.mrf.mxu0
        %v3073 = vadd.f32 0.0, %v3072
        %v3074 = vpop.f32.mrf.mxu0
        %v3075 = vadd.f32 0.0, %v3074
        %3076 = vdwg.mxu0
        %v3077 = vpack.c.bf16 %v3075, %v3073
        %v3078 = vld [vmem:[%s1297] sm:$0xf]
        %v3079 = vld [vmem:[%s1297 + $0x4] sm:$0xf]
        %v3080 = vld [vmem:[%s1297 + $0x8] sm:$0xf]
        %v3081 = vld [vmem:[%s1297 + $0xc] sm:$0xf]
        %v3082 = vld [vmem:[%s1297 + $0x10] sm:$0xf]
        %v3083 = vld [vmem:[%s1297 + $0x14] sm:$0xf]
        %v3084 = vld [vmem:[%s1297 + $0x18] sm:$0xf]
        %v3085 = vld [vmem:[%s1297 + $0x1c] sm:$0xf]
        %v3086 = vld [vmem:[%s1297 + $0x20] sm:$0xf]
        %v3087 = vld [vmem:[%s1297 + $0x24] sm:$0xf]
        %v3088 = vld [vmem:[%s1297 + $0x28] sm:$0xf]
        %v3089 = vld [vmem:[%s1297 + $0x2c] sm:$0xf]
        %v3090 = vld [vmem:[%s1297 + $0x30] sm:$0xf]
        %v3091 = vld [vmem:[%s1297 + $0x34] sm:$0xf]
        %v3092 = vld [vmem:[%s1297 + $0x38] sm:$0xf]
        %v3093 = vld [vmem:[%s1297 + $0x3c] sm:$0xf]
        %v3110 = vunpack.c.l.b16 %v3078
        %v3111 = vunpack.c.l.b16 %v3079
        %v3112 = vunpack.c.l.b16 %v3080
        %v3113 = vunpack.c.l.b16 %v3081
        %v3114 = vunpack.c.l.b16 %v3082
        %v3115 = vunpack.c.l.b16 %v3083
        %v3116 = vunpack.c.l.b16 %v3084
        %v3117 = vunpack.c.l.b16 %v3085
        %v3118 = vunpack.c.l.b16 %v3086
        %v3119 = vunpack.c.l.b16 %v3087
        %v3120 = vunpack.c.l.b16 %v3088
        %v3121 = vunpack.c.l.b16 %v3089
        %v3122 = vunpack.c.l.b16 %v3090
        %v3123 = vunpack.c.l.b16 %v3091
        %v3124 = vunpack.c.l.b16 %v3092
        %v3125 = vunpack.c.l.b16 %v3093
        %v3126 = vpack.c.b16 %v3111, %v3110
        %v3127 = vpack.c.b16 %v3113, %v3112
        %v3128 = vpack.c.b16 %v3115, %v3114
        %v3129 = vpack.c.b16 %v3117, %v3116
        %v3130 = vpack.c.b16 %v3119, %v3118
        %v3131 = vpack.c.b16 %v3121, %v3120
        %v3132 = vpack.c.b16 %v3123, %v3122
        %v3133 = vpack.c.b16 %v3125, %v3124
        %3142 = vmatpush.bf16.msra.mxu0 %v3133
        %3143 = vmatpush.bf16.msra.mxu0 %v3132
        %3144 = vmatpush.bf16.msra.mxu0 %v3131
        %3145 = vmatpush.bf16.msra.mxu0 %v3130
        %3146 = vmatpush.bf16.msra.mxu0 %v3129
        %3147 = vmatpush.bf16.msra.mxu0 %v3128
        %3148 = vmatpush.bf16.msra.mxu0 %v3127
        %3149 = vmatpush.bf16.msra.mxu0 %v3126
        %3150 = vmatmul.bf16.gmra.mxu0 %v3077
        %v3151 = vpop.f32.mrf.mxu0
        %v3152 = vadd.f32 0.0, %v3151
        %v3153 = vpop.f32.mrf.mxu0
        %v3154 = vadd.f32 0.0, %v3153
        %3155 = vdwg.mxu0
        %v3156 = vadd.f32 %v2814, %v3152
        %v3157 = vadd.f32 %v2815, %v3154
        %3158 = vst [vmem:[#allocation2] sm:$0xff] %v3156
        %3159 = vst [vmem:[#allocation2 + $0x8] sm:$0xff] %v3157
        %p3160 = scmp.eq.s32.totalorder %s86, 1
        // Predicated region
        $region205: #{_lambda_.1} parent=163 // pred_check
          %p3161 = pneg %p3160
        $region206: #{_lambda_.1} parent=163 // pred_check_branch
          %3163 = sbr.rel (%p3161) target = $region208
        $region207: #{_lambda_.1} parent=163 // pred_region
          %v3164 = vpack.c.bf16 %v3157, %v3156
          %v3165 = vld [vmem:[#allocation16] sm:$0xf]
          %v3166 = vld [vmem:[#allocation16 + $0x4] sm:$0xf]
          %v3167 = vld [vmem:[#allocation16 + $0x8] sm:$0xf]
          %v3168 = vld [vmem:[#allocation16 + $0xc] sm:$0xf]
          %v3169 = vld [vmem:[#allocation16 + $0x10] sm:$0xf]
          %v3170 = vld [vmem:[#allocation16 + $0x14] sm:$0xf]
          %v3171 = vld [vmem:[#allocation16 + $0x18] sm:$0xf]
          %v3172 = vld [vmem:[#allocation16 + $0x1c] sm:$0xf]
          %v3173 = vld [vmem:[#allocation16 + $0x20] sm:$0xf]
          %v3174 = vld [vmem:[#allocation16 + $0x24] sm:$0xf]
          %v3175 = vld [vmem:[#allocation16 + $0x28] sm:$0xf]
          %v3176 = vld [vmem:[#allocation16 + $0x2c] sm:$0xf]
          %v3177 = vld [vmem:[#allocation16 + $0x30] sm:$0xf]
          %v3178 = vld [vmem:[#allocation16 + $0x34] sm:$0xf]
          %v3179 = vld [vmem:[#allocation16 + $0x38] sm:$0xf]
          %v3180 = vld [vmem:[#allocation16 + $0x3c] sm:$0xf]
          %v3181 = vld [vmem:[%s67] sm:$0x1]
          %v3183 = vperm.slane %v3181, 0
          %v3201 = vunpack.c.l.b16 %v3165
          %v3202 = vunpack.c.l.b16 %v3166
          %v3203 = vunpack.c.l.b16 %v3167
          %v3204 = vunpack.c.l.b16 %v3168
          %v3205 = vunpack.c.l.b16 %v3169
          %v3206 = vunpack.c.l.b16 %v3170
          %v3207 = vunpack.c.l.b16 %v3171
          %v3208 = vunpack.c.l.b16 %v3172
          %v3209 = vunpack.c.l.b16 %v3173
          %v3210 = vunpack.c.l.b16 %v3174
          %v3211 = vunpack.c.l.b16 %v3175
          %v3212 = vunpack.c.l.b16 %v3176
          %v3213 = vunpack.c.l.b16 %v3177
          %v3214 = vunpack.c.l.b16 %v3178
          %v3215 = vunpack.c.l.b16 %v3179
          %v3216 = vunpack.c.l.b16 %v3180
          %v3217 = vpack.c.b16 %v3202, %v3201
          %v3218 = vpack.c.b16 %v3204, %v3203
          %v3219 = vpack.c.b16 %v3206, %v3205
          %v3220 = vpack.c.b16 %v3208, %v3207
          %v3221 = vpack.c.b16 %v3210, %v3209
          %v3222 = vpack.c.b16 %v3212, %v3211
          %v3223 = vpack.c.b16 %v3214, %v3213
          %v3224 = vpack.c.b16 %v3216, %v3215
          %3233 = vmatpush.bf16.msra.mxu0 %v3224
          %3234 = vmatpush.bf16.msra.mxu0 %v3223
          %3235 = vmatpush.bf16.msra.mxu0 %v3222
          %3236 = vmatpush.bf16.msra.mxu0 %v3221
          %3237 = vmatpush.bf16.msra.mxu0 %v3220
          %3238 = vmatpush.bf16.msra.mxu0 %v3219
          %3239 = vmatpush.bf16.msra.mxu0 %v3218
          %3240 = vmatpush.bf16.msra.mxu0 %v3217
          %3241 = vmatmul.bf16.gmra.mxu0 %v3164
          %v3242 = vpop.f32.mrf.mxu0
          %v3243 = vadd.f32 %v3183, %v3242
          %v3244 = vpop.f32.mrf.mxu0
          %v3245 = vadd.f32 %v3183, %v3244
          %3246 = vdwg.mxu0
          %v3247 = vmax.f32 %v3243, 0.0
          %v3248 = vmax.f32 %v3245, 0.0
          %v3249 = vpack.c.bf16 %v3248, %v3247
          %v3250 = vld [vmem:[%s69] sm:$0xf]
          %v3251 = vld [vmem:[%s69 + $0x4] sm:$0xf]
          %v3252 = vld [vmem:[%s69 + $0x8] sm:$0xf]
          %v3253 = vld [vmem:[%s69 + $0xc] sm:$0xf]
          %v3254 = vld [vmem:[%s69 + $0x10] sm:$0xf]
          %v3255 = vld [vmem:[%s69 + $0x14] sm:$0xf]
          %v3256 = vld [vmem:[%s69 + $0x18] sm:$0xf]
          %v3257 = vld [vmem:[%s69 + $0x1c] sm:$0xf]
          %v3258 = vld [vmem:[%s69 + $0x20] sm:$0xf]
          %v3259 = vld [vmem:[%s69 + $0x24] sm:$0xf]
          %v3260 = vld [vmem:[%s69 + $0x28] sm:$0xf]
          %v3261 = vld [vmem:[%s69 + $0x2c] sm:$0xf]
          %v3262 = vld [vmem:[%s69 + $0x30] sm:$0xf]
          %v3263 = vld [vmem:[%s69 + $0x34] sm:$0xf]
          %v3264 = vld [vmem:[%s69 + $0x38] sm:$0xf]
          %v3265 = vld [vmem:[%s69 + $0x3c] sm:$0xf]
          %v3266 = vld [vmem:[%s71] sm:$0x1]
          %v3268 = vperm.slane %v3266, 0
          %v3286 = vunpack.c.l.b16 %v3250
          %v3287 = vunpack.c.l.b16 %v3251
          %v3288 = vunpack.c.l.b16 %v3252
          %v3289 = vunpack.c.l.b16 %v3253
          %v3290 = vunpack.c.l.b16 %v3254
          %v3291 = vunpack.c.l.b16 %v3255
          %v3292 = vunpack.c.l.b16 %v3256
          %v3293 = vunpack.c.l.b16 %v3257
          %v3294 = vunpack.c.l.b16 %v3258
          %v3295 = vunpack.c.l.b16 %v3259
          %v3296 = vunpack.c.l.b16 %v3260
          %v3297 = vunpack.c.l.b16 %v3261
          %v3298 = vunpack.c.l.b16 %v3262
          %v3299 = vunpack.c.l.b16 %v3263
          %v3300 = vunpack.c.l.b16 %v3264
          %v3301 = vunpack.c.l.b16 %v3265
          %v3302 = vpack.c.b16 %v3287, %v3286
          %v3303 = vpack.c.b16 %v3289, %v3288
          %v3304 = vpack.c.b16 %v3291, %v3290
          %v3305 = vpack.c.b16 %v3293, %v3292
          %v3306 = vpack.c.b16 %v3295, %v3294
          %v3307 = vpack.c.b16 %v3297, %v3296
          %v3308 = vpack.c.b16 %v3299, %v3298
          %v3309 = vpack.c.b16 %v3301, %v3300
          %3318 = vmatpush.bf16.msra.mxu0 %v3309
          %3319 = vmatpush.bf16.msra.mxu0 %v3308
          %3320 = vmatpush.bf16.msra.mxu0 %v3307
          %3321 = vmatpush.bf16.msra.mxu0 %v3306
          %3322 = vmatpush.bf16.msra.mxu0 %v3305
          %3323 = vmatpush.bf16.msra.mxu0 %v3304
          %3324 = vmatpush.bf16.msra.mxu0 %v3303
          %3325 = vmatpush.bf16.msra.mxu0 %v3302
          %3326 = vmatmul.bf16.gmra.mxu0 %v3249
          %v3327 = vpop.f32.mrf.mxu0
          %v3328 = vadd.f32 %v3268, %v3327
          %v3329 = vpop.f32.mrf.mxu0
          %v3330 = vadd.f32 %v3268, %v3329
          %3331 = vdwg.mxu0
          %3332 = vst [vmem:[%s73] sm:$0xff] %v3328
          %3333 = vst [vmem:[%s73 + $0x8] sm:$0xff] %v3330
        $region208: #{_lambda_.1} parent=163 // pred_fallthru
          _
        // Predicated region
        $region209: #{_lambda_.1} parent=163 // pred_check
          %p3334 = pneg %p925
        $region210: #{_lambda_.1} parent=163 // pred_check_branch
          %3336 = sbr.rel (%p3334) target = $region212
        $region211: #{_lambda_.1} parent=163 // pred_region
          _
        $region212: #{_lambda_.1} parent=163 // pred_fallthru
          _
        // Predicated region
        $region213: #{_lambda_.1} parent=163 // pred_check
          %p3337 = pneg %p925
        $region214: #{_lambda_.1} parent=163 // pred_check_branch
          %3339 = sbr.rel (%p3337) target = $region216
        $region215: #{_lambda_.1} parent=163 // pred_region
          _
        $region216: #{_lambda_.1} parent=163 // pred_fallthru
          _
      $region164: #{_lambda_.1} parent=5 // pred_fallthru
        _
      %p3340 = scmp.le.s32.totalorder 2, %s81
      // Predicated region
      $region217: #{_lambda_.1} parent=5 // pred_check
        %p3341 = pneg %p3340
      $region218: #{_lambda_.1} parent=5 // pred_check_branch
        %3343 = sbr.rel (%p3341) target = $region220
      $region219: #{_lambda_.1} parent=5 // pred_region
        %s3344 = ssub.s32 %s81, 2
      $region220: #{_lambda_.1} parent=5 // pred_fallthru
        _
    $region6: #{_lambda_.1} parent=1 // loop_footer
      %s85 = sadd.s32 1, %s81
    $region7: #{_lambda_.1} parent=1 // loop_footer_branch
      %80 = sbr.rel target = $region3
    $region8: #{_lambda_.1} parent=1 // loop_exit
      _
    %3345 = vsyncpa [#allocation7], 1
    %s3346 = scalar_lea.sflag [#allocation7], 1
    %3347 = vsyncpa %s3346, 1
    %3348 = vsyncpa [#allocation9], 1

</llo_original>
